<compile_context>
chip_gen: v7x
topology: tpu7x:2x2x1
jax: 0.10.0
libtpu: 0.0.40
codegen_flags: <defaults>
</compile_context>

<pallas_src>
import jax
import jax.numpy as jnp
import numpy as np
from jax.experimental import pallas as pl
from jax.experimental.pallas import tpu as pltpu

LANES = 128                      # MXU / vreg lane width
TILE_M_TARGET = 512              # row tile; small enough for v7x's 64 MiB VMEM
VMEM_LIMIT = 32 * 1024 * 1024    # modest explicit cap, safe on v5e/v6e/v7x


# ----------------------------------------------------------------------------
# Pallas kernels
# ----------------------------------------------------------------------------
def _conv_relu_pool_kernel(x00, x01, x10, x11, w_ref, b_ref, o_ref):
    """Fused conv (as matmul over 4 pool-window quadrants) + 2x2 maxpool
    + bias + ReLU.  pool(relu(conv+b)) == relu(max_q(conv_q) + b)."""
    w = w_ref[...]
    d00 = jnp.dot(x00[...], w, preferred_element_type=jnp.float32)
    d01 = jnp.dot(x01[...], w, preferred_element_type=jnp.float32)
    d10 = jnp.dot(x10[...], w, preferred_element_type=jnp.float32)
    d11 = jnp.dot(x11[...], w, preferred_element_type=jnp.float32)
    m = jnp.maximum(jnp.maximum(d00, d01), jnp.maximum(d10, d11))
    acc = jnp.maximum(m + b_ref[...], 0.0)
    o_ref[...] = acc.astype(o_ref.dtype)


def _tail_kernel(x_ref, w3_ref, b3_ref, w4_ref, b4_ref, w5_ref, b5_ref, o_ref):
    """Fused conv3 (1x1 spatial, pure matmul) + fc1 + ReLU + fc2."""
    h = jnp.dot(x_ref[...], w3_ref[...],
                preferred_element_type=jnp.float32) + b3_ref[...]      # conv3 (no ReLU)
    h = jnp.dot(h.astype(jnp.bfloat16), w4_ref[...],
                preferred_element_type=jnp.float32) + b4_ref[...]      # fc1
    h = jnp.maximum(h, 0.0)
    h = jnp.dot(h.astype(jnp.bfloat16), w5_ref[...],
                preferred_element_type=jnp.float32) + b5_ref[...]      # fc2
    o_ref[...] = h


# ----------------------------------------------------------------------------
# Helpers / wrappers
# ----------------------------------------------------------------------------
def _pick_tile_m(m):
    if m < 8:
        return m                                  # block dim == full array dim
    return min(TILE_M_TARGET, (m // 8) * 8)       # ragged last block is fine


def _im2col_pool_quadrants(x, kh, kw, pad, cin):
    """x: (B, H, W, C>=cin) NHWC.  Returns 4 quadrant patch matrices (one per
    position of the 2x2 pool window), each (B*Hp*Wp, kh*kw*cin) bf16."""
    x = x[..., :cin].astype(jnp.bfloat16)
    B, H, W, _ = x.shape
    if pad:
        x = jnp.pad(x, ((0, 0), (pad, pad), (pad, pad), (0, 0)))
    Ho = H + 2 * pad - kh + 1
    Wo = W + 2 * pad - kw + 1
    Hp, Wp = Ho // 2, Wo // 2
    quads = []
    for dh in (0, 1):
        for dw in (0, 1):
            cols = []
            for i in range(kh):
                for j in range(kw):
                    v = x[:, dh + i::2, dw + j::2, :][:, :Hp, :Wp, :]
                    cols.append(v)                       # (B, Hp, Wp, cin)
            p = jnp.stack(cols, axis=3)                  # (B, Hp, Wp, kh*kw, cin)
            quads.append(p.reshape(B * Hp * Wp, kh * kw * cin))
    return quads, Hp, Wp


def conv_relu_pool(x, w2d, b2d, *, cin, pad, kh=5, kw=5):
    """x: (B,H,W,C>=cin) NHWC -> (B, Hp, Wp, 128) bf16 (channels lane-padded)."""
    B = x.shape[0]
    quads, Hp, Wp = _im2col_pool_quadrants(x, kh, kw, pad, cin)
    M = B * Hp * Wp
    K = kh * kw * cin
    tile_m = _pick_tile_m(M)
    out = pl.pallas_call(
        _conv_relu_pool_kernel,
        out_shape=jax.ShapeDtypeStruct((M, LANES), jnp.bfloat16),
        grid=(pl.cdiv(M, tile_m),),
        in_specs=[pl.BlockSpec((tile_m, K), lambda i: (i, 0))] * 4 + [
            pl.BlockSpec((K, LANES), lambda i: (0, 0)),
            pl.BlockSpec((1, LANES), lambda i: (0, 0)),
        ],
        out_specs=pl.BlockSpec((tile_m, LANES), lambda i: (i, 0)),
        compiler_params=pltpu.CompilerParams(
            dimension_semantics=("parallel",),
            vmem_limit_bytes=VMEM_LIMIT),
    )(*quads, w2d, b2d)
    return out.reshape(B, Hp, Wp, LANES)


def tail_head(x_flat, prep):
    """x_flat: (B, 400) bf16 -> logits (B, 10) f32 via fused conv3/fc1/fc2."""
    B, K = x_flat.shape
    tile_b = _pick_tile_m(B)
    out = pl.pallas_call(
        _tail_kernel,
        out_shape=jax.ShapeDtypeStruct((B, LANES), jnp.float32),
        grid=(pl.cdiv(B, tile_b),),
        in_specs=[
            pl.BlockSpec((tile_b, K), lambda i: (i, 0)),
            pl.BlockSpec((K, LANES), lambda i: (0, 0)),
            pl.BlockSpec((1, LANES), lambda i: (0, 0)),
            pl.BlockSpec((LANES, LANES), lambda i: (0, 0)),
            pl.BlockSpec((1, LANES), lambda i: (0, 0)),
            pl.BlockSpec((LANES, LANES), lambda i: (0, 0)),
            pl.BlockSpec((1, LANES), lambda i: (0, 0)),
        ],
        out_specs=pl.BlockSpec((tile_b, LANES), lambda i: (i, 0)),
        compiler_params=pltpu.CompilerParams(
            dimension_semantics=("parallel",),
            vmem_limit_bytes=VMEM_LIMIT),
    )(x_flat, prep["w3"], prep["b3"], prep["w4"], prep["b4"],
      prep["w5"], prep["b5"])
    return out[:, :10]


# ----------------------------------------------------------------------------
# Parameters: PyTorch-layout init + one-time kernel-layout preparation
# ----------------------------------------------------------------------------
def init_params(key):
    """PyTorch-layout params with uniform(-1/sqrt(fan_in), 1/sqrt(fan_in))."""
    specs = {
        "conv1_w": ((6, 1, 5, 5), 25),   "conv1_b": ((6,), 25),
        "conv2_w": ((16, 6, 5, 5), 150), "conv2_b": ((16,), 150),
        "conv3_w": ((120, 16, 5, 5), 400), "conv3_b": ((120,), 400),
        "fc1_w": ((84, 120), 120),       "fc1_b": ((84,), 120),
        "fc2_w": ((10, 84), 84),         "fc2_b": ((10,), 84),
    }
    params = {}
    for name, (shape, fan_in) in specs.items():
        key, k = jax.random.split(key)
        bound = 1.0 / np.sqrt(fan_in)
        params[name] = jax.random.uniform(k, shape, jnp.float32, -bound, bound)
    return params


def _pad_to(a, rows, cols, dtype):
    out = jnp.zeros((rows, cols), dtype)
    return out.at[: a.shape[0], : a.shape[1]].set(a.astype(dtype))


def prepare_params(params):
    """One-time relayout: conv weights -> (kh*kw*Cin, 128) bf16 (patch order
    (kh, kw, cin)), fc weights -> (128, 128) bf16, biases -> (1, 128) f32."""
    def conv_w(w):
        o, c, kh, kw = w.shape
        w2 = jnp.transpose(w, (2, 3, 1, 0)).reshape(kh * kw * c, o)
        return _pad_to(w2, kh * kw * c, LANES, jnp.bfloat16)

    def fc_w(w):                         # PyTorch (out, in) -> (128, 128)
        return _pad_to(w.T, LANES, LANES, jnp.bfloat16)

    def bias(b):
        return _pad_to(b[None, :], 1, LANES, jnp.float32)

    return {
        "w1": conv_w(params["conv1_w"]), "b1": bias(params["conv1_b"]),
        "w2": conv_w(params["conv2_w"]), "b2": bias(params["conv2_b"]),
        "w3": conv_w(params["conv3_w"]), "b3": bias(params["conv3_b"]),
        "w4": fc_w(params["fc1_w"]),     "b4": bias(params["fc1_b"]),
        "w5": fc_w(params["fc2_w"]),     "b5": bias(params["fc2_b"]),
    }


# ----------------------------------------------------------------------------
# Forward pass
# ----------------------------------------------------------------------------
def convnet_forward(prep, x_nchw):
    """x: (B, 1, 28, 28) float32 -> logits (B, 10) float32."""
    B = x_nchw.shape[0]
    x = jnp.transpose(x_nchw, (0, 2, 3, 1))                 # NCHW->NHWC once
    a1 = conv_relu_pool(x, prep["w1"], prep["b1"], cin=1, pad=2)   # (B,14,14,128)
    a2 = conv_relu_pool(a1, prep["w2"], prep["b2"], cin=6, pad=0)  # (B,5,5,128)
    flat = a2[..., :16].reshape(B, 5 * 5 * 16)                     # (B,400) bf16
    return tail_head(flat, prep)                                   # (B,10) f32


# ----------------------------------------------------------------------------
# Pure-JAX reference (same bf16 rounding points, f32 accumulation)
# ----------------------------------------------------------------------------
def convnet_reference(params, x):
    bf16, f32 = jnp.bfloat16, jnp.float32

    def conv(t, w, b, pad):
        y = jax.lax.conv_general_dilated(
            t.astype(bf16), w.astype(bf16), window_strides=(1, 1),
            padding=[(pad, pad), (pad, pad)],
            dimension_numbers=("NCHW", "OIHW", "NCHW"),
            preferred_element_type=f32)
        return y + b[None, :, None, None]

    def pool(t):
        return jax.lax.reduce_window(t, -jnp.inf, jax.lax.max,
                                     (1, 1, 2, 2), (1, 1, 2, 2), "VALID")

    out = pool(jax.nn.relu(conv(x, params["conv1_w"], params["conv1_b"], 2)))
    out = pool(jax.nn.relu(conv(out, params["conv2_w"], params["conv2_b"], 0)))
    out = conv(out, params["conv3_w"], params["conv3_b"], 0)       # no ReLU
    out = out.reshape(x.shape[0], -1)
    h = jnp.dot(out.astype(bf16), params["fc1_w"].T.astype(bf16),
                preferred_element_type=f32) + params["fc1_b"]
    h = jax.nn.relu(h)
    return jnp.dot(h.astype(bf16), params["fc2_w"].T.astype(bf16),
                   preferred_element_type=f32) + params["fc2_b"]


if __name__ == "__main__":
    key = jax.random.PRNGKey(0)
    key, kx = jax.random.split(key)

    # forward-pass geometry forces single-channel 28x28 input (LeNet / MNIST)
    x = jax.random.normal(kx, (2, 1, 28, 28), jnp.float32)
    params = init_params(key)
    prep = prepare_params(params)            # one-time layout/pad, outside fwd

    forward = jax.jit(convnet_forward)
    logits = jax.block_until_ready(forward(prep, x))
    assert logits.shape == (2, 10)

    ref = jax.block_until_ready(convnet_reference(params, x))
    np.testing.assert_allclose(np.asarray(logits), np.asarray(ref),
                               rtol=5e-3, atol=5e-3)

    print("KERNEL_OK")
</pallas_src>

<mosaic_0001>
module attributes {stable_mosaic.version = 11 : i64} {
  func.func @_conv_relu_pool_kernel(%arg0: i32, %arg1: memref<392x25xbf16, #tpu.memory_space<vmem>>, %arg2: memref<392x25xbf16, #tpu.memory_space<vmem>>, %arg3: memref<392x25xbf16, #tpu.memory_space<vmem>>, %arg4: memref<392x25xbf16, #tpu.memory_space<vmem>>, %arg5: memref<25x128xbf16, #tpu.memory_space<vmem>>, %arg6: memref<1x128xf32, #tpu.memory_space<vmem>>, %arg7: memref<392x128xbf16, #tpu.memory_space<vmem>>) attributes {dimension_semantics = [#tpu.dimension_semantics<parallel>], iteration_bounds = array<i64: 1>, scalar_prefetch = 0 : i64, scratch_operands = 0 : i64, tpu.core_type = #tpu.core_type<tc>, window_params = [{transform_indices = @transform_0, window_bounds = array<i64: 392, 25>}, {transform_indices = @transform_1, window_bounds = array<i64: 392, 25>}, {transform_indices = @transform_2, window_bounds = array<i64: 392, 25>}, {transform_indices = @transform_3, window_bounds = array<i64: 392, 25>}, {pipeline_mode = #tpu.pipeline_mode<synchronous>, transform_indices = @transform_4, window_bounds = array<i64: 25, 128>}, {pipeline_mode = #tpu.pipeline_mode<synchronous>, transform_indices = @transform_5, window_bounds = array<i64: 1, 128>}, {transform_indices = @transform_6, window_bounds = array<i64: 392, 128>}]} {
    %c0 = arith.constant 0 : index
    %c0_0 = arith.constant 0 : index
    %0 = vector.load %arg5[%c0, %c0_0] : memref<25x128xbf16, #tpu.memory_space<vmem>>, vector<25x128xbf16>
    %c0_1 = arith.constant 0 : index
    %c0_2 = arith.constant 0 : index
    %1 = vector.load %arg1[%c0_1, %c0_2] : memref<392x25xbf16, #tpu.memory_space<vmem>>, vector<392x25xbf16>
    %cst = arith.constant dense<0.000000e+00> : vector<392x128xf32>
    %2 = tpu.matmul %1, %0, %cst {dimension_numbers = #tpu.dot_dimension_numbers<[1], [0], [0], [1], [0, 0, 1, 1], [], []>} : vector<392x25xbf16>, vector<25x128xbf16>, vector<392x128xf32> -> vector<392x128xf32>
    %c0_3 = arith.constant 0 : index
    %c0_4 = arith.constant 0 : index
    %3 = vector.load %arg2[%c0_3, %c0_4] : memref<392x25xbf16, #tpu.memory_space<vmem>>, vector<392x25xbf16>
    %cst_5 = arith.constant dense<0.000000e+00> : vector<392x128xf32>
    %4 = tpu.matmul %3, %0, %cst_5 {dimension_numbers = #tpu.dot_dimension_numbers<[1], [0], [0], [1], [0, 0, 1, 1], [], []>} : vector<392x25xbf16>, vector<25x128xbf16>, vector<392x128xf32> -> vector<392x128xf32>
    %c0_6 = arith.constant 0 : index
    %c0_7 = arith.constant 0 : index
    %5 = vector.load %arg3[%c0_6, %c0_7] : memref<392x25xbf16, #tpu.memory_space<vmem>>, vector<392x25xbf16>
    %cst_8 = arith.constant dense<0.000000e+00> : vector<392x128xf32>
    %6 = tpu.matmul %5, %0, %cst_8 {dimension_numbers = #tpu.dot_dimension_numbers<[1], [0], [0], [1], [0, 0, 1, 1], [], []>} : vector<392x25xbf16>, vector<25x128xbf16>, vector<392x128xf32> -> vector<392x128xf32>
    %c0_9 = arith.constant 0 : index
    %c0_10 = arith.constant 0 : index
    %7 = vector.load %arg4[%c0_9, %c0_10] : memref<392x25xbf16, #tpu.memory_space<vmem>>, vector<392x25xbf16>
    %cst_11 = arith.constant dense<0.000000e+00> : vector<392x128xf32>
    %8 = tpu.matmul %7, %0, %cst_11 {dimension_numbers = #tpu.dot_dimension_numbers<[1], [0], [0], [1], [0, 0, 1, 1], [], []>} : vector<392x25xbf16>, vector<25x128xbf16>, vector<392x128xf32> -> vector<392x128xf32>
    %9 = arith.maximumf %2, %4 : vector<392x128xf32>
    %10 = arith.maximumf %6, %8 : vector<392x128xf32>
    %11 = arith.maximumf %9, %10 : vector<392x128xf32>
    %c0_12 = arith.constant 0 : index
    %c0_13 = arith.constant 0 : index
    %12 = vector.load %arg6[%c0_12, %c0_13] : memref<1x128xf32, #tpu.memory_space<vmem>>, vector<1x128xf32>
    %13 = vector.broadcast %12 : vector<1x128xf32> to vector<392x128xf32>
    %14 = arith.addf %11, %13 : vector<392x128xf32>
    %cst_14 = arith.constant 0.000000e+00 : f32
    %15 = vector.broadcast %cst_14 : f32 to vector<392x128xf32>
    %16 = arith.maximumf %14, %15 : vector<392x128xf32>
    %17 = arith.truncf %16 : vector<392x128xf32> to vector<392x128xbf16>
    %c0_15 = arith.constant 0 : index
    %c0_16 = arith.constant 0 : index
    %18 = vector.load %arg7[%c0_15, %c0_16] : memref<392x128xbf16, #tpu.memory_space<vmem>>, vector<392x128xbf16>
    tpu.vector_store %arg7[%c0_15, %c0_16], %17 {strides = array<i32>} : memref<392x128xbf16, #tpu.memory_space<vmem>>, vector<392x128xbf16>,
    return
  }
  func.func @transform_0(%arg0: i32) -> (i32, i32) {
    %c0_i32 = arith.constant 0 : i32
    %c0_i32_0 = arith.constant 0 : i32
    return %arg0, %c0_i32 : i32, i32
  }
  func.func @transform_1(%arg0: i32) -> (i32, i32) {
    %c0_i32 = arith.constant 0 : i32
    %c0_i32_0 = arith.constant 0 : i32
    return %arg0, %c0_i32 : i32, i32
  }
  func.func @transform_2(%arg0: i32) -> (i32, i32) {
    %c0_i32 = arith.constant 0 : i32
    %c0_i32_0 = arith.constant 0 : i32
    return %arg0, %c0_i32 : i32, i32
  }
  func.func @transform_3(%arg0: i32) -> (i32, i32) {
    %c0_i32 = arith.constant 0 : i32
    %c0_i32_0 = arith.constant 0 : i32
    return %arg0, %c0_i32 : i32, i32
  }
  func.func @transform_4(%arg0: i32) -> (i32, i32) {
    %c0_i32 = arith.constant 0 : i32
    %c0_i32_0 = arith.constant 0 : i32
    %c0_i32_1 = arith.constant 0 : i32
    return %c0_i32, %c0_i32_0 : i32, i32
  }
  func.func @transform_5(%arg0: i32) -> (i32, i32) {
    %c0_i32 = arith.constant 0 : i32
    %c0_i32_0 = arith.constant 0 : i32
    %c0_i32_1 = arith.constant 0 : i32
    return %c0_i32, %c0_i32_0 : i32, i32
  }
  func.func @transform_6(%arg0: i32) -> (i32, i32) {
    %c0_i32 = arith.constant 0 : i32
    %c0_i32_0 = arith.constant 0 : i32
    return %arg0, %c0_i32 : i32, i32
  }
}

module attributes {stable_mosaic.version = 11 : i64} {
  func.func @_conv_relu_pool_kernel(%arg0: i32, %arg1: memref<48x150xbf16, #tpu.memory_space<vmem>>, %arg2: memref<48x150xbf16, #tpu.memory_space<vmem>>, %arg3: memref<48x150xbf16, #tpu.memory_space<vmem>>, %arg4: memref<48x150xbf16, #tpu.memory_space<vmem>>, %arg5: memref<150x128xbf16, #tpu.memory_space<vmem>>, %arg6: memref<1x128xf32, #tpu.memory_space<vmem>>, %arg7: memref<48x128xbf16, #tpu.memory_space<vmem>>) attributes {dimension_semantics = [#tpu.dimension_semantics<parallel>], iteration_bounds = array<i64: 2>, scalar_prefetch = 0 : i64, scratch_operands = 0 : i64, tpu.core_type = #tpu.core_type<tc>, window_params = [{transform_indices = @transform_0, window_bounds = array<i64: 48, 150>}, {transform_indices = @transform_1, window_bounds = array<i64: 48, 150>}, {transform_indices = @transform_2, window_bounds = array<i64: 48, 150>}, {transform_indices = @transform_3, window_bounds = array<i64: 48, 150>}, {pipeline_mode = #tpu.pipeline_mode<synchronous>, transform_indices = @transform_4, window_bounds = array<i64: 150, 128>}, {pipeline_mode = #tpu.pipeline_mode<synchronous>, transform_indices = @transform_5, window_bounds = array<i64: 1, 128>}, {transform_indices = @transform_6, window_bounds = array<i64: 48, 128>}]} {
    %c0 = arith.constant 0 : index
    %c0_0 = arith.constant 0 : index
    %0 = vector.load %arg5[%c0, %c0_0] : memref<150x128xbf16, #tpu.memory_space<vmem>>, vector<150x128xbf16>
    %c0_1 = arith.constant 0 : index
    %c0_2 = arith.constant 0 : index
    %1 = vector.load %arg1[%c0_1, %c0_2] : memref<48x150xbf16, #tpu.memory_space<vmem>>, vector<48x150xbf16>
    %cst = arith.constant dense<0.000000e+00> : vector<48x128xf32>
    %2 = tpu.matmul %1, %0, %cst {dimension_numbers = #tpu.dot_dimension_numbers<[1], [0], [0], [1], [0, 0, 1, 1], [], []>} : vector<48x150xbf16>, vector<150x128xbf16>, vector<48x128xf32> -> vector<48x128xf32>
    %c0_3 = arith.constant 0 : index
    %c0_4 = arith.constant 0 : index
    %3 = vector.load %arg2[%c0_3, %c0_4] : memref<48x150xbf16, #tpu.memory_space<vmem>>, vector<48x150xbf16>
    %cst_5 = arith.constant dense<0.000000e+00> : vector<48x128xf32>
    %4 = tpu.matmul %3, %0, %cst_5 {dimension_numbers = #tpu.dot_dimension_numbers<[1], [0], [0], [1], [0, 0, 1, 1], [], []>} : vector<48x150xbf16>, vector<150x128xbf16>, vector<48x128xf32> -> vector<48x128xf32>
    %c0_6 = arith.constant 0 : index
    %c0_7 = arith.constant 0 : index
    %5 = vector.load %arg3[%c0_6, %c0_7] : memref<48x150xbf16, #tpu.memory_space<vmem>>, vector<48x150xbf16>
    %cst_8 = arith.constant dense<0.000000e+00> : vector<48x128xf32>
    %6 = tpu.matmul %5, %0, %cst_8 {dimension_numbers = #tpu.dot_dimension_numbers<[1], [0], [0], [1], [0, 0, 1, 1], [], []>} : vector<48x150xbf16>, vector<150x128xbf16>, vector<48x128xf32> -> vector<48x128xf32>
    %c0_9 = arith.constant 0 : index
    %c0_10 = arith.constant 0 : index
    %7 = vector.load %arg4[%c0_9, %c0_10] : memref<48x150xbf16, #tpu.memory_space<vmem>>, vector<48x150xbf16>
    %cst_11 = arith.constant dense<0.000000e+00> : vector<48x128xf32>
    %8 = tpu.matmul %7, %0, %cst_11 {dimension_numbers = #tpu.dot_dimension_numbers<[1], [0], [0], [1], [0, 0, 1, 1], [], []>} : vector<48x150xbf16>, vector<150x128xbf16>, vector<48x128xf32> -> vector<48x128xf32>
    %9 = arith.maximumf %2, %4 : vector<48x128xf32>
    %10 = arith.maximumf %6, %8 : vector<48x128xf32>
    %11 = arith.maximumf %9, %10 : vector<48x128xf32>
    %c0_12 = arith.constant 0 : index
    %c0_13 = arith.constant 0 : index
    %12 = vector.load %arg6[%c0_12, %c0_13] : memref<1x128xf32, #tpu.memory_space<vmem>>, vector<1x128xf32>
    %13 = vector.broadcast %12 : vector<1x128xf32> to vector<48x128xf32>
    %14 = arith.addf %11, %13 : vector<48x128xf32>
    %cst_14 = arith.constant 0.000000e+00 : f32
    %15 = vector.broadcast %cst_14 : f32 to vector<48x128xf32>
    %16 = arith.maximumf %14, %15 : vector<48x128xf32>
    %17 = arith.truncf %16 : vector<48x128xf32> to vector<48x128xbf16>
    %c0_15 = arith.constant 0 : index
    %c0_16 = arith.constant 0 : index
    %18 = vector.load %arg7[%c0_15, %c0_16] : memref<48x128xbf16, #tpu.memory_space<vmem>>, vector<48x128xbf16>
    tpu.vector_store %arg7[%c0_15, %c0_16], %17 {strides = array<i32>} : memref<48x128xbf16, #tpu.memory_space<vmem>>, vector<48x128xbf16>,
    return
  }
  func.func @transform_0(%arg0: i32) -> (i32, i32) {
    %c0_i32 = arith.constant 0 : i32
    %c0_i32_0 = arith.constant 0 : i32
    return %arg0, %c0_i32 : i32, i32
  }
  func.func @transform_1(%arg0: i32) -> (i32, i32) {
    %c0_i32 = arith.constant 0 : i32
    %c0_i32_0 = arith.constant 0 : i32
    return %arg0, %c0_i32 : i32, i32
  }
  func.func @transform_2(%arg0: i32) -> (i32, i32) {
    %c0_i32 = arith.constant 0 : i32
    %c0_i32_0 = arith.constant 0 : i32
    return %arg0, %c0_i32 : i32, i32
  }
  func.func @transform_3(%arg0: i32) -> (i32, i32) {
    %c0_i32 = arith.constant 0 : i32
    %c0_i32_0 = arith.constant 0 : i32
    return %arg0, %c0_i32 : i32, i32
  }
  func.func @transform_4(%arg0: i32) -> (i32, i32) {
    %c0_i32 = arith.constant 0 : i32
    %c0_i32_0 = arith.constant 0 : i32
    %c0_i32_1 = arith.constant 0 : i32
    return %c0_i32, %c0_i32_0 : i32, i32
  }
  func.func @transform_5(%arg0: i32) -> (i32, i32) {
    %c0_i32 = arith.constant 0 : i32
    %c0_i32_0 = arith.constant 0 : i32
    %c0_i32_1 = arith.constant 0 : i32
    return %c0_i32, %c0_i32_0 : i32, i32
  }
  func.func @transform_6(%arg0: i32) -> (i32, i32) {
    %c0_i32 = arith.constant 0 : i32
    %c0_i32_0 = arith.constant 0 : i32
    return %arg0, %c0_i32 : i32, i32
  }
}

module attributes {stable_mosaic.version = 11 : i64} {
  func.func @_tail_kernel(%arg0: i32, %arg1: memref<2x400xbf16, #tpu.memory_space<vmem>>, %arg2: memref<400x128xbf16, #tpu.memory_space<vmem>>, %arg3: memref<1x128xf32, #tpu.memory_space<vmem>>, %arg4: memref<128x128xbf16, #tpu.memory_space<vmem>>, %arg5: memref<1x128xf32, #tpu.memory_space<vmem>>, %arg6: memref<128x128xbf16, #tpu.memory_space<vmem>>, %arg7: memref<1x128xf32, #tpu.memory_space<vmem>>, %arg8: memref<2x128xf32, #tpu.memory_space<vmem>>) attributes {dimension_semantics = [#tpu.dimension_semantics<parallel>], iteration_bounds = array<i64: 1>, scalar_prefetch = 0 : i64, scratch_operands = 0 : i64, tpu.core_type = #tpu.core_type<tc>, window_params = [{transform_indices = @transform_0, window_bounds = array<i64: 2, 400>}, {pipeline_mode = #tpu.pipeline_mode<synchronous>, transform_indices = @transform_1, window_bounds = array<i64: 400, 128>}, {pipeline_mode = #tpu.pipeline_mode<synchronous>, transform_indices = @transform_2, window_bounds = array<i64: 1, 128>}, {pipeline_mode = #tpu.pipeline_mode<synchronous>, transform_indices = @transform_3, window_bounds = array<i64: 128, 128>}, {pipeline_mode = #tpu.pipeline_mode<synchronous>, transform_indices = @transform_4, window_bounds = array<i64: 1, 128>}, {pipeline_mode = #tpu.pipeline_mode<synchronous>, transform_indices = @transform_5, window_bounds = array<i64: 128, 128>}, {pipeline_mode = #tpu.pipeline_mode<synchronous>, transform_indices = @transform_6, window_bounds = array<i64: 1, 128>}, {transform_indices = @transform_7, window_bounds = array<i64: 2, 128>}]} {
    %c0 = arith.constant 0 : index
    %c0_0 = arith.constant 0 : index
    %0 = vector.load %arg1[%c0, %c0_0] : memref<2x400xbf16, #tpu.memory_space<vmem>>, vector<2x400xbf16>
    %c0_1 = arith.constant 0 : index
    %c0_2 = arith.constant 0 : index
    %1 = vector.load %arg2[%c0_1, %c0_2] : memref<400x128xbf16, #tpu.memory_space<vmem>>, vector<400x128xbf16>
    %cst = arith.constant dense<0.000000e+00> : vector<2x128xf32>
    %2 = tpu.matmul %0, %1, %cst {dimension_numbers = #tpu.dot_dimension_numbers<[1], [0], [0], [1], [0, 0, 1, 1], [], []>} : vector<2x400xbf16>, vector<400x128xbf16>, vector<2x128xf32> -> vector<2x128xf32>
    %c0_3 = arith.constant 0 : index
    %c0_4 = arith.constant 0 : index
    %3 = vector.load %arg3[%c0_3, %c0_4] : memref<1x128xf32, #tpu.memory_space<vmem>>, vector<1x128xf32>
    %4 = vector.broadcast %3 : vector<1x128xf32> to vector<2x128xf32>
    %5 = arith.addf %2, %4 : vector<2x128xf32>
    %6 = arith.truncf %5 : vector<2x128xf32> to vector<2x128xbf16>
    %c0_5 = arith.constant 0 : index
    %c0_6 = arith.constant 0 : index
    %7 = vector.load %arg4[%c0_5, %c0_6] : memref<128x128xbf16, #tpu.memory_space<vmem>>, vector<128x128xbf16>
    %cst_7 = arith.constant dense<0.000000e+00> : vector<2x128xf32>
    %8 = tpu.matmul %6, %7, %cst_7 {dimension_numbers = #tpu.dot_dimension_numbers<[1], [0], [0], [1], [0, 0, 1, 1], [], []>} : vector<2x128xbf16>, vector<128x128xbf16>, vector<2x128xf32> -> vector<2x128xf32>
    %c0_8 = arith.constant 0 : index
    %c0_9 = arith.constant 0 : index
    %9 = vector.load %arg5[%c0_8, %c0_9] : memref<1x128xf32, #tpu.memory_space<vmem>>, vector<1x128xf32>
    %10 = vector.broadcast %9 : vector<1x128xf32> to vector<2x128xf32>
    %11 = arith.addf %8, %10 : vector<2x128xf32>
    %cst_10 = arith.constant 0.000000e+00 : f32
    %12 = vector.broadcast %cst_10 : f32 to vector<2x128xf32>
    %13 = arith.maximumf %11, %12 : vector<2x128xf32>
    %14 = arith.truncf %13 : vector<2x128xf32> to vector<2x128xbf16>
    %c0_11 = arith.constant 0 : index
    %c0_12 = arith.constant 0 : index
    %15 = vector.load %arg6[%c0_11, %c0_12] : memref<128x128xbf16, #tpu.memory_space<vmem>>, vector<128x128xbf16>
    %cst_13 = arith.constant dense<0.000000e+00> : vector<2x128xf32>
    %16 = tpu.matmul %14, %15, %cst_13 {dimension_numbers = #tpu.dot_dimension_numbers<[1], [0], [0], [1], [0, 0, 1, 1], [], []>} : vector<2x128xbf16>, vector<128x128xbf16>, vector<2x128xf32> -> vector<2x128xf32>
    %c0_14 = arith.constant 0 : index
    %c0_15 = arith.constant 0 : index
    %17 = vector.load %arg7[%c0_14, %c0_15] : memref<1x128xf32, #tpu.memory_space<vmem>>, vector<1x128xf32>
    %18 = vector.broadcast %17 : vector<1x128xf32> to vector<2x128xf32>
    %19 = arith.addf %16, %18 : vector<2x128xf32>
    %c0_16 = arith.constant 0 : index
    %c0_17 = arith.constant 0 : index
    %20 = vector.load %arg8[%c0_16, %c0_17] : memref<2x128xf32, #tpu.memory_space<vmem>>, vector<2x128xf32>
    tpu.vector_store %arg8[%c0_16, %c0_17], %19 {strides = array<i32>} : memref<2x128xf32, #tpu.memory_space<vmem>>, vector<2x128xf32>,
    return
  }
  func.func @transform_0(%arg0: i32) -> (i32, i32) {
    %c0_i32 = arith.constant 0 : i32
    %c0_i32_0 = arith.constant 0 : i32
    return %arg0, %c0_i32 : i32, i32
  }
  func.func @transform_1(%arg0: i32) -> (i32, i32) {
    %c0_i32 = arith.constant 0 : i32
    %c0_i32_0 = arith.constant 0 : i32
    %c0_i32_1 = arith.constant 0 : i32
    return %c0_i32, %c0_i32_0 : i32, i32
  }
  func.func @transform_2(%arg0: i32) -> (i32, i32) {
    %c0_i32 = arith.constant 0 : i32
    %c0_i32_0 = arith.constant 0 : i32
    %c0_i32_1 = arith.constant 0 : i32
    return %c0_i32, %c0_i32_0 : i32, i32
  }
  func.func @transform_3(%arg0: i32) -> (i32, i32) {
    %c0_i32 = arith.constant 0 : i32
    %c0_i32_0 = arith.constant 0 : i32
    %c0_i32_1 = arith.constant 0 : i32
    return %c0_i32, %c0_i32_0 : i32, i32
  }
  func.func @transform_4(%arg0: i32) -> (i32, i32) {
    %c0_i32 = arith.constant 0 : i32
    %c0_i32_0 = arith.constant 0 : i32
    %c0_i32_1 = arith.constant 0 : i32
    return %c0_i32, %c0_i32_0 : i32, i32
  }
  func.func @transform_5(%arg0: i32) -> (i32, i32) {
    %c0_i32 = arith.constant 0 : i32
    %c0_i32_0 = arith.constant 0 : i32
    %c0_i32_1 = arith.constant 0 : i32
    return %c0_i32, %c0_i32_0 : i32, i32
  }
  func.func @transform_6(%arg0: i32) -> (i32, i32) {
    %c0_i32 = arith.constant 0 : i32
    %c0_i32_0 = arith.constant 0 : i32
    %c0_i32_1 = arith.constant 0 : i32
    return %c0_i32, %c0_i32_0 : i32, i32
  }
  func.func @transform_7(%arg0: i32) -> (i32, i32) {
    %c0_i32 = arith.constant 0 : i32
    %c0_i32_0 = arith.constant 0 : i32
    return %arg0, %c0_i32 : i32, i32
  }
}

</mosaic_0001>

<llo_original>
// kernel: convnet_forward.3
$region0: #{convnet_forward.3}
  #allocation0 [shape = 'u32[]', space=smem, size = 0x4, offset = 0x4, fixed_abs, tag = 'smem constant byte address 0x4 - core index']
  #allocation1 [shape = 'u32[144,128]{1,0:T(1,128)}', space=vmem, size = 0x12000, scoped, tag = 'internal scratch']
  %s0 = inlined_call_operand.vmem [shape: bf16[392,25], index: 0, kind: input, shape index: {}]
  %s1 = inlined_call_operand.vmem [shape: bf16[392,25], index: 1, kind: input, shape index: {}]
  %s2 = inlined_call_operand.vmem [shape: bf16[392,25], index: 2, kind: input, shape index: {}]
  %s3 = inlined_call_operand.vmem [shape: bf16[392,25], index: 3, kind: input, shape index: {}]
  %s4 = inlined_call_operand.vmem [shape: bf16[25,128], index: 4, kind: input, shape index: {}]
  %s5 = inlined_call_operand.vmem [shape: f32[1,128], index: 5, kind: input, shape index: {}]
  %s6 = inlined_call_operand.vmem [shape: bf16[392,128], index: 6, kind: output, shape index: {}]
  %s7 = sld [smem:[#allocation0]]
  $region34: #{convnet_forward.3} parent=0
    _
  %s9 = ssub.s32 1, %s7
  %s10 = scalar_select 0, %s9, %s7
  // Predicated region
  $region2: #{convnet_forward.3} parent=0 // pred_check
    _
  $region3: #{convnet_forward.3} parent=0 // pred_check_branch
    %12 = sbr.rel (0) target = $region5
  $region4: #{convnet_forward.3} parent=0 // pred_region
    _
  $region5: #{convnet_forward.3} parent=0 // pred_fallthru
    _
  // Predicated region
  $region6: #{convnet_forward.3} parent=0 // pred_check
    _
  $region7: #{convnet_forward.3} parent=0 // pred_check_branch
    %14 = sbr.rel (0) target = $region9
  $region8: #{convnet_forward.3} parent=0 // pred_region
    _
  $region9: #{convnet_forward.3} parent=0 // pred_fallthru
    _
  // Predicated region
  $region10: #{convnet_forward.3} parent=0 // pred_check
    _
  $region11: #{convnet_forward.3} parent=0 // pred_check_branch
    %16 = sbr.rel (0) target = $region13
  $region12: #{convnet_forward.3} parent=0 // pred_region
    _
  $region13: #{convnet_forward.3} parent=0 // pred_fallthru
    _
  // Predicated region
  $region14: #{convnet_forward.3} parent=0 // pred_check
    _
  $region15: #{convnet_forward.3} parent=0 // pred_check_branch
    %18 = sbr.rel (0) target = $region17
  $region16: #{convnet_forward.3} parent=0 // pred_region
    _
  $region17: #{convnet_forward.3} parent=0 // pred_fallthru
    _
  // Predicated region
  $region18: #{convnet_forward.3} parent=0 // pred_check
    _
  $region19: #{convnet_forward.3} parent=0 // pred_check_branch
    %20 = sbr.rel (0) target = $region21
  $region20: #{convnet_forward.3} parent=0 // pred_region
    _
  $region21: #{convnet_forward.3} parent=0 // pred_fallthru
    _
  // Predicated region
  $region22: #{convnet_forward.3} parent=0 // pred_check
    _
  $region23: #{convnet_forward.3} parent=0 // pred_check_branch
    %22 = sbr.rel (0) target = $region25
  $region24: #{convnet_forward.3} parent=0 // pred_region
    _
  $region25: #{convnet_forward.3} parent=0 // pred_fallthru
    _
  %v24 = vld [vmem:[%s4] sm:$0xf]
  %v25 = vld [vmem:[%s4 + $0x4] sm:$0xf]
  %v26 = vld [vmem:[%s4 + $0x8] sm:$0xf]
  %v27 = vld [vmem:[%s4 + $0xc] sm:$0x1]
  %v28 = vld [vmem:[%s0] sm:$0xf]
  %v29 = vld [vmem:[%s0 + $0x4] sm:$0xf]
  %v30 = vld [vmem:[%s0 + $0x8] sm:$0xf]
  %v31 = vld [vmem:[%s0 + $0xc] sm:$0xf]
  %v32 = vld [vmem:[%s0 + $0x10] sm:$0xf]
  %v33 = vld [vmem:[%s0 + $0x14] sm:$0xf]
  %v34 = vld [vmem:[%s0 + $0x18] sm:$0xf]
  %v35 = vld [vmem:[%s0 + $0x1c] sm:$0xf]
  %v36 = vld [vmem:[%s0 + $0x20] sm:$0xf]
  %v37 = vld [vmem:[%s0 + $0x24] sm:$0xf]
  %v38 = vld [vmem:[%s0 + $0x28] sm:$0xf]
  %v39 = vld [vmem:[%s0 + $0x2c] sm:$0xf]
  %v40 = vld [vmem:[%s0 + $0x30] sm:$0xf]
  %v41 = vld [vmem:[%s0 + $0x34] sm:$0xf]
  %v42 = vld [vmem:[%s0 + $0x38] sm:$0xf]
  %v43 = vld [vmem:[%s0 + $0x3c] sm:$0xf]
  %v44 = vld [vmem:[%s0 + $0x40] sm:$0xf]
  %v45 = vld [vmem:[%s0 + $0x44] sm:$0xf]
  %v46 = vld [vmem:[%s0 + $0x48] sm:$0xf]
  %v47 = vld [vmem:[%s0 + $0x4c] sm:$0xf]
  %v48 = vld [vmem:[%s0 + $0x50] sm:$0xf]
  %v49 = vld [vmem:[%s0 + $0x54] sm:$0xf]
  %v50 = vld [vmem:[%s0 + $0x58] sm:$0xf]
  %v51 = vld [vmem:[%s0 + $0x5c] sm:$0xf]
  %v52 = vld [vmem:[%s0 + $0x60] sm:$0xf]
  %v53 = vld [vmem:[%s0 + $0x64] sm:$0xf]
  %v54 = vld [vmem:[%s0 + $0x68] sm:$0xf]
  %v55 = vld [vmem:[%s0 + $0x6c] sm:$0xf]
  %v56 = vld [vmem:[%s0 + $0x70] sm:$0xf]
  %v57 = vld [vmem:[%s0 + $0x74] sm:$0xf]
  %v58 = vld [vmem:[%s0 + $0x78] sm:$0xf]
  %v59 = vld [vmem:[%s0 + $0x7c] sm:$0xf]
  %v60 = vld [vmem:[%s0 + $0x80] sm:$0xf]
  %v61 = vld [vmem:[%s0 + $0x84] sm:$0xf]
  %v62 = vld [vmem:[%s0 + $0x88] sm:$0xf]
  %v63 = vld [vmem:[%s0 + $0x8c] sm:$0xf]
  %v64 = vld [vmem:[%s0 + $0x90] sm:$0xf]
  %v65 = vld [vmem:[%s0 + $0x94] sm:$0xf]
  %v66 = vld [vmem:[%s0 + $0x98] sm:$0xf]
  %v67 = vld [vmem:[%s0 + $0x9c] sm:$0xf]
  %v68 = vld [vmem:[%s0 + $0xa0] sm:$0xf]
  %v69 = vld [vmem:[%s0 + $0xa4] sm:$0xf]
  %v70 = vld [vmem:[%s0 + $0xa8] sm:$0xf]
  %v71 = vld [vmem:[%s0 + $0xac] sm:$0xf]
  %v72 = vld [vmem:[%s0 + $0xb0] sm:$0xf]
  %v73 = vld [vmem:[%s0 + $0xb4] sm:$0xf]
  %v74 = vld [vmem:[%s0 + $0xb8] sm:$0xf]
  %v75 = vld [vmem:[%s0 + $0xbc] sm:$0xf]
  %v76 = vld [vmem:[%s0 + $0xc0] sm:$0xf]
  %v126 = vunpack.c.l.b16 %v28
  %v127 = vunpack.c.l.b16 %v29
  %v128 = vunpack.c.l.b16 %v30
  %v129 = vunpack.c.l.b16 %v31
  %v130 = vunpack.c.l.b16 %v32
  %v131 = vunpack.c.l.b16 %v33
  %v132 = vunpack.c.l.b16 %v34
  %v133 = vunpack.c.l.b16 %v35
  %v134 = vunpack.c.l.b16 %v36
  %v135 = vunpack.c.l.b16 %v37
  %v136 = vunpack.c.l.b16 %v38
  %v137 = vunpack.c.l.b16 %v39
  %v138 = vunpack.c.l.b16 %v40
  %v139 = vunpack.c.l.b16 %v41
  %v140 = vunpack.c.l.b16 %v42
  %v141 = vunpack.c.l.b16 %v43
  %v142 = vunpack.c.l.b16 %v44
  %v143 = vunpack.c.l.b16 %v45
  %v144 = vunpack.c.l.b16 %v46
  %v145 = vunpack.c.l.b16 %v47
  %v146 = vunpack.c.l.b16 %v48
  %v147 = vunpack.c.l.b16 %v49
  %v148 = vunpack.c.l.b16 %v50
  %v149 = vunpack.c.l.b16 %v51
  %v150 = vunpack.c.l.b16 %v52
  %v151 = vunpack.c.l.b16 %v53
  %v152 = vunpack.c.l.b16 %v54
  %v153 = vunpack.c.l.b16 %v55
  %v154 = vunpack.c.l.b16 %v56
  %v155 = vunpack.c.l.b16 %v57
  %v156 = vunpack.c.l.b16 %v58
  %v157 = vunpack.c.l.b16 %v59
  %v158 = vunpack.c.l.b16 %v60
  %v159 = vunpack.c.l.b16 %v61
  %v160 = vunpack.c.l.b16 %v62
  %v161 = vunpack.c.l.b16 %v63
  %v162 = vunpack.c.l.b16 %v64
  %v163 = vunpack.c.l.b16 %v65
  %v164 = vunpack.c.l.b16 %v66
  %v165 = vunpack.c.l.b16 %v67
  %v166 = vunpack.c.l.b16 %v68
  %v167 = vunpack.c.l.b16 %v69
  %v168 = vunpack.c.l.b16 %v70
  %v169 = vunpack.c.l.b16 %v71
  %v170 = vunpack.c.l.b16 %v72
  %v171 = vunpack.c.l.b16 %v73
  %v172 = vunpack.c.l.b16 %v74
  %v173 = vunpack.c.l.b16 %v75
  %v174 = vunpack.c.l.b16 %v76
  %v175 = vpack.c.b16 %v127, %v126
  %v176 = vpack.c.b16 %v129, %v128
  %v177 = vpack.c.b16 %v131, %v130
  %v178 = vpack.c.b16 %v133, %v132
  %v179 = vpack.c.b16 %v135, %v134
  %v180 = vpack.c.b16 %v137, %v136
  %v181 = vpack.c.b16 %v139, %v138
  %v182 = vpack.c.b16 %v141, %v140
  %v183 = vpack.c.b16 %v143, %v142
  %v184 = vpack.c.b16 %v145, %v144
  %v185 = vpack.c.b16 %v147, %v146
  %v186 = vpack.c.b16 %v149, %v148
  %v187 = vpack.c.b16 %v151, %v150
  %v188 = vpack.c.b16 %v153, %v152
  %v189 = vpack.c.b16 %v155, %v154
  %v190 = vpack.c.b16 %v157, %v156
  %v191 = vpack.c.b16 %v159, %v158
  %v192 = vpack.c.b16 %v161, %v160
  %v193 = vpack.c.b16 %v163, %v162
  %v194 = vpack.c.b16 %v165, %v164
  %v195 = vpack.c.b16 %v167, %v166
  %v196 = vpack.c.b16 %v169, %v168
  %v197 = vpack.c.b16 %v171, %v170
  %v198 = vpack.c.b16 %v173, %v172
  %v199 = vpack.c.b16 %v174, %v174
  %v204 = vunpack.c.l.b16 %v24
  %v205 = vunpack.c.l.b16 %v25
  %v206 = vunpack.c.l.b16 %v26
  %v207 = vunpack.c.l.b16 %v27
  %v208 = vpack.c.b16 %v205, %v204
  %v209 = vpack.c.b16 %v207, %v206
  %vm211 = vcmask 203776
  %v213 = vsel %vm211, %v175, 0
  %v216 = vsel %vm211, %v176, 0
  %v219 = vsel %vm211, %v177, 0
  %v222 = vsel %vm211, %v178, 0
  %v225 = vsel %vm211, %v179, 0
  %v228 = vsel %vm211, %v180, 0
  %v231 = vsel %vm211, %v181, 0
  %v234 = vsel %vm211, %v182, 0
  %v237 = vsel %vm211, %v183, 0
  %v240 = vsel %vm211, %v184, 0
  %v243 = vsel %vm211, %v185, 0
  %v246 = vsel %vm211, %v186, 0
  %v249 = vsel %vm211, %v187, 0
  %v252 = vsel %vm211, %v188, 0
  %v255 = vsel %vm211, %v189, 0
  %v258 = vsel %vm211, %v190, 0
  %v261 = vsel %vm211, %v191, 0
  %v264 = vsel %vm211, %v192, 0
  %v267 = vsel %vm211, %v193, 0
  %v270 = vsel %vm211, %v194, 0
  %v273 = vsel %vm211, %v195, 0
  %v276 = vsel %vm211, %v196, 0
  %v279 = vsel %vm211, %v197, 0
  %v282 = vsel %vm211, %v198, 0
  %v285 = vsel %vm211, %v199, 0
  %vm287 = vcmask 1043456
  %vm288 = vcmask 1044480
  %v289 = vsel %vm287, 4294967295, 65535
  %v290 = vsel %vm288, %v289, 0
  %v292 = vand.u32 %v209, %v290
  %294 = vmatprep.subr.bf16.mxu0 0
  %295 = vmatpush1.bf16.msra.mxu0 %v208
  %296 = vmatprep.subr.bf16.mxu0 0
  %297 = vmatpush1.bf16.msra.mxu0 %v292
  %298 = vmatprep.subr.bf16.mxu0 0
  %299 = vmatpush1.bf16.msra.mxu0 0
  %300 = vmatprep.subr.bf16.mxu0 0
  %301 = vmatpush1.bf16.msra.mxu0 0
  %302 = vmatprep.subr.bf16.mxu0 0
  %303 = vmatpush1.bf16.msra.mxu0 0
  %304 = vmatprep.subr.bf16.mxu0 0
  %305 = vmatpush1.bf16.msra.mxu0 0
  %306 = vmatprep.subr.bf16.mxu0 0
  %307 = vmatpush1.bf16.msra.mxu0 0
  %308 = vmatprep.subr.bf16.mxu0 0
  %309 = vmatpush1.bf16.msra.mxu0 0
  %310 = vmatprep.subr.bf16.mxu0 0
  %311 = vmatpush1.bf16.msra.mxu0 0
  %312 = vmatprep.subr.bf16.mxu0 0
  %313 = vmatpush1.bf16.msra.mxu0 0
  %314 = vmatprep.subr.bf16.mxu0 0
  %315 = vmatpush1.bf16.msra.mxu0 0
  %316 = vmatprep.subr.bf16.mxu0 0
  %317 = vmatpush1.bf16.msra.mxu0 0
  %318 = vmatprep.subr.bf16.mxu0 0
  %319 = vmatpush1.bf16.msra.mxu0 0
  %320 = vmatprep.subr.bf16.mxu0 0
  %321 = vmatpush1.bf16.msra.mxu0 0
  %322 = vmatprep.subr.bf16.mxu0 0
  %323 = vmatpush1.bf16.msra.mxu0 0
  %324 = vmatprep.subr.bf16.mxu0 0
  %325 = vmatpush1.bf16.msra.mxu0 0
  %326 = vmatprep.mubr.bf16.mxu0 0
  %327 = vmatmul.mubr.bf16.gmra.mrb[0].mxu0 %v213
  %v328 = vpop.f32.mrb[0].mxu0
  %v329 = vadd.f32 0.0, %v328
  %v330 = vpop.f32.mrb[0].mxu0
  %v331 = vpop.f32.mrb[0].mxu0
  %v332 = vadd.f32 0.0, %v331
  %v333 = vpop.f32.mrb[0].mxu0
  %334 = vmatprep.mubr.bf16.mxu0 0
  %335 = vmatmul.mubr.bf16.gmra.mrb[0].mxu0 %v216
  %v336 = vpop.f32.mrb[0].mxu0
  %v337 = vadd.f32 0.0, %v336
  %v338 = vpop.f32.mrb[0].mxu0
  %v339 = vpop.f32.mrb[0].mxu0
  %v340 = vadd.f32 0.0, %v339
  %v341 = vpop.f32.mrb[0].mxu0
  %342 = vmatprep.mubr.bf16.mxu0 0
  %343 = vmatmul.mubr.bf16.gmra.mrb[0].mxu0 %v219
  %v344 = vpop.f32.mrb[0].mxu0
  %v345 = vadd.f32 0.0, %v344
  %v346 = vpop.f32.mrb[0].mxu0
  %v347 = vpop.f32.mrb[0].mxu0
  %v348 = vadd.f32 0.0, %v347
  %v349 = vpop.f32.mrb[0].mxu0
  %350 = vmatprep.mubr.bf16.mxu0 0
  %351 = vmatmul.mubr.bf16.gmra.mrb[0].mxu0 %v222
  %v352 = vpop.f32.mrb[0].mxu0
  %v353 = vadd.f32 0.0, %v352
  %v354 = vpop.f32.mrb[0].mxu0
  %v355 = vpop.f32.mrb[0].mxu0
  %v356 = vadd.f32 0.0, %v355
  %v357 = vpop.f32.mrb[0].mxu0
  %358 = vmatprep.mubr.bf16.mxu0 0
  %359 = vmatmul.mubr.bf16.gmra.mrb[0].mxu0 %v225
  %v360 = vpop.f32.mrb[0].mxu0
  %v361 = vadd.f32 0.0, %v360
  %v362 = vpop.f32.mrb[0].mxu0
  %v363 = vpop.f32.mrb[0].mxu0
  %v364 = vadd.f32 0.0, %v363
  %v365 = vpop.f32.mrb[0].mxu0
  %366 = vmatprep.mubr.bf16.mxu0 0
  %367 = vmatmul.mubr.bf16.gmra.mrb[0].mxu0 %v228
  %v368 = vpop.f32.mrb[0].mxu0
  %v369 = vadd.f32 0.0, %v368
  %v370 = vpop.f32.mrb[0].mxu0
  %v371 = vpop.f32.mrb[0].mxu0
  %v372 = vadd.f32 0.0, %v371
  %v373 = vpop.f32.mrb[0].mxu0
  %374 = vmatprep.mubr.bf16.mxu0 0
  %375 = vmatmul.mubr.bf16.gmra.mrb[0].mxu0 %v231
  %v376 = vpop.f32.mrb[0].mxu0
  %v377 = vadd.f32 0.0, %v376
  %v378 = vpop.f32.mrb[0].mxu0
  %v379 = vpop.f32.mrb[0].mxu0
  %v380 = vadd.f32 0.0, %v379
  %v381 = vpop.f32.mrb[0].mxu0
  %382 = vmatprep.mubr.bf16.mxu0 0
  %383 = vmatmul.mubr.bf16.gmra.mrb[0].mxu0 %v234
  %v384 = vpop.f32.mrb[0].mxu0
  %v385 = vadd.f32 0.0, %v384
  %v386 = vpop.f32.mrb[0].mxu0
  %v387 = vpop.f32.mrb[0].mxu0
  %v388 = vadd.f32 0.0, %v387
  %v389 = vpop.f32.mrb[0].mxu0
  %390 = vmatprep.mubr.bf16.mxu0 0
  %391 = vmatmul.mubr.bf16.gmra.mrb[0].mxu0 %v237
  %v392 = vpop.f32.mrb[0].mxu0
  %v393 = vadd.f32 0.0, %v392
  %v394 = vpop.f32.mrb[0].mxu0
  %v395 = vpop.f32.mrb[0].mxu0
  %v396 = vadd.f32 0.0, %v395
  %v397 = vpop.f32.mrb[0].mxu0
  %398 = vmatprep.mubr.bf16.mxu0 0
  %399 = vmatmul.mubr.bf16.gmra.mrb[0].mxu0 %v240
  %v400 = vpop.f32.mrb[0].mxu0
  %v401 = vadd.f32 0.0, %v400
  %v402 = vpop.f32.mrb[0].mxu0
  %v403 = vpop.f32.mrb[0].mxu0
  %v404 = vadd.f32 0.0, %v403
  %v405 = vpop.f32.mrb[0].mxu0
  %406 = vmatprep.mubr.bf16.mxu0 0
  %407 = vmatmul.mubr.bf16.gmra.mrb[0].mxu0 %v243
  %v408 = vpop.f32.mrb[0].mxu0
  %v409 = vadd.f32 0.0, %v408
  %v410 = vpop.f32.mrb[0].mxu0
  %v411 = vpop.f32.mrb[0].mxu0
  %v412 = vadd.f32 0.0, %v411
  %v413 = vpop.f32.mrb[0].mxu0
  %414 = vmatprep.mubr.bf16.mxu0 0
  %415 = vmatmul.mubr.bf16.gmra.mrb[0].mxu0 %v246
  %v416 = vpop.f32.mrb[0].mxu0
  %v417 = vadd.f32 0.0, %v416
  %v418 = vpop.f32.mrb[0].mxu0
  %v419 = vpop.f32.mrb[0].mxu0
  %v420 = vadd.f32 0.0, %v419
  %v421 = vpop.f32.mrb[0].mxu0
  %422 = vmatprep.mubr.bf16.mxu0 0
  %423 = vmatmul.mubr.bf16.gmra.mrb[0].mxu0 %v249
  %v424 = vpop.f32.mrb[0].mxu0
  %v425 = vadd.f32 0.0, %v424
  %v426 = vpop.f32.mrb[0].mxu0
  %v427 = vpop.f32.mrb[0].mxu0
  %v428 = vadd.f32 0.0, %v427
  %v429 = vpop.f32.mrb[0].mxu0
  %430 = vmatprep.mubr.bf16.mxu0 0
  %431 = vmatmul.mubr.bf16.gmra.mrb[0].mxu0 %v252
  %v432 = vpop.f32.mrb[0].mxu0
  %v433 = vadd.f32 0.0, %v432
  %v434 = vpop.f32.mrb[0].mxu0
  %v435 = vpop.f32.mrb[0].mxu0
  %v436 = vadd.f32 0.0, %v435
  %v437 = vpop.f32.mrb[0].mxu0
  %438 = vmatprep.mubr.bf16.mxu0 0
  %439 = vmatmul.mubr.bf16.gmra.mrb[0].mxu0 %v255
  %v440 = vpop.f32.mrb[0].mxu0
  %v441 = vadd.f32 0.0, %v440
  %v442 = vpop.f32.mrb[0].mxu0
  %v443 = vpop.f32.mrb[0].mxu0
  %v444 = vadd.f32 0.0, %v443
  %v445 = vpop.f32.mrb[0].mxu0
  %446 = vmatprep.mubr.bf16.mxu0 0
  %447 = vmatmul.mubr.bf16.gmra.mrb[0].mxu0 %v258
  %v448 = vpop.f32.mrb[0].mxu0
  %v449 = vadd.f32 0.0, %v448
  %v450 = vpop.f32.mrb[0].mxu0
  %v451 = vpop.f32.mrb[0].mxu0
  %v452 = vadd.f32 0.0, %v451
  %v453 = vpop.f32.mrb[0].mxu0
  %454 = vmatprep.mubr.bf16.mxu0 0
  %455 = vmatmul.mubr.bf16.gmra.mrb[0].mxu0 %v261
  %v456 = vpop.f32.mrb[0].mxu0
  %v457 = vadd.f32 0.0, %v456
  %v458 = vpop.f32.mrb[0].mxu0
  %v459 = vpop.f32.mrb[0].mxu0
  %v460 = vadd.f32 0.0, %v459
  %v461 = vpop.f32.mrb[0].mxu0
  %462 = vmatprep.mubr.bf16.mxu0 0
  %463 = vmatmul.mubr.bf16.gmra.mrb[0].mxu0 %v264
  %v464 = vpop.f32.mrb[0].mxu0
  %v465 = vadd.f32 0.0, %v464
  %v466 = vpop.f32.mrb[0].mxu0
  %v467 = vpop.f32.mrb[0].mxu0
  %v468 = vadd.f32 0.0, %v467
  %v469 = vpop.f32.mrb[0].mxu0
  %470 = vmatprep.mubr.bf16.mxu0 0
  %471 = vmatmul.mubr.bf16.gmra.mrb[0].mxu0 %v267
  %v472 = vpop.f32.mrb[0].mxu0
  %v473 = vadd.f32 0.0, %v472
  %v474 = vpop.f32.mrb[0].mxu0
  %v475 = vpop.f32.mrb[0].mxu0
  %v476 = vadd.f32 0.0, %v475
  %v477 = vpop.f32.mrb[0].mxu0
  %478 = vmatprep.mubr.bf16.mxu0 0
  %479 = vmatmul.mubr.bf16.gmra.mrb[0].mxu0 %v270
  %v480 = vpop.f32.mrb[0].mxu0
  %v481 = vadd.f32 0.0, %v480
  %v482 = vpop.f32.mrb[0].mxu0
  %v483 = vpop.f32.mrb[0].mxu0
  %v484 = vadd.f32 0.0, %v483
  %v485 = vpop.f32.mrb[0].mxu0
  %486 = vmatprep.mubr.bf16.mxu0 0
  %487 = vmatmul.mubr.bf16.gmra.mrb[0].mxu0 %v273
  %v488 = vpop.f32.mrb[0].mxu0
  %v489 = vadd.f32 0.0, %v488
  %v490 = vpop.f32.mrb[0].mxu0
  %v491 = vpop.f32.mrb[0].mxu0
  %v492 = vadd.f32 0.0, %v491
  %v493 = vpop.f32.mrb[0].mxu0
  %494 = vmatprep.mubr.bf16.mxu0 0
  %495 = vmatmul.mubr.bf16.gmra.mrb[0].mxu0 %v276
  %v496 = vpop.f32.mrb[0].mxu0
  %v497 = vadd.f32 0.0, %v496
  %v498 = vpop.f32.mrb[0].mxu0
  %v499 = vpop.f32.mrb[0].mxu0
  %v500 = vadd.f32 0.0, %v499
  %v501 = vpop.f32.mrb[0].mxu0
  %502 = vmatprep.mubr.bf16.mxu0 0
  %503 = vmatmul.mubr.bf16.gmra.mrb[0].mxu0 %v279
  %v504 = vpop.f32.mrb[0].mxu0
  %v505 = vadd.f32 0.0, %v504
  %v506 = vpop.f32.mrb[0].mxu0
  %v507 = vpop.f32.mrb[0].mxu0
  %v508 = vadd.f32 0.0, %v507
  %v509 = vpop.f32.mrb[0].mxu0
  %510 = vmatprep.mubr.bf16.mxu0 0
  %511 = vmatmul.mubr.bf16.gmra.mrb[0].mxu0 %v282
  %v512 = vpop.f32.mrb[0].mxu0
  %v513 = vadd.f32 0.0, %v512
  %v514 = vpop.f32.mrb[0].mxu0
  %v515 = vpop.f32.mrb[0].mxu0
  %v516 = vadd.f32 0.0, %v515
  %v517 = vpop.f32.mrb[0].mxu0
  %518 = vmatprep.mubr.bf16.mxu0 0
  %519 = vmatmul.mubr.bf16.gmra.mrb[0].mxu0 %v285
  %v520 = vpop.f32.mrb[0].mxu0
  %v521 = vadd.f32 0.0, %v520
  %v522 = vpop.f32.mrb[0].mxu0
  %v523 = vpop.f32.mrb[0].mxu0
  %v524 = vpop.f32.mrb[0].mxu0
  %525 = vdwg.mxu0
  %v526 = vld [vmem:[%s1] sm:$0xf]
  %v527 = vld [vmem:[%s1 + $0x4] sm:$0xf]
  %v528 = vld [vmem:[%s1 + $0x8] sm:$0xf]
  %v529 = vld [vmem:[%s1 + $0xc] sm:$0xf]
  %v530 = vld [vmem:[%s1 + $0x10] sm:$0xf]
  %v531 = vld [vmem:[%s1 + $0x14] sm:$0xf]
  %v532 = vld [vmem:[%s1 + $0x18] sm:$0xf]
  %v533 = vld [vmem:[%s1 + $0x1c] sm:$0xf]
  %v534 = vld [vmem:[%s1 + $0x20] sm:$0xf]
  %v535 = vld [vmem:[%s1 + $0x24] sm:$0xf]
  %v536 = vld [vmem:[%s1 + $0x28] sm:$0xf]
  %v537 = vld [vmem:[%s1 + $0x2c] sm:$0xf]
  %v538 = vld [vmem:[%s1 + $0x30] sm:$0xf]
  %v539 = vld [vmem:[%s1 + $0x34] sm:$0xf]
  %v540 = vld [vmem:[%s1 + $0x38] sm:$0xf]
  %v541 = vld [vmem:[%s1 + $0x3c] sm:$0xf]
  %v542 = vld [vmem:[%s1 + $0x40] sm:$0xf]
  %v543 = vld [vmem:[%s1 + $0x44] sm:$0xf]
  %v544 = vld [vmem:[%s1 + $0x48] sm:$0xf]
  %v545 = vld [vmem:[%s1 + $0x4c] sm:$0xf]
  %v546 = vld [vmem:[%s1 + $0x50] sm:$0xf]
  %v547 = vld [vmem:[%s1 + $0x54] sm:$0xf]
  %v548 = vld [vmem:[%s1 + $0x58] sm:$0xf]
  %v549 = vld [vmem:[%s1 + $0x5c] sm:$0xf]
  %v550 = vld [vmem:[%s1 + $0x60] sm:$0xf]
  %v551 = vld [vmem:[%s1 + $0x64] sm:$0xf]
  %v552 = vld [vmem:[%s1 + $0x68] sm:$0xf]
  %v553 = vld [vmem:[%s1 + $0x6c] sm:$0xf]
  %v554 = vld [vmem:[%s1 + $0x70] sm:$0xf]
  %v555 = vld [vmem:[%s1 + $0x74] sm:$0xf]
  %v556 = vld [vmem:[%s1 + $0x78] sm:$0xf]
  %v557 = vld [vmem:[%s1 + $0x7c] sm:$0xf]
  %v558 = vld [vmem:[%s1 + $0x80] sm:$0xf]
  %v559 = vld [vmem:[%s1 + $0x84] sm:$0xf]
  %v560 = vld [vmem:[%s1 + $0x88] sm:$0xf]
  %v561 = vld [vmem:[%s1 + $0x8c] sm:$0xf]
  %v562 = vld [vmem:[%s1 + $0x90] sm:$0xf]
  %v563 = vld [vmem:[%s1 + $0x94] sm:$0xf]
  %v564 = vld [vmem:[%s1 + $0x98] sm:$0xf]
  %v565 = vld [vmem:[%s1 + $0x9c] sm:$0xf]
  %v566 = vld [vmem:[%s1 + $0xa0] sm:$0xf]
  %v567 = vld [vmem:[%s1 + $0xa4] sm:$0xf]
  %v568 = vld [vmem:[%s1 + $0xa8] sm:$0xf]
  %v569 = vld [vmem:[%s1 + $0xac] sm:$0xf]
  %v570 = vld [vmem:[%s1 + $0xb0] sm:$0xf]
  %v571 = vld [vmem:[%s1 + $0xb4] sm:$0xf]
  %v572 = vld [vmem:[%s1 + $0xb8] sm:$0xf]
  %v573 = vld [vmem:[%s1 + $0xbc] sm:$0xf]
  %v574 = vld [vmem:[%s1 + $0xc0] sm:$0xf]
  %v624 = vunpack.c.l.b16 %v526
  %v625 = vunpack.c.l.b16 %v527
  %v626 = vunpack.c.l.b16 %v528
  %v627 = vunpack.c.l.b16 %v529
  %v628 = vunpack.c.l.b16 %v530
  %v629 = vunpack.c.l.b16 %v531
  %v630 = vunpack.c.l.b16 %v532
  %v631 = vunpack.c.l.b16 %v533
  %v632 = vunpack.c.l.b16 %v534
  %v633 = vunpack.c.l.b16 %v535
  %v634 = vunpack.c.l.b16 %v536
  %v635 = vunpack.c.l.b16 %v537
  %v636 = vunpack.c.l.b16 %v538
  %v637 = vunpack.c.l.b16 %v539
  %v638 = vunpack.c.l.b16 %v540
  %v639 = vunpack.c.l.b16 %v541
  %v640 = vunpack.c.l.b16 %v542
  %v641 = vunpack.c.l.b16 %v543
  %v642 = vunpack.c.l.b16 %v544
  %v643 = vunpack.c.l.b16 %v545
  %v644 = vunpack.c.l.b16 %v546
  %v645 = vunpack.c.l.b16 %v547
  %v646 = vunpack.c.l.b16 %v548
  %v647 = vunpack.c.l.b16 %v549
  %v648 = vunpack.c.l.b16 %v550
  %v649 = vunpack.c.l.b16 %v551
  %v650 = vunpack.c.l.b16 %v552
  %v651 = vunpack.c.l.b16 %v553
  %v652 = vunpack.c.l.b16 %v554
  %v653 = vunpack.c.l.b16 %v555
  %v654 = vunpack.c.l.b16 %v556
  %v655 = vunpack.c.l.b16 %v557
  %v656 = vunpack.c.l.b16 %v558
  %v657 = vunpack.c.l.b16 %v559
  %v658 = vunpack.c.l.b16 %v560
  %v659 = vunpack.c.l.b16 %v561
  %v660 = vunpack.c.l.b16 %v562
  %v661 = vunpack.c.l.b16 %v563
  %v662 = vunpack.c.l.b16 %v564
  %v663 = vunpack.c.l.b16 %v565
  %v664 = vunpack.c.l.b16 %v566
  %v665 = vunpack.c.l.b16 %v567
  %v666 = vunpack.c.l.b16 %v568
  %v667 = vunpack.c.l.b16 %v569
  %v668 = vunpack.c.l.b16 %v570
  %v669 = vunpack.c.l.b16 %v571
  %v670 = vunpack.c.l.b16 %v572
  %v671 = vunpack.c.l.b16 %v573
  %v672 = vunpack.c.l.b16 %v574
  %v673 = vpack.c.b16 %v625, %v624
  %v674 = vpack.c.b16 %v627, %v626
  %v675 = vpack.c.b16 %v629, %v628
  %v676 = vpack.c.b16 %v631, %v630
  %v677 = vpack.c.b16 %v633, %v632
  %v678 = vpack.c.b16 %v635, %v634
  %v679 = vpack.c.b16 %v637, %v636
  %v680 = vpack.c.b16 %v639, %v638
  %v681 = vpack.c.b16 %v641, %v640
  %v682 = vpack.c.b16 %v643, %v642
  %v683 = vpack.c.b16 %v645, %v644
  %v684 = vpack.c.b16 %v647, %v646
  %v685 = vpack.c.b16 %v649, %v648
  %v686 = vpack.c.b16 %v651, %v650
  %v687 = vpack.c.b16 %v653, %v652
  %v688 = vpack.c.b16 %v655, %v654
  %v689 = vpack.c.b16 %v657, %v656
  %v690 = vpack.c.b16 %v659, %v658
  %v691 = vpack.c.b16 %v661, %v660
  %v692 = vpack.c.b16 %v663, %v662
  %v693 = vpack.c.b16 %v665, %v664
  %v694 = vpack.c.b16 %v667, %v666
  %v695 = vpack.c.b16 %v669, %v668
  %v696 = vpack.c.b16 %v671, %v670
  %v697 = vpack.c.b16 %v672, %v672
  %v699 = vsel %vm211, %v673, 0
  %v702 = vsel %vm211, %v674, 0
  %v705 = vsel %vm211, %v675, 0
  %v708 = vsel %vm211, %v676, 0
  %v711 = vsel %vm211, %v677, 0
  %v714 = vsel %vm211, %v678, 0
  %v717 = vsel %vm211, %v679, 0
  %v720 = vsel %vm211, %v680, 0
  %v723 = vsel %vm211, %v681, 0
  %v726 = vsel %vm211, %v682, 0
  %v729 = vsel %vm211, %v683, 0
  %v732 = vsel %vm211, %v684, 0
  %v735 = vsel %vm211, %v685, 0
  %v738 = vsel %vm211, %v686, 0
  %v741 = vsel %vm211, %v687, 0
  %v744 = vsel %vm211, %v688, 0
  %v747 = vsel %vm211, %v689, 0
  %v750 = vsel %vm211, %v690, 0
  %v753 = vsel %vm211, %v691, 0
  %v756 = vsel %vm211, %v692, 0
  %v759 = vsel %vm211, %v693, 0
  %v762 = vsel %vm211, %v694, 0
  %v765 = vsel %vm211, %v695, 0
  %v768 = vsel %vm211, %v696, 0
  %v771 = vsel %vm211, %v697, 0
  %773 = vmatprep.subr.bf16.mxu0 0
  %774 = vmatpush1.bf16.msra.mxu0 %v208
  %775 = vmatprep.subr.bf16.mxu0 0
  %776 = vmatpush1.bf16.msra.mxu0 %v292
  %777 = vmatprep.subr.bf16.mxu0 0
  %778 = vmatpush1.bf16.msra.mxu0 0
  %779 = vmatprep.subr.bf16.mxu0 0
  %780 = vmatpush1.bf16.msra.mxu0 0
  %781 = vmatprep.subr.bf16.mxu0 0
  %782 = vmatpush1.bf16.msra.mxu0 0
  %783 = vmatprep.subr.bf16.mxu0 0
  %784 = vmatpush1.bf16.msra.mxu0 0
  %785 = vmatprep.subr.bf16.mxu0 0
  %786 = vmatpush1.bf16.msra.mxu0 0
  %787 = vmatprep.subr.bf16.mxu0 0
  %788 = vmatpush1.bf16.msra.mxu0 0
  %789 = vmatprep.subr.bf16.mxu0 0
  %790 = vmatpush1.bf16.msra.mxu0 0
  %791 = vmatprep.subr.bf16.mxu0 0
  %792 = vmatpush1.bf16.msra.mxu0 0
  %793 = vmatprep.subr.bf16.mxu0 0
  %794 = vmatpush1.bf16.msra.mxu0 0
  %795 = vmatprep.subr.bf16.mxu0 0
  %796 = vmatpush1.bf16.msra.mxu0 0
  %797 = vmatprep.subr.bf16.mxu0 0
  %798 = vmatpush1.bf16.msra.mxu0 0
  %799 = vmatprep.subr.bf16.mxu0 0
  %800 = vmatpush1.bf16.msra.mxu0 0
  %801 = vmatprep.subr.bf16.mxu0 0
  %802 = vmatpush1.bf16.msra.mxu0 0
  %803 = vmatprep.subr.bf16.mxu0 0
  %804 = vmatpush1.bf16.msra.mxu0 0
  %805 = vmatprep.mubr.bf16.mxu0 0
  %806 = vmatmul.mubr.bf16.gmra.mrb[0].mxu0 %v699
  %v807 = vpop.f32.mrb[0].mxu0
  %v808 = vadd.f32 0.0, %v807
  %v809 = vpop.f32.mrb[0].mxu0
  %v810 = vpop.f32.mrb[0].mxu0
  %v811 = vadd.f32 0.0, %v810
  %v812 = vpop.f32.mrb[0].mxu0
  %813 = vmatprep.mubr.bf16.mxu0 0
  %814 = vmatmul.mubr.bf16.gmra.mrb[0].mxu0 %v702
  %v815 = vpop.f32.mrb[0].mxu0
  %v816 = vadd.f32 0.0, %v815
  %v817 = vpop.f32.mrb[0].mxu0
  %v818 = vpop.f32.mrb[0].mxu0
  %v819 = vadd.f32 0.0, %v818
  %v820 = vpop.f32.mrb[0].mxu0
  %821 = vmatprep.mubr.bf16.mxu0 0
  %822 = vmatmul.mubr.bf16.gmra.mrb[0].mxu0 %v705
  %v823 = vpop.f32.mrb[0].mxu0
  %v824 = vadd.f32 0.0, %v823
  %v825 = vpop.f32.mrb[0].mxu0
  %v826 = vpop.f32.mrb[0].mxu0
  %v827 = vadd.f32 0.0, %v826
  %v828 = vpop.f32.mrb[0].mxu0
  %829 = vmatprep.mubr.bf16.mxu0 0
  %830 = vmatmul.mubr.bf16.gmra.mrb[0].mxu0 %v708
  %v831 = vpop.f32.mrb[0].mxu0
  %v832 = vadd.f32 0.0, %v831
  %v833 = vpop.f32.mrb[0].mxu0
  %v834 = vpop.f32.mrb[0].mxu0
  %v835 = vadd.f32 0.0, %v834
  %v836 = vpop.f32.mrb[0].mxu0
  %837 = vmatprep.mubr.bf16.mxu0 0
  %838 = vmatmul.mubr.bf16.gmra.mrb[0].mxu0 %v711
  %v839 = vpop.f32.mrb[0].mxu0
  %v840 = vadd.f32 0.0, %v839
  %v841 = vpop.f32.mrb[0].mxu0
  %v842 = vpop.f32.mrb[0].mxu0
  %v843 = vadd.f32 0.0, %v842
  %v844 = vpop.f32.mrb[0].mxu0
  %845 = vmatprep.mubr.bf16.mxu0 0
  %846 = vmatmul.mubr.bf16.gmra.mrb[0].mxu0 %v714
  %v847 = vpop.f32.mrb[0].mxu0
  %v848 = vadd.f32 0.0, %v847
  %v849 = vpop.f32.mrb[0].mxu0
  %v850 = vpop.f32.mrb[0].mxu0
  %v851 = vadd.f32 0.0, %v850
  %v852 = vpop.f32.mrb[0].mxu0
  %853 = vmatprep.mubr.bf16.mxu0 0
  %854 = vmatmul.mubr.bf16.gmra.mrb[0].mxu0 %v717
  %v855 = vpop.f32.mrb[0].mxu0
  %v856 = vadd.f32 0.0, %v855
  %v857 = vpop.f32.mrb[0].mxu0
  %v858 = vpop.f32.mrb[0].mxu0
  %v859 = vadd.f32 0.0, %v858
  %v860 = vpop.f32.mrb[0].mxu0
  %861 = vmatprep.mubr.bf16.mxu0 0
  %862 = vmatmul.mubr.bf16.gmra.mrb[0].mxu0 %v720
  %v863 = vpop.f32.mrb[0].mxu0
  %v864 = vadd.f32 0.0, %v863
  %v865 = vpop.f32.mrb[0].mxu0
  %v866 = vpop.f32.mrb[0].mxu0
  %v867 = vadd.f32 0.0, %v866
  %v868 = vpop.f32.mrb[0].mxu0
  %869 = vmatprep.mubr.bf16.mxu0 0
  %870 = vmatmul.mubr.bf16.gmra.mrb[0].mxu0 %v723
  %v871 = vpop.f32.mrb[0].mxu0
  %v872 = vadd.f32 0.0, %v871
  %v873 = vpop.f32.mrb[0].mxu0
  %v874 = vpop.f32.mrb[0].mxu0
  %v875 = vadd.f32 0.0, %v874
  %v876 = vpop.f32.mrb[0].mxu0
  %877 = vmatprep.mubr.bf16.mxu0 0
  %878 = vmatmul.mubr.bf16.gmra.mrb[0].mxu0 %v726
  %v879 = vpop.f32.mrb[0].mxu0
  %v880 = vadd.f32 0.0, %v879
  %v881 = vpop.f32.mrb[0].mxu0
  %v882 = vpop.f32.mrb[0].mxu0
  %v883 = vadd.f32 0.0, %v882
  %v884 = vpop.f32.mrb[0].mxu0
  %885 = vmatprep.mubr.bf16.mxu0 0
  %886 = vmatmul.mubr.bf16.gmra.mrb[0].mxu0 %v729
  %v887 = vpop.f32.mrb[0].mxu0
  %v888 = vadd.f32 0.0, %v887
  %v889 = vpop.f32.mrb[0].mxu0
  %v890 = vpop.f32.mrb[0].mxu0
  %v891 = vadd.f32 0.0, %v890
  %v892 = vpop.f32.mrb[0].mxu0
  %893 = vmatprep.mubr.bf16.mxu0 0
  %894 = vmatmul.mubr.bf16.gmra.mrb[0].mxu0 %v732
  %v895 = vpop.f32.mrb[0].mxu0
  %v896 = vadd.f32 0.0, %v895
  %v897 = vpop.f32.mrb[0].mxu0
  %v898 = vpop.f32.mrb[0].mxu0
  %v899 = vadd.f32 0.0, %v898
  %v900 = vpop.f32.mrb[0].mxu0
  %901 = vmatprep.mubr.bf16.mxu0 0
  %902 = vmatmul.mubr.bf16.gmra.mrb[0].mxu0 %v735
  %v903 = vpop.f32.mrb[0].mxu0
  %v904 = vadd.f32 0.0, %v903
  %v905 = vpop.f32.mrb[0].mxu0
  %v906 = vpop.f32.mrb[0].mxu0
  %v907 = vadd.f32 0.0, %v906
  %v908 = vpop.f32.mrb[0].mxu0
  %909 = vmatprep.mubr.bf16.mxu0 0
  %910 = vmatmul.mubr.bf16.gmra.mrb[0].mxu0 %v738
  %v911 = vpop.f32.mrb[0].mxu0
  %v912 = vadd.f32 0.0, %v911
  %v913 = vpop.f32.mrb[0].mxu0
  %v914 = vpop.f32.mrb[0].mxu0
  %v915 = vadd.f32 0.0, %v914
  %v916 = vpop.f32.mrb[0].mxu0
  %917 = vmatprep.mubr.bf16.mxu0 0
  %918 = vmatmul.mubr.bf16.gmra.mrb[0].mxu0 %v741
  %v919 = vpop.f32.mrb[0].mxu0
  %v920 = vadd.f32 0.0, %v919
  %v921 = vpop.f32.mrb[0].mxu0
  %v922 = vpop.f32.mrb[0].mxu0
  %v923 = vadd.f32 0.0, %v922
  %v924 = vpop.f32.mrb[0].mxu0
  %925 = vmatprep.mubr.bf16.mxu0 0
  %926 = vmatmul.mubr.bf16.gmra.mrb[0].mxu0 %v744
  %v927 = vpop.f32.mrb[0].mxu0
  %v928 = vadd.f32 0.0, %v927
  %v929 = vpop.f32.mrb[0].mxu0
  %v930 = vpop.f32.mrb[0].mxu0
  %v931 = vadd.f32 0.0, %v930
  %v932 = vpop.f32.mrb[0].mxu0
  %933 = vmatprep.mubr.bf16.mxu0 0
  %934 = vmatmul.mubr.bf16.gmra.mrb[0].mxu0 %v747
  %v935 = vpop.f32.mrb[0].mxu0
  %v936 = vadd.f32 0.0, %v935
  %v937 = vpop.f32.mrb[0].mxu0
  %v938 = vpop.f32.mrb[0].mxu0
  %v939 = vadd.f32 0.0, %v938
  %v940 = vpop.f32.mrb[0].mxu0
  %941 = vmatprep.mubr.bf16.mxu0 0
  %942 = vmatmul.mubr.bf16.gmra.mrb[0].mxu0 %v750
  %v943 = vpop.f32.mrb[0].mxu0
  %v944 = vadd.f32 0.0, %v943
  %v945 = vpop.f32.mrb[0].mxu0
  %v946 = vpop.f32.mrb[0].mxu0
  %v947 = vadd.f32 0.0, %v946
  %v948 = vpop.f32.mrb[0].mxu0
  %949 = vmatprep.mubr.bf16.mxu0 0
  %950 = vmatmul.mubr.bf16.gmra.mrb[0].mxu0 %v753
  %v951 = vpop.f32.mrb[0].mxu0
  %v952 = vadd.f32 0.0, %v951
  %v953 = vpop.f32.mrb[0].mxu0
  %v954 = vpop.f32.mrb[0].mxu0
  %v955 = vadd.f32 0.0, %v954
  %v956 = vpop.f32.mrb[0].mxu0
  %957 = vmatprep.mubr.bf16.mxu0 0
  %958 = vmatmul.mubr.bf16.gmra.mrb[0].mxu0 %v756
  %v959 = vpop.f32.mrb[0].mxu0
  %v960 = vadd.f32 0.0, %v959
  %v961 = vpop.f32.mrb[0].mxu0
  %v962 = vpop.f32.mrb[0].mxu0
  %v963 = vadd.f32 0.0, %v962
  %v964 = vpop.f32.mrb[0].mxu0
  %965 = vmatprep.mubr.bf16.mxu0 0
  %966 = vmatmul.mubr.bf16.gmra.mrb[0].mxu0 %v759
  %v967 = vpop.f32.mrb[0].mxu0
  %v968 = vadd.f32 0.0, %v967
  %v969 = vpop.f32.mrb[0].mxu0
  %v970 = vpop.f32.mrb[0].mxu0
  %v971 = vadd.f32 0.0, %v970
  %v972 = vpop.f32.mrb[0].mxu0
  %973 = vmatprep.mubr.bf16.mxu0 0
  %974 = vmatmul.mubr.bf16.gmra.mrb[0].mxu0 %v762
  %v975 = vpop.f32.mrb[0].mxu0
  %v976 = vadd.f32 0.0, %v975
  %v977 = vpop.f32.mrb[0].mxu0
  %v978 = vpop.f32.mrb[0].mxu0
  %v979 = vadd.f32 0.0, %v978
  %v980 = vpop.f32.mrb[0].mxu0
  %981 = vmatprep.mubr.bf16.mxu0 0
  %982 = vmatmul.mubr.bf16.gmra.mrb[0].mxu0 %v765
  %v983 = vpop.f32.mrb[0].mxu0
  %v984 = vadd.f32 0.0, %v983
  %v985 = vpop.f32.mrb[0].mxu0
  %v986 = vpop.f32.mrb[0].mxu0
  %v987 = vadd.f32 0.0, %v986
  %v988 = vpop.f32.mrb[0].mxu0
  %989 = vmatprep.mubr.bf16.mxu0 0
  %990 = vmatmul.mubr.bf16.gmra.mrb[0].mxu0 %v768
  %v991 = vpop.f32.mrb[0].mxu0
  %v992 = vadd.f32 0.0, %v991
  %v993 = vpop.f32.mrb[0].mxu0
  %v994 = vpop.f32.mrb[0].mxu0
  %v995 = vadd.f32 0.0, %v994
  %v996 = vpop.f32.mrb[0].mxu0
  %997 = vmatprep.mubr.bf16.mxu0 0
  %998 = vmatmul.mubr.bf16.gmra.mrb[0].mxu0 %v771
  %v999 = vpop.f32.mrb[0].mxu0
  %v1000 = vadd.f32 0.0, %v999
  %v1001 = vpop.f32.mrb[0].mxu0
  %v1002 = vpop.f32.mrb[0].mxu0
  %v1003 = vpop.f32.mrb[0].mxu0
  %1004 = vdwg.mxu0
  %v1005 = vld [vmem:[%s2] sm:$0xf]
  %v1006 = vld [vmem:[%s2 + $0x4] sm:$0xf]
  %v1007 = vld [vmem:[%s2 + $0x8] sm:$0xf]
  %v1008 = vld [vmem:[%s2 + $0xc] sm:$0xf]
  %v1009 = vld [vmem:[%s2 + $0x10] sm:$0xf]
  %v1010 = vld [vmem:[%s2 + $0x14] sm:$0xf]
  %v1011 = vld [vmem:[%s2 + $0x18] sm:$0xf]
  %v1012 = vld [vmem:[%s2 + $0x1c] sm:$0xf]
  %v1013 = vld [vmem:[%s2 + $0x20] sm:$0xf]
  %v1014 = vld [vmem:[%s2 + $0x24] sm:$0xf]
  %v1015 = vld [vmem:[%s2 + $0x28] sm:$0xf]
  %v1016 = vld [vmem:[%s2 + $0x2c] sm:$0xf]
  %v1017 = vld [vmem:[%s2 + $0x30] sm:$0xf]
  %v1018 = vld [vmem:[%s2 + $0x34] sm:$0xf]
  %v1019 = vld [vmem:[%s2 + $0x38] sm:$0xf]
  %v1020 = vld [vmem:[%s2 + $0x3c] sm:$0xf]
  %v1021 = vld [vmem:[%s2 + $0x40] sm:$0xf]
  %v1022 = vld [vmem:[%s2 + $0x44] sm:$0xf]
  %v1023 = vld [vmem:[%s2 + $0x48] sm:$0xf]
  %v1024 = vld [vmem:[%s2 + $0x4c] sm:$0xf]
  %v1025 = vld [vmem:[%s2 + $0x50] sm:$0xf]
  %v1026 = vld [vmem:[%s2 + $0x54] sm:$0xf]
  %v1027 = vld [vmem:[%s2 + $0x58] sm:$0xf]
  %v1028 = vld [vmem:[%s2 + $0x5c] sm:$0xf]
  %v1029 = vld [vmem:[%s2 + $0x60] sm:$0xf]
  %v1030 = vld [vmem:[%s2 + $0x64] sm:$0xf]
  %v1031 = vld [vmem:[%s2 + $0x68] sm:$0xf]
  %v1032 = vld [vmem:[%s2 + $0x6c] sm:$0xf]
  %v1033 = vld [vmem:[%s2 + $0x70] sm:$0xf]
  %v1034 = vld [vmem:[%s2 + $0x74] sm:$0xf]
  %v1035 = vld [vmem:[%s2 + $0x78] sm:$0xf]
  %v1036 = vld [vmem:[%s2 + $0x7c] sm:$0xf]
  %v1037 = vld [vmem:[%s2 + $0x80] sm:$0xf]
  %v1038 = vld [vmem:[%s2 + $0x84] sm:$0xf]
  %v1039 = vld [vmem:[%s2 + $0x88] sm:$0xf]
  %v1040 = vld [vmem:[%s2 + $0x8c] sm:$0xf]
  %v1041 = vld [vmem:[%s2 + $0x90] sm:$0xf]
  %v1042 = vld [vmem:[%s2 + $0x94] sm:$0xf]
  %v1043 = vld [vmem:[%s2 + $0x98] sm:$0xf]
  %v1044 = vld [vmem:[%s2 + $0x9c] sm:$0xf]
  %v1045 = vld [vmem:[%s2 + $0xa0] sm:$0xf]
  %v1046 = vld [vmem:[%s2 + $0xa4] sm:$0xf]
  %v1047 = vld [vmem:[%s2 + $0xa8] sm:$0xf]
  %v1048 = vld [vmem:[%s2 + $0xac] sm:$0xf]
  %v1049 = vld [vmem:[%s2 + $0xb0] sm:$0xf]
  %v1050 = vld [vmem:[%s2 + $0xb4] sm:$0xf]
  %v1051 = vld [vmem:[%s2 + $0xb8] sm:$0xf]
  %v1052 = vld [vmem:[%s2 + $0xbc] sm:$0xf]
  %v1053 = vld [vmem:[%s2 + $0xc0] sm:$0xf]
  %v1103 = vunpack.c.l.b16 %v1005
  %v1104 = vunpack.c.l.b16 %v1006
  %v1105 = vunpack.c.l.b16 %v1007
  %v1106 = vunpack.c.l.b16 %v1008
  %v1107 = vunpack.c.l.b16 %v1009
  %v1108 = vunpack.c.l.b16 %v1010
  %v1109 = vunpack.c.l.b16 %v1011
  %v1110 = vunpack.c.l.b16 %v1012
  %v1111 = vunpack.c.l.b16 %v1013
  %v1112 = vunpack.c.l.b16 %v1014
  %v1113 = vunpack.c.l.b16 %v1015
  %v1114 = vunpack.c.l.b16 %v1016
  %v1115 = vunpack.c.l.b16 %v1017
  %v1116 = vunpack.c.l.b16 %v1018
  %v1117 = vunpack.c.l.b16 %v1019
  %v1118 = vunpack.c.l.b16 %v1020
  %v1119 = vunpack.c.l.b16 %v1021
  %v1120 = vunpack.c.l.b16 %v1022
  %v1121 = vunpack.c.l.b16 %v1023
  %v1122 = vunpack.c.l.b16 %v1024
  %v1123 = vunpack.c.l.b16 %v1025
  %v1124 = vunpack.c.l.b16 %v1026
  %v1125 = vunpack.c.l.b16 %v1027
  %v1126 = vunpack.c.l.b16 %v1028
  %v1127 = vunpack.c.l.b16 %v1029
  %v1128 = vunpack.c.l.b16 %v1030
  %v1129 = vunpack.c.l.b16 %v1031
  %v1130 = vunpack.c.l.b16 %v1032
  %v1131 = vunpack.c.l.b16 %v1033
  %v1132 = vunpack.c.l.b16 %v1034
  %v1133 = vunpack.c.l.b16 %v1035
  %v1134 = vunpack.c.l.b16 %v1036
  %v1135 = vunpack.c.l.b16 %v1037
  %v1136 = vunpack.c.l.b16 %v1038
  %v1137 = vunpack.c.l.b16 %v1039
  %v1138 = vunpack.c.l.b16 %v1040
  %v1139 = vunpack.c.l.b16 %v1041
  %v1140 = vunpack.c.l.b16 %v1042
  %v1141 = vunpack.c.l.b16 %v1043
  %v1142 = vunpack.c.l.b16 %v1044
  %v1143 = vunpack.c.l.b16 %v1045
  %v1144 = vunpack.c.l.b16 %v1046
  %v1145 = vunpack.c.l.b16 %v1047
  %v1146 = vunpack.c.l.b16 %v1048
  %v1147 = vunpack.c.l.b16 %v1049
  %v1148 = vunpack.c.l.b16 %v1050
  %v1149 = vunpack.c.l.b16 %v1051
  %v1150 = vunpack.c.l.b16 %v1052
  %v1151 = vunpack.c.l.b16 %v1053
  %v1152 = vpack.c.b16 %v1104, %v1103
  %v1153 = vpack.c.b16 %v1106, %v1105
  %v1154 = vpack.c.b16 %v1108, %v1107
  %v1155 = vpack.c.b16 %v1110, %v1109
  %v1156 = vpack.c.b16 %v1112, %v1111
  %v1157 = vpack.c.b16 %v1114, %v1113
  %v1158 = vpack.c.b16 %v1116, %v1115
  %v1159 = vpack.c.b16 %v1118, %v1117
  %v1160 = vpack.c.b16 %v1120, %v1119
  %v1161 = vpack.c.b16 %v1122, %v1121
  %v1162 = vpack.c.b16 %v1124, %v1123
  %v1163 = vpack.c.b16 %v1126, %v1125
  %v1164 = vpack.c.b16 %v1128, %v1127
  %v1165 = vpack.c.b16 %v1130, %v1129
  %v1166 = vpack.c.b16 %v1132, %v1131
  %v1167 = vpack.c.b16 %v1134, %v1133
  %v1168 = vpack.c.b16 %v1136, %v1135
  %v1169 = vpack.c.b16 %v1138, %v1137
  %v1170 = vpack.c.b16 %v1140, %v1139
  %v1171 = vpack.c.b16 %v1142, %v1141
  %v1172 = vpack.c.b16 %v1144, %v1143
  %v1173 = vpack.c.b16 %v1146, %v1145
  %v1174 = vpack.c.b16 %v1148, %v1147
  %v1175 = vpack.c.b16 %v1150, %v1149
  %v1176 = vpack.c.b16 %v1151, %v1151
  %v1178 = vsel %vm211, %v1152, 0
  %v1181 = vsel %vm211, %v1153, 0
  %v1184 = vsel %vm211, %v1154, 0
  %v1187 = vsel %vm211, %v1155, 0
  %v1190 = vsel %vm211, %v1156, 0
  %v1193 = vsel %vm211, %v1157, 0
  %v1196 = vsel %vm211, %v1158, 0
  %v1199 = vsel %vm211, %v1159, 0
  %v1202 = vsel %vm211, %v1160, 0
  %v1205 = vsel %vm211, %v1161, 0
  %v1208 = vsel %vm211, %v1162, 0
  %v1211 = vsel %vm211, %v1163, 0
  %v1214 = vsel %vm211, %v1164, 0
  %v1217 = vsel %vm211, %v1165, 0
  %v1220 = vsel %vm211, %v1166, 0
  %v1223 = vsel %vm211, %v1167, 0
  %v1226 = vsel %vm211, %v1168, 0
  %v1229 = vsel %vm211, %v1169, 0
  %v1232 = vsel %vm211, %v1170, 0
  %v1235 = vsel %vm211, %v1171, 0
  %v1238 = vsel %vm211, %v1172, 0
  %v1241 = vsel %vm211, %v1173, 0
  %v1244 = vsel %vm211, %v1174, 0
  %v1247 = vsel %vm211, %v1175, 0
  %v1250 = vsel %vm211, %v1176, 0
  %1252 = vmatprep.subr.bf16.mxu0 0
  %1253 = vmatpush1.bf16.msra.mxu0 %v208
  %1254 = vmatprep.subr.bf16.mxu0 0
  %1255 = vmatpush1.bf16.msra.mxu0 %v292
  %1256 = vmatprep.subr.bf16.mxu0 0
  %1257 = vmatpush1.bf16.msra.mxu0 0
  %1258 = vmatprep.subr.bf16.mxu0 0
  %1259 = vmatpush1.bf16.msra.mxu0 0
  %1260 = vmatprep.subr.bf16.mxu0 0
  %1261 = vmatpush1.bf16.msra.mxu0 0
  %1262 = vmatprep.subr.bf16.mxu0 0
  %1263 = vmatpush1.bf16.msra.mxu0 0
  %1264 = vmatprep.subr.bf16.mxu0 0
  %1265 = vmatpush1.bf16.msra.mxu0 0
  %1266 = vmatprep.subr.bf16.mxu0 0
  %1267 = vmatpush1.bf16.msra.mxu0 0
  %1268 = vmatprep.subr.bf16.mxu0 0
  %1269 = vmatpush1.bf16.msra.mxu0 0
  %1270 = vmatprep.subr.bf16.mxu0 0
  %1271 = vmatpush1.bf16.msra.mxu0 0
  %1272 = vmatprep.subr.bf16.mxu0 0
  %1273 = vmatpush1.bf16.msra.mxu0 0
  %1274 = vmatprep.subr.bf16.mxu0 0
  %1275 = vmatpush1.bf16.msra.mxu0 0
  %1276 = vmatprep.subr.bf16.mxu0 0
  %1277 = vmatpush1.bf16.msra.mxu0 0
  %1278 = vmatprep.subr.bf16.mxu0 0
  %1279 = vmatpush1.bf16.msra.mxu0 0
  %1280 = vmatprep.subr.bf16.mxu0 0
  %1281 = vmatpush1.bf16.msra.mxu0 0
  %1282 = vmatprep.subr.bf16.mxu0 0
  %1283 = vmatpush1.bf16.msra.mxu0 0
  %1284 = vmatprep.mubr.bf16.mxu0 0
  %1285 = vmatmul.mubr.bf16.gmra.mrb[0].mxu0 %v1178
  %v1286 = vpop.f32.mrb[0].mxu0
  %v1287 = vadd.f32 0.0, %v1286
  %v1288 = vpop.f32.mrb[0].mxu0
  %v1289 = vpop.f32.mrb[0].mxu0
  %v1290 = vadd.f32 0.0, %v1289
  %v1291 = vpop.f32.mrb[0].mxu0
  %1292 = vmatprep.mubr.bf16.mxu0 0
  %1293 = vmatmul.mubr.bf16.gmra.mrb[0].mxu0 %v1181
  %v1294 = vpop.f32.mrb[0].mxu0
  %v1295 = vadd.f32 0.0, %v1294
  %v1296 = vpop.f32.mrb[0].mxu0
  %v1297 = vpop.f32.mrb[0].mxu0
  %v1298 = vadd.f32 0.0, %v1297
  %v1299 = vpop.f32.mrb[0].mxu0
  %1300 = vmatprep.mubr.bf16.mxu0 0
  %1301 = vmatmul.mubr.bf16.gmra.mrb[0].mxu0 %v1184
  %v1302 = vpop.f32.mrb[0].mxu0
  %v1303 = vadd.f32 0.0, %v1302
  %v1304 = vpop.f32.mrb[0].mxu0
  %v1305 = vpop.f32.mrb[0].mxu0
  %v1306 = vadd.f32 0.0, %v1305
  %v1307 = vpop.f32.mrb[0].mxu0
  %1308 = vmatprep.mubr.bf16.mxu0 0
  %1309 = vmatmul.mubr.bf16.gmra.mrb[0].mxu0 %v1187
  %v1310 = vpop.f32.mrb[0].mxu0
  %v1311 = vadd.f32 0.0, %v1310
  %v1312 = vpop.f32.mrb[0].mxu0
  %v1313 = vpop.f32.mrb[0].mxu0
  %v1314 = vadd.f32 0.0, %v1313
  %v1315 = vpop.f32.mrb[0].mxu0
  %1316 = vmatprep.mubr.bf16.mxu0 0
  %1317 = vmatmul.mubr.bf16.gmra.mrb[0].mxu0 %v1190
  %v1318 = vpop.f32.mrb[0].mxu0
  %v1319 = vadd.f32 0.0, %v1318
  %v1320 = vpop.f32.mrb[0].mxu0
  %v1321 = vpop.f32.mrb[0].mxu0
  %v1322 = vadd.f32 0.0, %v1321
  %v1323 = vpop.f32.mrb[0].mxu0
  %1324 = vmatprep.mubr.bf16.mxu0 0
  %1325 = vmatmul.mubr.bf16.gmra.mrb[0].mxu0 %v1193
  %v1326 = vpop.f32.mrb[0].mxu0
  %v1327 = vadd.f32 0.0, %v1326
  %v1328 = vpop.f32.mrb[0].mxu0
  %v1329 = vpop.f32.mrb[0].mxu0
  %v1330 = vadd.f32 0.0, %v1329
  %v1331 = vpop.f32.mrb[0].mxu0
  %1332 = vmatprep.mubr.bf16.mxu0 0
  %1333 = vmatmul.mubr.bf16.gmra.mrb[0].mxu0 %v1196
  %v1334 = vpop.f32.mrb[0].mxu0
  %v1335 = vadd.f32 0.0, %v1334
  %v1336 = vpop.f32.mrb[0].mxu0
  %v1337 = vpop.f32.mrb[0].mxu0
  %v1338 = vadd.f32 0.0, %v1337
  %v1339 = vpop.f32.mrb[0].mxu0
  %1340 = vmatprep.mubr.bf16.mxu0 0
  %1341 = vmatmul.mubr.bf16.gmra.mrb[0].mxu0 %v1199
  %v1342 = vpop.f32.mrb[0].mxu0
  %v1343 = vadd.f32 0.0, %v1342
  %v1344 = vpop.f32.mrb[0].mxu0
  %v1345 = vpop.f32.mrb[0].mxu0
  %v1346 = vadd.f32 0.0, %v1345
  %v1347 = vpop.f32.mrb[0].mxu0
  %1348 = vmatprep.mubr.bf16.mxu0 0
  %1349 = vmatmul.mubr.bf16.gmra.mrb[0].mxu0 %v1202
  %v1350 = vpop.f32.mrb[0].mxu0
  %v1351 = vadd.f32 0.0, %v1350
  %v1352 = vpop.f32.mrb[0].mxu0
  %v1353 = vpop.f32.mrb[0].mxu0
  %v1354 = vadd.f32 0.0, %v1353
  %v1355 = vpop.f32.mrb[0].mxu0
  %1356 = vmatprep.mubr.bf16.mxu0 0
  %1357 = vmatmul.mubr.bf16.gmra.mrb[0].mxu0 %v1205
  %v1358 = vpop.f32.mrb[0].mxu0
  %v1359 = vadd.f32 0.0, %v1358
  %v1360 = vpop.f32.mrb[0].mxu0
  %v1361 = vpop.f32.mrb[0].mxu0
  %v1362 = vadd.f32 0.0, %v1361
  %v1363 = vpop.f32.mrb[0].mxu0
  %1364 = vmatprep.mubr.bf16.mxu0 0
  %1365 = vmatmul.mubr.bf16.gmra.mrb[0].mxu0 %v1208
  %v1366 = vpop.f32.mrb[0].mxu0
  %v1367 = vadd.f32 0.0, %v1366
  %v1368 = vpop.f32.mrb[0].mxu0
  %v1369 = vpop.f32.mrb[0].mxu0
  %v1370 = vadd.f32 0.0, %v1369
  %v1371 = vpop.f32.mrb[0].mxu0
  %1372 = vmatprep.mubr.bf16.mxu0 0
  %1373 = vmatmul.mubr.bf16.gmra.mrb[0].mxu0 %v1211
  %v1374 = vpop.f32.mrb[0].mxu0
  %v1375 = vadd.f32 0.0, %v1374
  %v1376 = vpop.f32.mrb[0].mxu0
  %v1377 = vpop.f32.mrb[0].mxu0
  %v1378 = vadd.f32 0.0, %v1377
  %v1379 = vpop.f32.mrb[0].mxu0
  %1380 = vmatprep.mubr.bf16.mxu0 0
  %1381 = vmatmul.mubr.bf16.gmra.mrb[0].mxu0 %v1214
  %v1382 = vpop.f32.mrb[0].mxu0
  %v1383 = vadd.f32 0.0, %v1382
  %v1384 = vpop.f32.mrb[0].mxu0
  %v1385 = vpop.f32.mrb[0].mxu0
  %v1386 = vadd.f32 0.0, %v1385
  %v1387 = vpop.f32.mrb[0].mxu0
  %1388 = vmatprep.mubr.bf16.mxu0 0
  %1389 = vmatmul.mubr.bf16.gmra.mrb[0].mxu0 %v1217
  %v1390 = vpop.f32.mrb[0].mxu0
  %v1391 = vadd.f32 0.0, %v1390
  %v1392 = vpop.f32.mrb[0].mxu0
  %v1393 = vpop.f32.mrb[0].mxu0
  %v1394 = vadd.f32 0.0, %v1393
  %v1395 = vpop.f32.mrb[0].mxu0
  %1396 = vmatprep.mubr.bf16.mxu0 0
  %1397 = vmatmul.mubr.bf16.gmra.mrb[0].mxu0 %v1220
  %v1398 = vpop.f32.mrb[0].mxu0
  %v1399 = vadd.f32 0.0, %v1398
  %v1400 = vpop.f32.mrb[0].mxu0
  %v1401 = vpop.f32.mrb[0].mxu0
  %v1402 = vadd.f32 0.0, %v1401
  %v1403 = vpop.f32.mrb[0].mxu0
  %1404 = vmatprep.mubr.bf16.mxu0 0
  %1405 = vmatmul.mubr.bf16.gmra.mrb[0].mxu0 %v1223
  %v1406 = vpop.f32.mrb[0].mxu0
  %v1407 = vadd.f32 0.0, %v1406
  %v1408 = vpop.f32.mrb[0].mxu0
  %v1409 = vpop.f32.mrb[0].mxu0
  %v1410 = vadd.f32 0.0, %v1409
  %v1411 = vpop.f32.mrb[0].mxu0
  %1412 = vmatprep.mubr.bf16.mxu0 0
  %1413 = vmatmul.mubr.bf16.gmra.mrb[0].mxu0 %v1226
  %v1414 = vpop.f32.mrb[0].mxu0
  %v1415 = vadd.f32 0.0, %v1414
  %v1416 = vpop.f32.mrb[0].mxu0
  %v1417 = vpop.f32.mrb[0].mxu0
  %v1418 = vadd.f32 0.0, %v1417
  %v1419 = vpop.f32.mrb[0].mxu0
  %1420 = vmatprep.mubr.bf16.mxu0 0
  %1421 = vmatmul.mubr.bf16.gmra.mrb[0].mxu0 %v1229
  %v1422 = vpop.f32.mrb[0].mxu0
  %v1423 = vadd.f32 0.0, %v1422
  %v1424 = vpop.f32.mrb[0].mxu0
  %v1425 = vpop.f32.mrb[0].mxu0
  %v1426 = vadd.f32 0.0, %v1425
  %v1427 = vpop.f32.mrb[0].mxu0
  %1428 = vmatprep.mubr.bf16.mxu0 0
  %1429 = vmatmul.mubr.bf16.gmra.mrb[0].mxu0 %v1232
  %v1430 = vpop.f32.mrb[0].mxu0
  %v1431 = vadd.f32 0.0, %v1430
  %v1432 = vpop.f32.mrb[0].mxu0
  %v1433 = vpop.f32.mrb[0].mxu0
  %v1434 = vadd.f32 0.0, %v1433
  %v1435 = vpop.f32.mrb[0].mxu0
  %1436 = vmatprep.mubr.bf16.mxu0 0
  %1437 = vmatmul.mubr.bf16.gmra.mrb[0].mxu0 %v1235
  %v1438 = vpop.f32.mrb[0].mxu0
  %v1439 = vadd.f32 0.0, %v1438
  %v1440 = vpop.f32.mrb[0].mxu0
  %v1441 = vpop.f32.mrb[0].mxu0
  %v1442 = vadd.f32 0.0, %v1441
  %v1443 = vpop.f32.mrb[0].mxu0
  %1444 = vmatprep.mubr.bf16.mxu0 0
  %1445 = vmatmul.mubr.bf16.gmra.mrb[0].mxu0 %v1238
  %v1446 = vpop.f32.mrb[0].mxu0
  %v1447 = vadd.f32 0.0, %v1446
  %v1448 = vpop.f32.mrb[0].mxu0
  %v1449 = vpop.f32.mrb[0].mxu0
  %v1450 = vadd.f32 0.0, %v1449
  %v1451 = vpop.f32.mrb[0].mxu0
  %1452 = vmatprep.mubr.bf16.mxu0 0
  %1453 = vmatmul.mubr.bf16.gmra.mrb[0].mxu0 %v1241
  %v1454 = vpop.f32.mrb[0].mxu0
  %v1455 = vadd.f32 0.0, %v1454
  %v1456 = vpop.f32.mrb[0].mxu0
  %v1457 = vpop.f32.mrb[0].mxu0
  %v1458 = vadd.f32 0.0, %v1457
  %v1459 = vpop.f32.mrb[0].mxu0
  %1460 = vmatprep.mubr.bf16.mxu0 0
  %1461 = vmatmul.mubr.bf16.gmra.mrb[0].mxu0 %v1244
  %v1462 = vpop.f32.mrb[0].mxu0
  %v1463 = vadd.f32 0.0, %v1462
  %v1464 = vpop.f32.mrb[0].mxu0
  %v1465 = vpop.f32.mrb[0].mxu0
  %v1466 = vadd.f32 0.0, %v1465
  %v1467 = vpop.f32.mrb[0].mxu0
  %1468 = vmatprep.mubr.bf16.mxu0 0
  %1469 = vmatmul.mubr.bf16.gmra.mrb[0].mxu0 %v1247
  %v1470 = vpop.f32.mrb[0].mxu0
  %v1471 = vadd.f32 0.0, %v1470
  %v1472 = vpop.f32.mrb[0].mxu0
  %v1473 = vpop.f32.mrb[0].mxu0
  %v1474 = vadd.f32 0.0, %v1473
  %v1475 = vpop.f32.mrb[0].mxu0
  %1476 = vmatprep.mubr.bf16.mxu0 0
  %1477 = vmatmul.mubr.bf16.gmra.mrb[0].mxu0 %v1250
  %v1478 = vpop.f32.mrb[0].mxu0
  %v1479 = vadd.f32 0.0, %v1478
  %v1480 = vpop.f32.mrb[0].mxu0
  %v1481 = vpop.f32.mrb[0].mxu0
  %v1482 = vpop.f32.mrb[0].mxu0
  %1483 = vdwg.mxu0
  %v1484 = vld [vmem:[%s3] sm:$0xf]
  %v1485 = vld [vmem:[%s3 + $0x4] sm:$0xf]
  %v1486 = vld [vmem:[%s3 + $0x8] sm:$0xf]
  %v1487 = vld [vmem:[%s3 + $0xc] sm:$0xf]
  %v1488 = vld [vmem:[%s3 + $0x10] sm:$0xf]
  %v1489 = vld [vmem:[%s3 + $0x14] sm:$0xf]
  %v1490 = vld [vmem:[%s3 + $0x18] sm:$0xf]
  %v1491 = vld [vmem:[%s3 + $0x1c] sm:$0xf]
  %v1492 = vld [vmem:[%s3 + $0x20] sm:$0xf]
  %v1493 = vld [vmem:[%s3 + $0x24] sm:$0xf]
  %v1494 = vld [vmem:[%s3 + $0x28] sm:$0xf]
  %v1495 = vld [vmem:[%s3 + $0x2c] sm:$0xf]
  %v1496 = vld [vmem:[%s3 + $0x30] sm:$0xf]
  %v1497 = vld [vmem:[%s3 + $0x34] sm:$0xf]
  %v1498 = vld [vmem:[%s3 + $0x38] sm:$0xf]
  %v1499 = vld [vmem:[%s3 + $0x3c] sm:$0xf]
  %v1500 = vld [vmem:[%s3 + $0x40] sm:$0xf]
  %v1501 = vld [vmem:[%s3 + $0x44] sm:$0xf]
  %v1502 = vld [vmem:[%s3 + $0x48] sm:$0xf]
  %v1503 = vld [vmem:[%s3 + $0x4c] sm:$0xf]
  %v1504 = vld [vmem:[%s3 + $0x50] sm:$0xf]
  %v1505 = vld [vmem:[%s3 + $0x54] sm:$0xf]
  %v1506 = vld [vmem:[%s3 + $0x58] sm:$0xf]
  %v1507 = vld [vmem:[%s3 + $0x5c] sm:$0xf]
  %v1508 = vld [vmem:[%s3 + $0x60] sm:$0xf]
  %v1509 = vld [vmem:[%s3 + $0x64] sm:$0xf]
  %v1510 = vld [vmem:[%s3 + $0x68] sm:$0xf]
  %v1511 = vld [vmem:[%s3 + $0x6c] sm:$0xf]
  %v1512 = vld [vmem:[%s3 + $0x70] sm:$0xf]
  %v1513 = vld [vmem:[%s3 + $0x74] sm:$0xf]
  %v1514 = vld [vmem:[%s3 + $0x78] sm:$0xf]
  %v1515 = vld [vmem:[%s3 + $0x7c] sm:$0xf]
  %v1516 = vld [vmem:[%s3 + $0x80] sm:$0xf]
  %v1517 = vld [vmem:[%s3 + $0x84] sm:$0xf]
  %v1518 = vld [vmem:[%s3 + $0x88] sm:$0xf]
  %v1519 = vld [vmem:[%s3 + $0x8c] sm:$0xf]
  %v1520 = vld [vmem:[%s3 + $0x90] sm:$0xf]
  %v1521 = vld [vmem:[%s3 + $0x94] sm:$0xf]
  %v1522 = vld [vmem:[%s3 + $0x98] sm:$0xf]
  %v1523 = vld [vmem:[%s3 + $0x9c] sm:$0xf]
  %v1524 = vld [vmem:[%s3 + $0xa0] sm:$0xf]
  %v1525 = vld [vmem:[%s3 + $0xa4] sm:$0xf]
  %v1526 = vld [vmem:[%s3 + $0xa8] sm:$0xf]
  %v1527 = vld [vmem:[%s3 + $0xac] sm:$0xf]
  %v1528 = vld [vmem:[%s3 + $0xb0] sm:$0xf]
  %v1529 = vld [vmem:[%s3 + $0xb4] sm:$0xf]
  %v1530 = vld [vmem:[%s3 + $0xb8] sm:$0xf]
  %v1531 = vld [vmem:[%s3 + $0xbc] sm:$0xf]
  %v1532 = vld [vmem:[%s3 + $0xc0] sm:$0xf]
  %v1582 = vunpack.c.l.b16 %v1484
  %v1583 = vunpack.c.l.b16 %v1485
  %v1584 = vunpack.c.l.b16 %v1486
  %v1585 = vunpack.c.l.b16 %v1487
  %v1586 = vunpack.c.l.b16 %v1488
  %v1587 = vunpack.c.l.b16 %v1489
  %v1588 = vunpack.c.l.b16 %v1490
  %v1589 = vunpack.c.l.b16 %v1491
  %v1590 = vunpack.c.l.b16 %v1492
  %v1591 = vunpack.c.l.b16 %v1493
  %v1592 = vunpack.c.l.b16 %v1494
  %v1593 = vunpack.c.l.b16 %v1495
  %v1594 = vunpack.c.l.b16 %v1496
  %v1595 = vunpack.c.l.b16 %v1497
  %v1596 = vunpack.c.l.b16 %v1498
  %v1597 = vunpack.c.l.b16 %v1499
  %v1598 = vunpack.c.l.b16 %v1500
  %v1599 = vunpack.c.l.b16 %v1501
  %v1600 = vunpack.c.l.b16 %v1502
  %v1601 = vunpack.c.l.b16 %v1503
  %v1602 = vunpack.c.l.b16 %v1504
  %v1603 = vunpack.c.l.b16 %v1505
  %v1604 = vunpack.c.l.b16 %v1506
  %v1605 = vunpack.c.l.b16 %v1507
  %v1606 = vunpack.c.l.b16 %v1508
  %v1607 = vunpack.c.l.b16 %v1509
  %v1608 = vunpack.c.l.b16 %v1510
  %v1609 = vunpack.c.l.b16 %v1511
  %v1610 = vunpack.c.l.b16 %v1512
  %v1611 = vunpack.c.l.b16 %v1513
  %v1612 = vunpack.c.l.b16 %v1514
  %v1613 = vunpack.c.l.b16 %v1515
  %v1614 = vunpack.c.l.b16 %v1516
  %v1615 = vunpack.c.l.b16 %v1517
  %v1616 = vunpack.c.l.b16 %v1518
  %v1617 = vunpack.c.l.b16 %v1519
  %v1618 = vunpack.c.l.b16 %v1520
  %v1619 = vunpack.c.l.b16 %v1521
  %v1620 = vunpack.c.l.b16 %v1522
  %v1621 = vunpack.c.l.b16 %v1523
  %v1622 = vunpack.c.l.b16 %v1524
  %v1623 = vunpack.c.l.b16 %v1525
  %v1624 = vunpack.c.l.b16 %v1526
  %v1625 = vunpack.c.l.b16 %v1527
  %v1626 = vunpack.c.l.b16 %v1528
  %v1627 = vunpack.c.l.b16 %v1529
  %v1628 = vunpack.c.l.b16 %v1530
  %v1629 = vunpack.c.l.b16 %v1531
  %v1630 = vunpack.c.l.b16 %v1532
  %v1631 = vpack.c.b16 %v1583, %v1582
  %v1632 = vpack.c.b16 %v1585, %v1584
  %v1633 = vpack.c.b16 %v1587, %v1586
  %v1634 = vpack.c.b16 %v1589, %v1588
  %v1635 = vpack.c.b16 %v1591, %v1590
  %v1636 = vpack.c.b16 %v1593, %v1592
  %v1637 = vpack.c.b16 %v1595, %v1594
  %v1638 = vpack.c.b16 %v1597, %v1596
  %v1639 = vpack.c.b16 %v1599, %v1598
  %v1640 = vpack.c.b16 %v1601, %v1600
  %v1641 = vpack.c.b16 %v1603, %v1602
  %v1642 = vpack.c.b16 %v1605, %v1604
  %v1643 = vpack.c.b16 %v1607, %v1606
  %v1644 = vpack.c.b16 %v1609, %v1608
  %v1645 = vpack.c.b16 %v1611, %v1610
  %v1646 = vpack.c.b16 %v1613, %v1612
  %v1647 = vpack.c.b16 %v1615, %v1614
  %v1648 = vpack.c.b16 %v1617, %v1616
  %v1649 = vpack.c.b16 %v1619, %v1618
  %v1650 = vpack.c.b16 %v1621, %v1620
  %v1651 = vpack.c.b16 %v1623, %v1622
  %v1652 = vpack.c.b16 %v1625, %v1624
  %v1653 = vpack.c.b16 %v1627, %v1626
  %v1654 = vpack.c.b16 %v1629, %v1628
  %v1655 = vpack.c.b16 %v1630, %v1630
  %v1657 = vsel %vm211, %v1631, 0
  %v1660 = vsel %vm211, %v1632, 0
  %v1663 = vsel %vm211, %v1633, 0
  %v1666 = vsel %vm211, %v1634, 0
  %v1669 = vsel %vm211, %v1635, 0
  %v1672 = vsel %vm211, %v1636, 0
  %v1675 = vsel %vm211, %v1637, 0
  %v1678 = vsel %vm211, %v1638, 0
  %v1681 = vsel %vm211, %v1639, 0
  %v1684 = vsel %vm211, %v1640, 0
  %v1687 = vsel %vm211, %v1641, 0
  %v1690 = vsel %vm211, %v1642, 0
  %v1693 = vsel %vm211, %v1643, 0
  %v1696 = vsel %vm211, %v1644, 0
  %v1699 = vsel %vm211, %v1645, 0
  %v1702 = vsel %vm211, %v1646, 0
  %v1705 = vsel %vm211, %v1647, 0
  %v1708 = vsel %vm211, %v1648, 0
  %v1711 = vsel %vm211, %v1649, 0
  %v1714 = vsel %vm211, %v1650, 0
  %v1717 = vsel %vm211, %v1651, 0
  %v1720 = vsel %vm211, %v1652, 0
  %v1723 = vsel %vm211, %v1653, 0
  %v1726 = vsel %vm211, %v1654, 0
  %v1729 = vsel %vm211, %v1655, 0
  %1731 = vmatprep.subr.bf16.mxu0 0
  %1732 = vmatpush1.bf16.msra.mxu0 %v208
  %1733 = vmatprep.subr.bf16.mxu0 0
  %1734 = vmatpush1.bf16.msra.mxu0 %v292
  %1735 = vmatprep.subr.bf16.mxu0 0
  %1736 = vmatpush1.bf16.msra.mxu0 0
  %1737 = vmatprep.subr.bf16.mxu0 0
  %1738 = vmatpush1.bf16.msra.mxu0 0
  %1739 = vmatprep.subr.bf16.mxu0 0
  %1740 = vmatpush1.bf16.msra.mxu0 0
  %1741 = vmatprep.subr.bf16.mxu0 0
  %1742 = vmatpush1.bf16.msra.mxu0 0
  %1743 = vmatprep.subr.bf16.mxu0 0
  %1744 = vmatpush1.bf16.msra.mxu0 0
  %1745 = vmatprep.subr.bf16.mxu0 0
  %1746 = vmatpush1.bf16.msra.mxu0 0
  %1747 = vmatprep.subr.bf16.mxu0 0
  %1748 = vmatpush1.bf16.msra.mxu0 0
  %1749 = vmatprep.subr.bf16.mxu0 0
  %1750 = vmatpush1.bf16.msra.mxu0 0
  %1751 = vmatprep.subr.bf16.mxu0 0
  %1752 = vmatpush1.bf16.msra.mxu0 0
  %1753 = vmatprep.subr.bf16.mxu0 0
  %1754 = vmatpush1.bf16.msra.mxu0 0
  %1755 = vmatprep.subr.bf16.mxu0 0
  %1756 = vmatpush1.bf16.msra.mxu0 0
  %1757 = vmatprep.subr.bf16.mxu0 0
  %1758 = vmatpush1.bf16.msra.mxu0 0
  %1759 = vmatprep.subr.bf16.mxu0 0
  %1760 = vmatpush1.bf16.msra.mxu0 0
  %1761 = vmatprep.subr.bf16.mxu0 0
  %1762 = vmatpush1.bf16.msra.mxu0 0
  %1763 = vmatprep.mubr.bf16.mxu0 0
  %1764 = vmatmul.mubr.bf16.gmra.mrb[0].mxu0 %v1657
  %v1765 = vpop.f32.mrb[0].mxu0
  %v1766 = vadd.f32 0.0, %v1765
  %v1767 = vpop.f32.mrb[0].mxu0
  %v1768 = vpop.f32.mrb[0].mxu0
  %v1769 = vadd.f32 0.0, %v1768
  %v1770 = vpop.f32.mrb[0].mxu0
  %1771 = vmatprep.mubr.bf16.mxu0 0
  %1772 = vmatmul.mubr.bf16.gmra.mrb[0].mxu0 %v1660
  %v1773 = vpop.f32.mrb[0].mxu0
  %v1774 = vadd.f32 0.0, %v1773
  %v1775 = vpop.f32.mrb[0].mxu0
  %v1776 = vpop.f32.mrb[0].mxu0
  %v1777 = vadd.f32 0.0, %v1776
  %v1778 = vpop.f32.mrb[0].mxu0
  %1779 = vmatprep.mubr.bf16.mxu0 0
  %1780 = vmatmul.mubr.bf16.gmra.mrb[0].mxu0 %v1663
  %v1781 = vpop.f32.mrb[0].mxu0
  %v1782 = vadd.f32 0.0, %v1781
  %v1783 = vpop.f32.mrb[0].mxu0
  %v1784 = vpop.f32.mrb[0].mxu0
  %v1785 = vadd.f32 0.0, %v1784
  %v1786 = vpop.f32.mrb[0].mxu0
  %1787 = vmatprep.mubr.bf16.mxu0 0
  %1788 = vmatmul.mubr.bf16.gmra.mrb[0].mxu0 %v1666
  %v1789 = vpop.f32.mrb[0].mxu0
  %v1790 = vadd.f32 0.0, %v1789
  %v1791 = vpop.f32.mrb[0].mxu0
  %v1792 = vpop.f32.mrb[0].mxu0
  %v1793 = vadd.f32 0.0, %v1792
  %v1794 = vpop.f32.mrb[0].mxu0
  %1795 = vmatprep.mubr.bf16.mxu0 0
  %1796 = vmatmul.mubr.bf16.gmra.mrb[0].mxu0 %v1669
  %v1797 = vpop.f32.mrb[0].mxu0
  %v1798 = vadd.f32 0.0, %v1797
  %v1799 = vpop.f32.mrb[0].mxu0
  %v1800 = vpop.f32.mrb[0].mxu0
  %v1801 = vadd.f32 0.0, %v1800
  %v1802 = vpop.f32.mrb[0].mxu0
  %1803 = vmatprep.mubr.bf16.mxu0 0
  %1804 = vmatmul.mubr.bf16.gmra.mrb[0].mxu0 %v1672
  %v1805 = vpop.f32.mrb[0].mxu0
  %v1806 = vadd.f32 0.0, %v1805
  %v1807 = vpop.f32.mrb[0].mxu0
  %v1808 = vpop.f32.mrb[0].mxu0
  %v1809 = vadd.f32 0.0, %v1808
  %v1810 = vpop.f32.mrb[0].mxu0
  %1811 = vmatprep.mubr.bf16.mxu0 0
  %1812 = vmatmul.mubr.bf16.gmra.mrb[0].mxu0 %v1675
  %v1813 = vpop.f32.mrb[0].mxu0
  %v1814 = vadd.f32 0.0, %v1813
  %v1815 = vpop.f32.mrb[0].mxu0
  %v1816 = vpop.f32.mrb[0].mxu0
  %v1817 = vadd.f32 0.0, %v1816
  %v1818 = vpop.f32.mrb[0].mxu0
  %1819 = vmatprep.mubr.bf16.mxu0 0
  %1820 = vmatmul.mubr.bf16.gmra.mrb[0].mxu0 %v1678
  %v1821 = vpop.f32.mrb[0].mxu0
  %v1822 = vadd.f32 0.0, %v1821
  %v1823 = vpop.f32.mrb[0].mxu0
  %v1824 = vpop.f32.mrb[0].mxu0
  %v1825 = vadd.f32 0.0, %v1824
  %v1826 = vpop.f32.mrb[0].mxu0
  %1827 = vmatprep.mubr.bf16.mxu0 0
  %1828 = vmatmul.mubr.bf16.gmra.mrb[0].mxu0 %v1681
  %v1829 = vpop.f32.mrb[0].mxu0
  %v1830 = vadd.f32 0.0, %v1829
  %v1831 = vpop.f32.mrb[0].mxu0
  %v1832 = vpop.f32.mrb[0].mxu0
  %v1833 = vadd.f32 0.0, %v1832
  %v1834 = vpop.f32.mrb[0].mxu0
  %1835 = vmatprep.mubr.bf16.mxu0 0
  %1836 = vmatmul.mubr.bf16.gmra.mrb[0].mxu0 %v1684
  %v1837 = vpop.f32.mrb[0].mxu0
  %v1838 = vadd.f32 0.0, %v1837
  %v1839 = vpop.f32.mrb[0].mxu0
  %v1840 = vpop.f32.mrb[0].mxu0
  %v1841 = vadd.f32 0.0, %v1840
  %v1842 = vpop.f32.mrb[0].mxu0
  %1843 = vmatprep.mubr.bf16.mxu0 0
  %1844 = vmatmul.mubr.bf16.gmra.mrb[0].mxu0 %v1687
  %v1845 = vpop.f32.mrb[0].mxu0
  %v1846 = vadd.f32 0.0, %v1845
  %v1847 = vpop.f32.mrb[0].mxu0
  %v1848 = vpop.f32.mrb[0].mxu0
  %v1849 = vadd.f32 0.0, %v1848
  %v1850 = vpop.f32.mrb[0].mxu0
  %1851 = vmatprep.mubr.bf16.mxu0 0
  %1852 = vmatmul.mubr.bf16.gmra.mrb[0].mxu0 %v1690
  %v1853 = vpop.f32.mrb[0].mxu0
  %v1854 = vadd.f32 0.0, %v1853
  %v1855 = vpop.f32.mrb[0].mxu0
  %v1856 = vpop.f32.mrb[0].mxu0
  %v1857 = vadd.f32 0.0, %v1856
  %v1858 = vpop.f32.mrb[0].mxu0
  %1859 = vmatprep.mubr.bf16.mxu0 0
  %1860 = vmatmul.mubr.bf16.gmra.mrb[0].mxu0 %v1693
  %v1861 = vpop.f32.mrb[0].mxu0
  %v1862 = vadd.f32 0.0, %v1861
  %v1863 = vpop.f32.mrb[0].mxu0
  %v1864 = vpop.f32.mrb[0].mxu0
  %v1865 = vadd.f32 0.0, %v1864
  %v1866 = vpop.f32.mrb[0].mxu0
  %1867 = vmatprep.mubr.bf16.mxu0 0
  %1868 = vmatmul.mubr.bf16.gmra.mrb[0].mxu0 %v1696
  %v1869 = vpop.f32.mrb[0].mxu0
  %v1870 = vadd.f32 0.0, %v1869
  %v1871 = vpop.f32.mrb[0].mxu0
  %v1872 = vpop.f32.mrb[0].mxu0
  %v1873 = vadd.f32 0.0, %v1872
  %v1874 = vpop.f32.mrb[0].mxu0
  %1875 = vmatprep.mubr.bf16.mxu0 0
  %1876 = vmatmul.mubr.bf16.gmra.mrb[0].mxu0 %v1699
  %v1877 = vpop.f32.mrb[0].mxu0
  %v1878 = vadd.f32 0.0, %v1877
  %v1879 = vpop.f32.mrb[0].mxu0
  %v1880 = vpop.f32.mrb[0].mxu0
  %v1881 = vadd.f32 0.0, %v1880
  %v1882 = vpop.f32.mrb[0].mxu0
  %1883 = vmatprep.mubr.bf16.mxu0 0
  %1884 = vmatmul.mubr.bf16.gmra.mrb[0].mxu0 %v1702
  %v1885 = vpop.f32.mrb[0].mxu0
  %v1886 = vadd.f32 0.0, %v1885
  %v1887 = vpop.f32.mrb[0].mxu0
  %v1888 = vpop.f32.mrb[0].mxu0
  %v1889 = vadd.f32 0.0, %v1888
  %v1890 = vpop.f32.mrb[0].mxu0
  %1891 = vmatprep.mubr.bf16.mxu0 0
  %1892 = vmatmul.mubr.bf16.gmra.mrb[0].mxu0 %v1705
  %v1893 = vpop.f32.mrb[0].mxu0
  %v1894 = vadd.f32 0.0, %v1893
  %v1895 = vpop.f32.mrb[0].mxu0
  %v1896 = vpop.f32.mrb[0].mxu0
  %v1897 = vadd.f32 0.0, %v1896
  %v1898 = vpop.f32.mrb[0].mxu0
  %1899 = vmatprep.mubr.bf16.mxu0 0
  %1900 = vmatmul.mubr.bf16.gmra.mrb[0].mxu0 %v1708
  %v1901 = vpop.f32.mrb[0].mxu0
  %v1902 = vadd.f32 0.0, %v1901
  %v1903 = vpop.f32.mrb[0].mxu0
  %v1904 = vpop.f32.mrb[0].mxu0
  %v1905 = vadd.f32 0.0, %v1904
  %v1906 = vpop.f32.mrb[0].mxu0
  %1907 = vmatprep.mubr.bf16.mxu0 0
  %1908 = vmatmul.mubr.bf16.gmra.mrb[0].mxu0 %v1711
  %v1909 = vpop.f32.mrb[0].mxu0
  %v1910 = vadd.f32 0.0, %v1909
  %v1911 = vpop.f32.mrb[0].mxu0
  %v1912 = vpop.f32.mrb[0].mxu0
  %v1913 = vadd.f32 0.0, %v1912
  %v1914 = vpop.f32.mrb[0].mxu0
  %1915 = vmatprep.mubr.bf16.mxu0 0
  %1916 = vmatmul.mubr.bf16.gmra.mrb[0].mxu0 %v1714
  %v1917 = vpop.f32.mrb[0].mxu0
  %v1918 = vadd.f32 0.0, %v1917
  %v1919 = vpop.f32.mrb[0].mxu0
  %v1920 = vpop.f32.mrb[0].mxu0
  %v1921 = vadd.f32 0.0, %v1920
  %v1922 = vpop.f32.mrb[0].mxu0
  %1923 = vmatprep.mubr.bf16.mxu0 0
  %1924 = vmatmul.mubr.bf16.gmra.mrb[0].mxu0 %v1717
  %v1925 = vpop.f32.mrb[0].mxu0
  %v1926 = vadd.f32 0.0, %v1925
  %v1927 = vpop.f32.mrb[0].mxu0
  %v1928 = vpop.f32.mrb[0].mxu0
  %v1929 = vadd.f32 0.0, %v1928
  %v1930 = vpop.f32.mrb[0].mxu0
  %1931 = vmatprep.mubr.bf16.mxu0 0
  %1932 = vmatmul.mubr.bf16.gmra.mrb[0].mxu0 %v1720
  %v1933 = vpop.f32.mrb[0].mxu0
  %v1934 = vadd.f32 0.0, %v1933
  %v1935 = vpop.f32.mrb[0].mxu0
  %v1936 = vpop.f32.mrb[0].mxu0
  %v1937 = vadd.f32 0.0, %v1936
  %v1938 = vpop.f32.mrb[0].mxu0
  %1939 = vmatprep.mubr.bf16.mxu0 0
  %1940 = vmatmul.mubr.bf16.gmra.mrb[0].mxu0 %v1723
  %v1941 = vpop.f32.mrb[0].mxu0
  %v1942 = vadd.f32 0.0, %v1941
  %v1943 = vpop.f32.mrb[0].mxu0
  %v1944 = vpop.f32.mrb[0].mxu0
  %v1945 = vadd.f32 0.0, %v1944
  %v1946 = vpop.f32.mrb[0].mxu0
  %1947 = vmatprep.mubr.bf16.mxu0 0
  %1948 = vmatmul.mubr.bf16.gmra.mrb[0].mxu0 %v1726
  %v1949 = vpop.f32.mrb[0].mxu0
  %v1950 = vadd.f32 0.0, %v1949
  %v1951 = vpop.f32.mrb[0].mxu0
  %v1952 = vpop.f32.mrb[0].mxu0
  %v1953 = vadd.f32 0.0, %v1952
  %v1954 = vpop.f32.mrb[0].mxu0
  %1955 = vmatprep.mubr.bf16.mxu0 0
  %1956 = vmatmul.mubr.bf16.gmra.mrb[0].mxu0 %v1729
  %v1957 = vpop.f32.mrb[0].mxu0
  %v1958 = vadd.f32 0.0, %v1957
  %v1959 = vpop.f32.mrb[0].mxu0
  %v1960 = vpop.f32.mrb[0].mxu0
  %v1961 = vpop.f32.mrb[0].mxu0
  %1962 = vdwg.mxu0
  %v1963 = vmax.f32 %v329, %v808
  %v1964 = vmax.f32 %v332, %v811
  %v1965 = vmax.f32 %v337, %v816
  %v1966 = vmax.f32 %v340, %v819
  %v1967 = vmax.f32 %v345, %v824
  %v1968 = vmax.f32 %v348, %v827
  %v1969 = vmax.f32 %v353, %v832
  %v1970 = vmax.f32 %v356, %v835
  %v1971 = vmax.f32 %v361, %v840
  %v1972 = vmax.f32 %v364, %v843
  %v1973 = vmax.f32 %v369, %v848
  %v1974 = vmax.f32 %v372, %v851
  %v1975 = vmax.f32 %v377, %v856
  %v1976 = vmax.f32 %v380, %v859
  %v1977 = vmax.f32 %v385, %v864
  %v1978 = vmax.f32 %v388, %v867
  %v1979 = vmax.f32 %v393, %v872
  %v1980 = vmax.f32 %v396, %v875
  %v1981 = vmax.f32 %v401, %v880
  %v1982 = vmax.f32 %v404, %v883
  %v1983 = vmax.f32 %v409, %v888
  %v1984 = vmax.f32 %v412, %v891
  %v1985 = vmax.f32 %v417, %v896
  %v1986 = vmax.f32 %v420, %v899
  %v1987 = vmax.f32 %v425, %v904
  %v1988 = vmax.f32 %v428, %v907
  %v1989 = vmax.f32 %v433, %v912
  %v1990 = vmax.f32 %v436, %v915
  %v1991 = vmax.f32 %v441, %v920
  %v1992 = vmax.f32 %v444, %v923
  %v1993 = vmax.f32 %v449, %v928
  %v1994 = vmax.f32 %v452, %v931
  %v1995 = vmax.f32 %v457, %v936
  %v1996 = vmax.f32 %v460, %v939
  %v1997 = vmax.f32 %v465, %v944
  %v1998 = vmax.f32 %v468, %v947
  %v1999 = vmax.f32 %v473, %v952
  %v2000 = vmax.f32 %v476, %v955
  %v2001 = vmax.f32 %v481, %v960
  %v2002 = vmax.f32 %v484, %v963
  %v2003 = vmax.f32 %v489, %v968
  %v2004 = vmax.f32 %v492, %v971
  %v2005 = vmax.f32 %v497, %v976
  %v2006 = vmax.f32 %v500, %v979
  %v2007 = vmax.f32 %v505, %v984
  %v2008 = vmax.f32 %v508, %v987
  %v2009 = vmax.f32 %v513, %v992
  %v2010 = vmax.f32 %v516, %v995
  %v2011 = vmax.f32 %v521, %v1000
  %v2012 = vmax.f32 %v1287, %v1766
  %v2013 = vmax.f32 %v1290, %v1769
  %v2014 = vmax.f32 %v1295, %v1774
  %v2015 = vmax.f32 %v1298, %v1777
  %v2016 = vmax.f32 %v1303, %v1782
  %v2017 = vmax.f32 %v1306, %v1785
  %v2018 = vmax.f32 %v1311, %v1790
  %v2019 = vmax.f32 %v1314, %v1793
  %v2020 = vmax.f32 %v1319, %v1798
  %v2021 = vmax.f32 %v1322, %v1801
  %v2022 = vmax.f32 %v1327, %v1806
  %v2023 = vmax.f32 %v1330, %v1809
  %v2024 = vmax.f32 %v1335, %v1814
  %v2025 = vmax.f32 %v1338, %v1817
  %v2026 = vmax.f32 %v1343, %v1822
  %v2027 = vmax.f32 %v1346, %v1825
  %v2028 = vmax.f32 %v1351, %v1830
  %v2029 = vmax.f32 %v1354, %v1833
  %v2030 = vmax.f32 %v1359, %v1838
  %v2031 = vmax.f32 %v1362, %v1841
  %v2032 = vmax.f32 %v1367, %v1846
  %v2033 = vmax.f32 %v1370, %v1849
  %v2034 = vmax.f32 %v1375, %v1854
  %v2035 = vmax.f32 %v1378, %v1857
  %v2036 = vmax.f32 %v1383, %v1862
  %v2037 = vmax.f32 %v1386, %v1865
  %v2038 = vmax.f32 %v1391, %v1870
  %v2039 = vmax.f32 %v1394, %v1873
  %v2040 = vmax.f32 %v1399, %v1878
  %v2041 = vmax.f32 %v1402, %v1881
  %v2042 = vmax.f32 %v1407, %v1886
  %v2043 = vmax.f32 %v1410, %v1889
  %v2044 = vmax.f32 %v1415, %v1894
  %v2045 = vmax.f32 %v1418, %v1897
  %v2046 = vmax.f32 %v1423, %v1902
  %v2047 = vmax.f32 %v1426, %v1905
  %v2048 = vmax.f32 %v1431, %v1910
  %v2049 = vmax.f32 %v1434, %v1913
  %v2050 = vmax.f32 %v1439, %v1918
  %v2051 = vmax.f32 %v1442, %v1921
  %v2052 = vmax.f32 %v1447, %v1926
  %v2053 = vmax.f32 %v1450, %v1929
  %v2054 = vmax.f32 %v1455, %v1934
  %v2055 = vmax.f32 %v1458, %v1937
  %v2056 = vmax.f32 %v1463, %v1942
  %v2057 = vmax.f32 %v1466, %v1945
  %v2058 = vmax.f32 %v1471, %v1950
  %v2059 = vmax.f32 %v1474, %v1953
  %v2060 = vmax.f32 %v1479, %v1958
  %v2061 = vmax.f32 %v1963, %v2012
  %v2062 = vmax.f32 %v1964, %v2013
  %v2063 = vmax.f32 %v1965, %v2014
  %v2064 = vmax.f32 %v1966, %v2015
  %v2065 = vmax.f32 %v1967, %v2016
  %v2066 = vmax.f32 %v1968, %v2017
  %v2067 = vmax.f32 %v1969, %v2018
  %v2068 = vmax.f32 %v1970, %v2019
  %v2069 = vmax.f32 %v1971, %v2020
  %v2070 = vmax.f32 %v1972, %v2021
  %v2071 = vmax.f32 %v1973, %v2022
  %v2072 = vmax.f32 %v1974, %v2023
  %v2073 = vmax.f32 %v1975, %v2024
  %v2074 = vmax.f32 %v1976, %v2025
  %v2075 = vmax.f32 %v1977, %v2026
  %v2076 = vmax.f32 %v1978, %v2027
  %v2077 = vmax.f32 %v1979, %v2028
  %v2078 = vmax.f32 %v1980, %v2029
  %v2079 = vmax.f32 %v1981, %v2030
  %v2080 = vmax.f32 %v1982, %v2031
  %v2081 = vmax.f32 %v1983, %v2032
  %v2082 = vmax.f32 %v1984, %v2033
  %v2083 = vmax.f32 %v1985, %v2034
  %v2084 = vmax.f32 %v1986, %v2035
  %v2085 = vmax.f32 %v1987, %v2036
  %v2086 = vmax.f32 %v1988, %v2037
  %v2087 = vmax.f32 %v1989, %v2038
  %v2088 = vmax.f32 %v1990, %v2039
  %v2089 = vmax.f32 %v1991, %v2040
  %v2090 = vmax.f32 %v1992, %v2041
  %v2091 = vmax.f32 %v1993, %v2042
  %v2092 = vmax.f32 %v1994, %v2043
  %v2093 = vmax.f32 %v1995, %v2044
  %v2094 = vmax.f32 %v1996, %v2045
  %v2095 = vmax.f32 %v1997, %v2046
  %v2096 = vmax.f32 %v1998, %v2047
  %v2097 = vmax.f32 %v1999, %v2048
  %v2098 = vmax.f32 %v2000, %v2049
  %v2099 = vmax.f32 %v2001, %v2050
  %v2100 = vmax.f32 %v2002, %v2051
  %v2101 = vmax.f32 %v2003, %v2052
  %v2102 = vmax.f32 %v2004, %v2053
  %v2103 = vmax.f32 %v2005, %v2054
  %v2104 = vmax.f32 %v2006, %v2055
  %v2105 = vmax.f32 %v2007, %v2056
  %v2106 = vmax.f32 %v2008, %v2057
  %v2107 = vmax.f32 %v2009, %v2058
  %v2108 = vmax.f32 %v2010, %v2059
  %v2109 = vmax.f32 %v2011, %v2060
  %v2110 = vld [vmem:[%s5] sm:$0x1]
  %v2112 = vlaneseq
  %v2113 = vshrl.u32 %v2112, 7
  %v2114 = vsub.s32 0, %v2113
  %v2115 = vrot.slane %v2110, %v2114
  %v2117 = vadd.f32 %v2061, %v2115
  %v2118 = vadd.f32 %v2062, %v2115
  %v2119 = vadd.f32 %v2063, %v2115
  %v2120 = vadd.f32 %v2064, %v2115
  %v2121 = vadd.f32 %v2065, %v2115
  %v2122 = vadd.f32 %v2066, %v2115
  %v2123 = vadd.f32 %v2067, %v2115
  %v2124 = vadd.f32 %v2068, %v2115
  %v2125 = vadd.f32 %v2069, %v2115
  %v2126 = vadd.f32 %v2070, %v2115
  %v2127 = vadd.f32 %v2071, %v2115
  %v2128 = vadd.f32 %v2072, %v2115
  %v2129 = vadd.f32 %v2073, %v2115
  %v2130 = vadd.f32 %v2074, %v2115
  %v2131 = vadd.f32 %v2075, %v2115
  %v2132 = vadd.f32 %v2076, %v2115
  %v2133 = vadd.f32 %v2077, %v2115
  %v2134 = vadd.f32 %v2078, %v2115
  %v2135 = vadd.f32 %v2079, %v2115
  %v2136 = vadd.f32 %v2080, %v2115
  %v2137 = vadd.f32 %v2081, %v2115
  %v2138 = vadd.f32 %v2082, %v2115
  %v2139 = vadd.f32 %v2083, %v2115
  %v2140 = vadd.f32 %v2084, %v2115
  %v2141 = vadd.f32 %v2085, %v2115
  %v2142 = vadd.f32 %v2086, %v2115
  %v2143 = vadd.f32 %v2087, %v2115
  %v2144 = vadd.f32 %v2088, %v2115
  %v2145 = vadd.f32 %v2089, %v2115
  %v2146 = vadd.f32 %v2090, %v2115
  %v2147 = vadd.f32 %v2091, %v2115
  %v2148 = vadd.f32 %v2092, %v2115
  %v2149 = vadd.f32 %v2093, %v2115
  %v2150 = vadd.f32 %v2094, %v2115
  %v2151 = vadd.f32 %v2095, %v2115
  %v2152 = vadd.f32 %v2096, %v2115
  %v2153 = vadd.f32 %v2097, %v2115
  %v2154 = vadd.f32 %v2098, %v2115
  %v2155 = vadd.f32 %v2099, %v2115
  %v2156 = vadd.f32 %v2100, %v2115
  %v2157 = vadd.f32 %v2101, %v2115
  %v2158 = vadd.f32 %v2102, %v2115
  %v2159 = vadd.f32 %v2103, %v2115
  %v2160 = vadd.f32 %v2104, %v2115
  %v2161 = vadd.f32 %v2105, %v2115
  %v2162 = vadd.f32 %v2106, %v2115
  %v2163 = vadd.f32 %v2107, %v2115
  %v2164 = vadd.f32 %v2108, %v2115
  %v2165 = vadd.f32 %v2109, %v2115
  %v2166 = vmax.f32 %v2117, 0.0
  %v2167 = vmax.f32 %v2118, 0.0
  %v2168 = vmax.f32 %v2119, 0.0
  %v2169 = vmax.f32 %v2120, 0.0
  %v2170 = vmax.f32 %v2121, 0.0
  %v2171 = vmax.f32 %v2122, 0.0
  %v2172 = vmax.f32 %v2123, 0.0
  %v2173 = vmax.f32 %v2124, 0.0
  %v2174 = vmax.f32 %v2125, 0.0
  %v2175 = vmax.f32 %v2126, 0.0
  %v2176 = vmax.f32 %v2127, 0.0
  %v2177 = vmax.f32 %v2128, 0.0
  %v2178 = vmax.f32 %v2129, 0.0
  %v2179 = vmax.f32 %v2130, 0.0
  %v2180 = vmax.f32 %v2131, 0.0
  %v2181 = vmax.f32 %v2132, 0.0
  %v2182 = vmax.f32 %v2133, 0.0
  %v2183 = vmax.f32 %v2134, 0.0
  %v2184 = vmax.f32 %v2135, 0.0
  %v2185 = vmax.f32 %v2136, 0.0
  %v2186 = vmax.f32 %v2137, 0.0
  %v2187 = vmax.f32 %v2138, 0.0
  %v2188 = vmax.f32 %v2139, 0.0
  %v2189 = vmax.f32 %v2140, 0.0
  %v2190 = vmax.f32 %v2141, 0.0
  %v2191 = vmax.f32 %v2142, 0.0
  %v2192 = vmax.f32 %v2143, 0.0
  %v2193 = vmax.f32 %v2144, 0.0
  %v2194 = vmax.f32 %v2145, 0.0
  %v2195 = vmax.f32 %v2146, 0.0
  %v2196 = vmax.f32 %v2147, 0.0
  %v2197 = vmax.f32 %v2148, 0.0
  %v2198 = vmax.f32 %v2149, 0.0
  %v2199 = vmax.f32 %v2150, 0.0
  %v2200 = vmax.f32 %v2151, 0.0
  %v2201 = vmax.f32 %v2152, 0.0
  %v2202 = vmax.f32 %v2153, 0.0
  %v2203 = vmax.f32 %v2154, 0.0
  %v2204 = vmax.f32 %v2155, 0.0
  %v2205 = vmax.f32 %v2156, 0.0
  %v2206 = vmax.f32 %v2157, 0.0
  %v2207 = vmax.f32 %v2158, 0.0
  %v2208 = vmax.f32 %v2159, 0.0
  %v2209 = vmax.f32 %v2160, 0.0
  %v2210 = vmax.f32 %v2161, 0.0
  %v2211 = vmax.f32 %v2162, 0.0
  %v2212 = vmax.f32 %v2163, 0.0
  %v2213 = vmax.f32 %v2164, 0.0
  %v2214 = vmax.f32 %v2165, 0.0
  %v2215 = vpack.c.bf16 %v2167, %v2166
  %v2216 = vpack.c.bf16 %v2169, %v2168
  %v2217 = vpack.c.bf16 %v2171, %v2170
  %v2218 = vpack.c.bf16 %v2173, %v2172
  %v2219 = vpack.c.bf16 %v2175, %v2174
  %v2220 = vpack.c.bf16 %v2177, %v2176
  %v2221 = vpack.c.bf16 %v2179, %v2178
  %v2222 = vpack.c.bf16 %v2181, %v2180
  %v2223 = vpack.c.bf16 %v2183, %v2182
  %v2224 = vpack.c.bf16 %v2185, %v2184
  %v2225 = vpack.c.bf16 %v2187, %v2186
  %v2226 = vpack.c.bf16 %v2189, %v2188
  %v2227 = vpack.c.bf16 %v2191, %v2190
  %v2228 = vpack.c.bf16 %v2193, %v2192
  %v2229 = vpack.c.bf16 %v2195, %v2194
  %v2230 = vpack.c.bf16 %v2197, %v2196
  %v2231 = vpack.c.bf16 %v2199, %v2198
  %v2232 = vpack.c.bf16 %v2201, %v2200
  %v2233 = vpack.c.bf16 %v2203, %v2202
  %v2234 = vpack.c.bf16 %v2205, %v2204
  %v2235 = vpack.c.bf16 %v2207, %v2206
  %v2236 = vpack.c.bf16 %v2209, %v2208
  %v2237 = vpack.c.bf16 %v2211, %v2210
  %v2238 = vpack.c.bf16 %v2213, %v2212
  %v2239 = vpack.c.bf16 %v2214, %v2214
  %v2265 = vunpack.c.l.b16 %v2215
  %v2266 = vunpack.c.h.b16 %v2215
  %v2267 = vunpack.c.l.b16 %v2216
  %v2268 = vunpack.c.h.b16 %v2216
  %v2269 = vunpack.c.l.b16 %v2217
  %v2270 = vunpack.c.h.b16 %v2217
  %v2271 = vunpack.c.l.b16 %v2218
  %v2272 = vunpack.c.h.b16 %v2218
  %v2273 = vunpack.c.l.b16 %v2219
  %v2274 = vunpack.c.h.b16 %v2219
  %v2275 = vunpack.c.l.b16 %v2220
  %v2276 = vunpack.c.h.b16 %v2220
  %v2277 = vunpack.c.l.b16 %v2221
  %v2278 = vunpack.c.h.b16 %v2221
  %v2279 = vunpack.c.l.b16 %v2222
  %v2280 = vunpack.c.h.b16 %v2222
  %v2281 = vunpack.c.l.b16 %v2223
  %v2282 = vunpack.c.h.b16 %v2223
  %v2283 = vunpack.c.l.b16 %v2224
  %v2284 = vunpack.c.h.b16 %v2224
  %v2285 = vunpack.c.l.b16 %v2225
  %v2286 = vunpack.c.h.b16 %v2225
  %v2287 = vunpack.c.l.b16 %v2226
  %v2288 = vunpack.c.h.b16 %v2226
  %v2289 = vunpack.c.l.b16 %v2227
  %v2290 = vunpack.c.h.b16 %v2227
  %v2291 = vunpack.c.l.b16 %v2228
  %v2292 = vunpack.c.h.b16 %v2228
  %v2293 = vunpack.c.l.b16 %v2229
  %v2294 = vunpack.c.h.b16 %v2229
  %v2295 = vunpack.c.l.b16 %v2230
  %v2296 = vunpack.c.h.b16 %v2230
  %v2297 = vunpack.c.l.b16 %v2231
  %v2298 = vunpack.c.h.b16 %v2231
  %v2299 = vunpack.c.l.b16 %v2232
  %v2300 = vunpack.c.h.b16 %v2232
  %v2301 = vunpack.c.l.b16 %v2233
  %v2302 = vunpack.c.h.b16 %v2233
  %v2303 = vunpack.c.l.b16 %v2234
  %v2304 = vunpack.c.h.b16 %v2234
  %v2305 = vunpack.c.l.b16 %v2235
  %v2306 = vunpack.c.h.b16 %v2235
  %v2307 = vunpack.c.l.b16 %v2236
  %v2308 = vunpack.c.h.b16 %v2236
  %v2309 = vunpack.c.l.b16 %v2237
  %v2310 = vunpack.c.h.b16 %v2237
  %v2311 = vunpack.c.l.b16 %v2238
  %v2312 = vunpack.c.h.b16 %v2238
  %v2313 = vunpack.c.l.b16 %v2239
  %v2314 = vpack.c.b16 %v2265, %v2265
  %v2315 = vpack.c.b16 %v2266, %v2266
  %v2316 = vpack.c.b16 %v2267, %v2267
  %v2317 = vpack.c.b16 %v2268, %v2268
  %v2318 = vpack.c.b16 %v2269, %v2269
  %v2319 = vpack.c.b16 %v2270, %v2270
  %v2320 = vpack.c.b16 %v2271, %v2271
  %v2321 = vpack.c.b16 %v2272, %v2272
  %v2322 = vpack.c.b16 %v2273, %v2273
  %v2323 = vpack.c.b16 %v2274, %v2274
  %v2324 = vpack.c.b16 %v2275, %v2275
  %v2325 = vpack.c.b16 %v2276, %v2276
  %v2326 = vpack.c.b16 %v2277, %v2277
  %v2327 = vpack.c.b16 %v2278, %v2278
  %v2328 = vpack.c.b16 %v2279, %v2279
  %v2329 = vpack.c.b16 %v2280, %v2280
  %v2330 = vpack.c.b16 %v2281, %v2281
  %v2331 = vpack.c.b16 %v2282, %v2282
  %v2332 = vpack.c.b16 %v2283, %v2283
  %v2333 = vpack.c.b16 %v2284, %v2284
  %v2334 = vpack.c.b16 %v2285, %v2285
  %v2335 = vpack.c.b16 %v2286, %v2286
  %v2336 = vpack.c.b16 %v2287, %v2287
  %v2337 = vpack.c.b16 %v2288, %v2288
  %v2338 = vpack.c.b16 %v2289, %v2289
  %v2339 = vpack.c.b16 %v2290, %v2290
  %v2340 = vpack.c.b16 %v2291, %v2291
  %v2341 = vpack.c.b16 %v2292, %v2292
  %v2342 = vpack.c.b16 %v2293, %v2293
  %v2343 = vpack.c.b16 %v2294, %v2294
  %v2344 = vpack.c.b16 %v2295, %v2295
  %v2345 = vpack.c.b16 %v2296, %v2296
  %v2346 = vpack.c.b16 %v2297, %v2297
  %v2347 = vpack.c.b16 %v2298, %v2298
  %v2348 = vpack.c.b16 %v2299, %v2299
  %v2349 = vpack.c.b16 %v2300, %v2300
  %v2350 = vpack.c.b16 %v2301, %v2301
  %v2351 = vpack.c.b16 %v2302, %v2302
  %v2352 = vpack.c.b16 %v2303, %v2303
  %v2353 = vpack.c.b16 %v2304, %v2304
  %v2354 = vpack.c.b16 %v2305, %v2305
  %v2355 = vpack.c.b16 %v2306, %v2306
  %v2356 = vpack.c.b16 %v2307, %v2307
  %v2357 = vpack.c.b16 %v2308, %v2308
  %v2358 = vpack.c.b16 %v2309, %v2309
  %v2359 = vpack.c.b16 %v2310, %v2310
  %v2360 = vpack.c.b16 %v2311, %v2311
  %v2361 = vpack.c.b16 %v2312, %v2312
  %v2362 = vpack.c.b16 %v2313, %v2313
  %2412 = vst [vmem:[%s6] sm:$0xf] %v2314
  %2413 = vst [vmem:[%s6 + $0x4] sm:$0xf] %v2315
  %2414 = vst [vmem:[%s6 + $0x8] sm:$0xf] %v2316
  %2415 = vst [vmem:[%s6 + $0xc] sm:$0xf] %v2317
  %2416 = vst [vmem:[%s6 + $0x10] sm:$0xf] %v2318
  %2417 = vst [vmem:[%s6 + $0x14] sm:$0xf] %v2319
  %2418 = vst [vmem:[%s6 + $0x18] sm:$0xf] %v2320
  %2419 = vst [vmem:[%s6 + $0x1c] sm:$0xf] %v2321
  %2420 = vst [vmem:[%s6 + $0x20] sm:$0xf] %v2322
  %2421 = vst [vmem:[%s6 + $0x24] sm:$0xf] %v2323
  %2422 = vst [vmem:[%s6 + $0x28] sm:$0xf] %v2324
  %2423 = vst [vmem:[%s6 + $0x2c] sm:$0xf] %v2325
  %2424 = vst [vmem:[%s6 + $0x30] sm:$0xf] %v2326
  %2425 = vst [vmem:[%s6 + $0x34] sm:$0xf] %v2327
  %2426 = vst [vmem:[%s6 + $0x38] sm:$0xf] %v2328
  %2427 = vst [vmem:[%s6 + $0x3c] sm:$0xf] %v2329
  %2428 = vst [vmem:[%s6 + $0x40] sm:$0xf] %v2330
  %2429 = vst [vmem:[%s6 + $0x44] sm:$0xf] %v2331
  %2430 = vst [vmem:[%s6 + $0x48] sm:$0xf] %v2332
  %2431 = vst [vmem:[%s6 + $0x4c] sm:$0xf] %v2333
  %2432 = vst [vmem:[%s6 + $0x50] sm:$0xf] %v2334
  %2433 = vst [vmem:[%s6 + $0x54] sm:$0xf] %v2335
  %2434 = vst [vmem:[%s6 + $0x58] sm:$0xf] %v2336
  %2435 = vst [vmem:[%s6 + $0x5c] sm:$0xf] %v2337
  %2436 = vst [vmem:[%s6 + $0x60] sm:$0xf] %v2338
  %2437 = vst [vmem:[%s6 + $0x64] sm:$0xf] %v2339
  %2438 = vst [vmem:[%s6 + $0x68] sm:$0xf] %v2340
  %2439 = vst [vmem:[%s6 + $0x6c] sm:$0xf] %v2341
  %2440 = vst [vmem:[%s6 + $0x70] sm:$0xf] %v2342
  %2441 = vst [vmem:[%s6 + $0x74] sm:$0xf] %v2343
  %2442 = vst [vmem:[%s6 + $0x78] sm:$0xf] %v2344
  %2443 = vst [vmem:[%s6 + $0x7c] sm:$0xf] %v2345
  %2444 = vst [vmem:[%s6 + $0x80] sm:$0xf] %v2346
  %2445 = vst [vmem:[%s6 + $0x84] sm:$0xf] %v2347
  %2446 = vst [vmem:[%s6 + $0x88] sm:$0xf] %v2348
  %2447 = vst [vmem:[%s6 + $0x8c] sm:$0xf] %v2349
  %2448 = vst [vmem:[%s6 + $0x90] sm:$0xf] %v2350
  %2449 = vst [vmem:[%s6 + $0x94] sm:$0xf] %v2351
  %2450 = vst [vmem:[%s6 + $0x98] sm:$0xf] %v2352
  %2451 = vst [vmem:[%s6 + $0x9c] sm:$0xf] %v2353
  %2452 = vst [vmem:[%s6 + $0xa0] sm:$0xf] %v2354
  %2453 = vst [vmem:[%s6 + $0xa4] sm:$0xf] %v2355
  %2454 = vst [vmem:[%s6 + $0xa8] sm:$0xf] %v2356
  %2455 = vst [vmem:[%s6 + $0xac] sm:$0xf] %v2357
  %2456 = vst [vmem:[%s6 + $0xb0] sm:$0xf] %v2358
  %2457 = vst [vmem:[%s6 + $0xb4] sm:$0xf] %v2359
  %2458 = vst [vmem:[%s6 + $0xb8] sm:$0xf] %v2360
  %2459 = vst [vmem:[%s6 + $0xbc] sm:$0xf] %v2361
  %2460 = vst [vmem:[%s6 + $0xc0] sm:$0xf] %v2362
  // Predicated region
  $region26: #{convnet_forward.3} parent=0 // pred_check
    _
  $region27: #{convnet_forward.3} parent=0 // pred_check_branch
    %2462 = sbr.rel (0) target = $region29
  $region28: #{convnet_forward.3} parent=0 // pred_region
    _
  $region29: #{convnet_forward.3} parent=0 // pred_fallthru
    _
  // Predicated region
  $region30: #{convnet_forward.3} parent=0 // pred_check
    _
  $region31: #{convnet_forward.3} parent=0 // pred_check_branch
    %2464 = sbr.rel (0) target = $region33
  $region32: #{convnet_forward.3} parent=0 // pred_region
    _
  $region33: #{convnet_forward.3} parent=0 // pred_fallthru
    _

// kernel: convnet_forward.4
$region0: #{convnet_forward.4}
  #allocation0 [shape = 'u32[]', space=smem, size = 0x4, offset = 0x4, fixed_abs, tag = 'smem constant byte address 0x4 - core index']
  #allocation1 [shape = 'u32[144,128]{1,0:T(1,128)}', space=vmem, size = 0x12000, scoped, tag = 'internal scratch']
  %s0 = inlined_call_operand.vmem [shape: bf16[50,150], index: 0, kind: input, shape index: {}]
  %s1 = inlined_call_operand.vmem [shape: bf16[50,150], index: 1, kind: input, shape index: {}]
  %s2 = inlined_call_operand.vmem [shape: bf16[50,150], index: 2, kind: input, shape index: {}]
  %s3 = inlined_call_operand.vmem [shape: bf16[50,150], index: 3, kind: input, shape index: {}]
  %s4 = inlined_call_operand.vmem [shape: bf16[150,128], index: 4, kind: input, shape index: {}]
  %s5 = inlined_call_operand.vmem [shape: f32[1,128], index: 5, kind: input, shape index: {}]
  %s6 = inlined_call_operand.vmem [shape: bf16[50,128], index: 6, kind: output, shape index: {}]
  %s7 = sld [smem:[#allocation0]]
  $region101: #{convnet_forward.4} parent=0
    _
  %s9 = ssub.s32 1, %s7
  %s10 = scalar_select 0, %s9, %s7
  $region1: #{convnet_forward.4} parent=0
    #allocation2 [shape = 'u8[24576]{0}', space=vmem, size = 0x6000, scoped, tag = 'output window, operand 0']
    loop: start=0, step=1, limit=4
    $region2: #{convnet_forward.4} parent=1 // loop_pre_header
      _
    $region3: #{convnet_forward.4} parent=1 // loop_header
      %s12 = sphi 0, %s16
      %p13 = scmp.ge.s32.totalorder %s12, 4
      %s22 = sphi 0, %s24
      %s25 = sphi 0, %s22
      %s26 = sphi 0, %s25
      %s42 = sphi 0, %s26
      %s48 = sphi 0, %s50
      %s51 = sphi 0, %s48
      %s52 = sphi 0, %s51
      %s68 = sphi 0, %s52
      %s74 = sphi 0, %s76
      %s77 = sphi 0, %s74
      %s78 = sphi 0, %s77
      %s94 = sphi 0, %s78
      %s100 = sphi 0, %s102
      %s103 = sphi 0, %s100
      %s104 = sphi 0, %s103
      %s120 = sphi 0, %s104
      %s124 = sphi 0, %s124
      %s126 = sphi 0, %s124
      %s127 = sphi 0, %s126
      %s141 = sphi 0, %s127
      %s145 = sphi 0, %s145
      %s147 = sphi 0, %s145
      %s148 = sphi 0, %s147
      %s162 = sphi 0, %s148
      %s168 = sphi 0, %s170
      %s171 = sphi 0, %s168
      %s172 = sphi 0, %s171
      %s188 = sphi 0, %s172
    $region4: #{convnet_forward.4} parent=1 // loop_header_branch
      %15 = sbr.rel (%p13) target = $region8
    $region5: #{convnet_forward.4} parent=1 // loop_body
      %s17 = ssub.s32 %s12, 1
      %s18 = ssub.s32 %s12, 2
      %s19 = sadd.s32 %s12, 1
      %s20 = ssub.s32 %s12, %s19
      %p21 = scmp.eq.s32.totalorder %s20, 0
      %s23 = sadd.s32 %s22, 1
      %s24 = scalar_select %p21, %s22, %s23
      %p27 = pneg %p21
      %p28 = scmp.eq.s32.totalorder %s12, 1
      %p29 = por %p27, %p28
      %p30 = scmp.ne.s32.totalorder %s22, %s25
      %p31 = scmp.eq.s32.totalorder %s12, 0
      %p32 = por %p30, %p31
      %p33 = scmp.ne.s32.totalorder %s22, %s25
      %p34 = scmp.eq.s32.totalorder %s17, 1
      %p35 = por %p33, %p34
      %p36 = scmp.ne.s32.totalorder %s25, %s26
      %p37 = scmp.eq.s32.totalorder %s17, 0
      %p38 = por %p36, %p37
      %p39 = scmp.ne.s32.totalorder %s25, %s26
      %p40 = scmp.eq.s32.totalorder %s18, 1
      %p41 = por %p39, %p40
      %p43 = scmp.ne.s32.totalorder %s26, %s42
      %p44 = scmp.eq.s32.totalorder %s18, 0
      %p45 = por %p43, %p44
      %s46 = ssub.s32 %s12, %s19
      %p47 = scmp.eq.s32.totalorder %s46, 0
      %s49 = sadd.s32 %s48, 1
      %s50 = scalar_select %p47, %s48, %s49
      %p53 = pneg %p47
      %p54 = scmp.eq.s32.totalorder %s12, 1
      %p55 = por %p53, %p54
      %p56 = scmp.ne.s32.totalorder %s48, %s51
      %p57 = scmp.eq.s32.totalorder %s12, 0
      %p58 = por %p56, %p57
      %p59 = scmp.ne.s32.totalorder %s48, %s51
      %p60 = scmp.eq.s32.totalorder %s17, 1
      %p61 = por %p59, %p60
      %p62 = scmp.ne.s32.totalorder %s51, %s52
      %p63 = scmp.eq.s32.totalorder %s17, 0
      %p64 = por %p62, %p63
      %p65 = scmp.ne.s32.totalorder %s51, %s52
      %p66 = scmp.eq.s32.totalorder %s18, 1
      %p67 = por %p65, %p66
      %p69 = scmp.ne.s32.totalorder %s52, %s68
      %p70 = scmp.eq.s32.totalorder %s18, 0
      %p71 = por %p69, %p70
      %s72 = ssub.s32 %s12, %s19
      %p73 = scmp.eq.s32.totalorder %s72, 0
      %s75 = sadd.s32 %s74, 1
      %s76 = scalar_select %p73, %s74, %s75
      %p79 = pneg %p73
      %p80 = scmp.eq.s32.totalorder %s12, 1
      %p81 = por %p79, %p80
      %p82 = scmp.ne.s32.totalorder %s74, %s77
      %p83 = scmp.eq.s32.totalorder %s12, 0
      %p84 = por %p82, %p83
      %p85 = scmp.ne.s32.totalorder %s74, %s77
      %p86 = scmp.eq.s32.totalorder %s17, 1
      %p87 = por %p85, %p86
      %p88 = scmp.ne.s32.totalorder %s77, %s78
      %p89 = scmp.eq.s32.totalorder %s17, 0
      %p90 = por %p88, %p89
      %p91 = scmp.ne.s32.totalorder %s77, %s78
      %p92 = scmp.eq.s32.totalorder %s18, 1
      %p93 = por %p91, %p92
      %p95 = scmp.ne.s32.totalorder %s78, %s94
      %p96 = scmp.eq.s32.totalorder %s18, 0
      %p97 = por %p95, %p96
      %s98 = ssub.s32 %s12, %s19
      %p99 = scmp.eq.s32.totalorder %s98, 0
      %s101 = sadd.s32 %s100, 1
      %s102 = scalar_select %p99, %s100, %s101
      %p105 = pneg %p99
      %p106 = scmp.eq.s32.totalorder %s12, 1
      %p107 = por %p105, %p106
      %p108 = scmp.ne.s32.totalorder %s100, %s103
      %p109 = scmp.eq.s32.totalorder %s12, 0
      %p110 = por %p108, %p109
      %p111 = scmp.ne.s32.totalorder %s100, %s103
      %p112 = scmp.eq.s32.totalorder %s17, 1
      %p113 = por %p111, %p112
      %p114 = scmp.ne.s32.totalorder %s103, %s104
      %p115 = scmp.eq.s32.totalorder %s17, 0
      %p116 = por %p114, %p115
      %p117 = scmp.ne.s32.totalorder %s103, %s104
      %p118 = scmp.eq.s32.totalorder %s18, 1
      %p119 = por %p117, %p118
      %p121 = scmp.ne.s32.totalorder %s104, %s120
      %p122 = scmp.eq.s32.totalorder %s18, 0
      %p123 = por %p121, %p122
      %s125 = sadd.s32 %s124, 1
      %p128 = scmp.eq.s32.totalorder %s12, 1
      %p129 = scmp.ne.s32.totalorder %s124, %s126
      %p130 = scmp.eq.s32.totalorder %s12, 0
      %p131 = por %p129, %p130
      %p132 = scmp.ne.s32.totalorder %s124, %s126
      %p133 = scmp.eq.s32.totalorder %s17, 1
      %p134 = por %p132, %p133
      %p135 = scmp.ne.s32.totalorder %s126, %s127
      %p136 = scmp.eq.s32.totalorder %s17, 0
      %p137 = por %p135, %p136
      %p138 = scmp.ne.s32.totalorder %s126, %s127
      %p139 = scmp.eq.s32.totalorder %s18, 1
      %p140 = por %p138, %p139
      %p142 = scmp.ne.s32.totalorder %s127, %s141
      %p143 = scmp.eq.s32.totalorder %s18, 0
      %p144 = por %p142, %p143
      %s146 = sadd.s32 %s145, 1
      %p149 = scmp.eq.s32.totalorder %s12, 1
      %p150 = scmp.ne.s32.totalorder %s145, %s147
      %p151 = scmp.eq.s32.totalorder %s12, 0
      %p152 = por %p150, %p151
      %p153 = scmp.ne.s32.totalorder %s145, %s147
      %p154 = scmp.eq.s32.totalorder %s17, 1
      %p155 = por %p153, %p154
      %p156 = scmp.ne.s32.totalorder %s147, %s148
      %p157 = scmp.eq.s32.totalorder %s17, 0
      %p158 = por %p156, %p157
      %p159 = scmp.ne.s32.totalorder %s147, %s148
      %p160 = scmp.eq.s32.totalorder %s18, 1
      %p161 = por %p159, %p160
      %p163 = scmp.ne.s32.totalorder %s148, %s162
      %p164 = scmp.eq.s32.totalorder %s18, 0
      %p165 = por %p163, %p164
      %s166 = ssub.s32 %s12, %s19
      %p167 = scmp.eq.s32.totalorder %s166, 0
      %s169 = sadd.s32 %s168, 1
      %s170 = scalar_select %p167, %s168, %s169
      %p173 = pneg %p167
      %p174 = scmp.eq.s32.totalorder %s12, 1
      %p175 = por %p173, %p174
      %p176 = scmp.ne.s32.totalorder %s168, %s171
      %p177 = scmp.eq.s32.totalorder %s12, 0
      %p178 = por %p176, %p177
      %p179 = scmp.ne.s32.totalorder %s168, %s171
      %p180 = scmp.eq.s32.totalorder %s17, 1
      %p181 = por %p179, %p180
      %p182 = scmp.ne.s32.totalorder %s171, %s172
      %p183 = scmp.eq.s32.totalorder %s17, 0
      %p184 = por %p182, %p183
      %p185 = scmp.ne.s32.totalorder %s171, %s172
      %p186 = scmp.eq.s32.totalorder %s18, 1
      %p187 = por %p185, %p186
      %p189 = scmp.ne.s32.totalorder %s172, %s188
      %p190 = scmp.eq.s32.totalorder %s18, 0
      %p191 = por %p189, %p190
      %p192 = scmp.le.s32.totalorder 1, %s12
      %p193 = scmp.lt.s32.totalorder %s12, 3
      %p194 = pnand %p192, %p193
      %p195 = pneg %p194
      // Predicated region
      $region9: #{convnet_forward.4} parent=5 // pred_check
        _
      $region10: #{convnet_forward.4} parent=5 // pred_check_branch
        %197 = sbr.rel (%p194) target = $region12
      $region11: #{convnet_forward.4} parent=5 // pred_region
        %s198 = ssub.s32 %s12, 1
        // Predicated region
        $region13: #{convnet_forward.4} parent=11 // pred_check
          %p199 = pneg %p137
        $region14: #{convnet_forward.4} parent=11 // pred_check_branch
          %201 = sbr.rel (%p199) target = $region16
        $region15: #{convnet_forward.4} parent=11 // pred_region
          _
        $region16: #{convnet_forward.4} parent=11 // pred_fallthru
          _
        // Predicated region
        $region17: #{convnet_forward.4} parent=11 // pred_check
          %p202 = pneg %p158
        $region18: #{convnet_forward.4} parent=11 // pred_check_branch
          %204 = sbr.rel (%p202) target = $region20
        $region19: #{convnet_forward.4} parent=11 // pred_region
          _
        $region20: #{convnet_forward.4} parent=11 // pred_fallthru
          _
      $region12: #{convnet_forward.4} parent=5 // pred_fallthru
        _
      %p205 = scmp.lt.s32.totalorder %s12, 2
      // Predicated region
      $region21: #{convnet_forward.4} parent=5 // pred_check
        %p206 = pneg %p205
      $region22: #{convnet_forward.4} parent=5 // pred_check_branch
        %208 = sbr.rel (%p206) target = $region24
      $region23: #{convnet_forward.4} parent=5 // pred_region
        // Predicated region
        $region25: #{convnet_forward.4} parent=23 // pred_check
          %p209 = pneg %p32
        $region26: #{convnet_forward.4} parent=23 // pred_check_branch
          %211 = sbr.rel (%p209) target = $region28
        $region27: #{convnet_forward.4} parent=23 // pred_region
          %s212 = smul.u32 6, %s12
          %s213 = ssub.s32 7, %s212
          %p214 = scmp.lt.s32.totalorder %s213, 6
          %s215 = scalar_select %p214, %s213, 6
          %s216 = smul.u32 64, %s215
          %s217 = smul.u32 %s216, 2
          %p218 = scmp.lt.s32.totalorder %s212, 6
          %s219 = scalar_select %p218, %s212, 6
          %s220 = smul.addr %s219, 2
          %s221 = smul.addr %s220, 4
          %s222 = scalar_lea.vmem %s0, %s221
          %s223 = smul.u32 6, %s12
          %s224 = ssub.s32 7, %s223
          %p225 = scmp.lt.s32.totalorder %s224, 6
          %s226 = scalar_select %p225, %s224, 6
          %s227 = smul.u32 64, %s226
          %s228 = smul.u32 %s227, 2
        $region28: #{convnet_forward.4} parent=23 // pred_fallthru
          _
        // Predicated region
        $region29: #{convnet_forward.4} parent=23 // pred_check
          %p229 = pneg %p58
        $region30: #{convnet_forward.4} parent=23 // pred_check_branch
          %231 = sbr.rel (%p229) target = $region32
        $region31: #{convnet_forward.4} parent=23 // pred_region
          %s232 = smul.u32 6, %s12
          %s233 = ssub.s32 7, %s232
          %p234 = scmp.lt.s32.totalorder %s233, 6
          %s235 = scalar_select %p234, %s233, 6
          %s236 = smul.u32 64, %s235
          %s237 = smul.u32 %s236, 2
          %p238 = scmp.lt.s32.totalorder %s232, 6
          %s239 = scalar_select %p238, %s232, 6
          %s240 = smul.addr %s239, 2
          %s241 = smul.addr %s240, 4
          %s242 = scalar_lea.vmem %s1, %s241
          %s243 = smul.u32 6, %s12
          %s244 = ssub.s32 7, %s243
          %p245 = scmp.lt.s32.totalorder %s244, 6
          %s246 = scalar_select %p245, %s244, 6
          %s247 = smul.u32 64, %s246
          %s248 = smul.u32 %s247, 2
        $region32: #{convnet_forward.4} parent=23 // pred_fallthru
          _
        // Predicated region
        $region33: #{convnet_forward.4} parent=23 // pred_check
          %p249 = pneg %p84
        $region34: #{convnet_forward.4} parent=23 // pred_check_branch
          %251 = sbr.rel (%p249) target = $region36
        $region35: #{convnet_forward.4} parent=23 // pred_region
          %s252 = smul.u32 6, %s12
          %s253 = ssub.s32 7, %s252
          %p254 = scmp.lt.s32.totalorder %s253, 6
          %s255 = scalar_select %p254, %s253, 6
          %s256 = smul.u32 64, %s255
          %s257 = smul.u32 %s256, 2
          %p258 = scmp.lt.s32.totalorder %s252, 6
          %s259 = scalar_select %p258, %s252, 6
          %s260 = smul.addr %s259, 2
          %s261 = smul.addr %s260, 4
          %s262 = scalar_lea.vmem %s2, %s261
          %s263 = smul.u32 6, %s12
          %s264 = ssub.s32 7, %s263
          %p265 = scmp.lt.s32.totalorder %s264, 6
          %s266 = scalar_select %p265, %s264, 6
          %s267 = smul.u32 64, %s266
          %s268 = smul.u32 %s267, 2
        $region36: #{convnet_forward.4} parent=23 // pred_fallthru
          _
        // Predicated region
        $region37: #{convnet_forward.4} parent=23 // pred_check
          %p269 = pneg %p110
        $region38: #{convnet_forward.4} parent=23 // pred_check_branch
          %271 = sbr.rel (%p269) target = $region40
        $region39: #{convnet_forward.4} parent=23 // pred_region
          %s272 = smul.u32 6, %s12
          %s273 = ssub.s32 7, %s272
          %p274 = scmp.lt.s32.totalorder %s273, 6
          %s275 = scalar_select %p274, %s273, 6
          %s276 = smul.u32 64, %s275
          %s277 = smul.u32 %s276, 2
          %p278 = scmp.lt.s32.totalorder %s272, 6
          %s279 = scalar_select %p278, %s272, 6
          %s280 = smul.addr %s279, 2
          %s281 = smul.addr %s280, 4
          %s282 = scalar_lea.vmem %s3, %s281
          %s283 = smul.u32 6, %s12
          %s284 = ssub.s32 7, %s283
          %p285 = scmp.lt.s32.totalorder %s284, 6
          %s286 = scalar_select %p285, %s284, 6
          %s287 = smul.u32 64, %s286
          %s288 = smul.u32 %s287, 2
        $region40: #{convnet_forward.4} parent=23 // pred_fallthru
          _
      $region24: #{convnet_forward.4} parent=5 // pred_fallthru
        _
      %p289 = scmp.le.s32.totalorder 1, %s12
      %p290 = scmp.lt.s32.totalorder %s12, 3
      %p291 = pnand %p289, %p290
      %p292 = pneg %p291
      // Predicated region
      $region41: #{convnet_forward.4} parent=5 // pred_check
        _
      $region42: #{convnet_forward.4} parent=5 // pred_check_branch
        %294 = sbr.rel (%p291) target = $region44
      $region43: #{convnet_forward.4} parent=5 // pred_region
        %s295 = ssub.s32 %s12, 1
        %s296 = smul.u32 6, %s17
        %s297 = ssub.s32 7, %s296
        %p298 = scmp.lt.s32.totalorder %s297, 6
        %s299 = scalar_select %p298, %s297, 6
        %s300 = smul.u32 64, %s299
        %s301 = smul.u32 %s300, 2
        %p302 = scmp.lt.s32.totalorder %s296, 6
        %s303 = scalar_select %p302, %s296, 6
        %s304 = smul.addr %s303, 2
        %s305 = smul.addr %s304, 4
        %s306 = scalar_lea.vmem %s0, %s305
        %p307 = pneg %p38
        %p308 = pneg %p35
        %s309 = smul.u32 6, %s17
        %s310 = ssub.s32 7, %s309
        %p311 = scmp.lt.s32.totalorder %s310, 6
        %s312 = scalar_select %p311, %s310, 6
        %s313 = smul.u32 64, %s312
        %s314 = smul.u32 %s313, 2
        %p315 = scmp.lt.s32.totalorder %s309, 6
        %s316 = scalar_select %p315, %s309, 6
        %s317 = smul.addr %s316, 2
        %s318 = smul.addr %s317, 4
        %s319 = scalar_lea.vmem %s1, %s318
        %p320 = pneg %p64
        %p321 = pneg %p61
        %s322 = smul.u32 6, %s17
        %s323 = ssub.s32 7, %s322
        %p324 = scmp.lt.s32.totalorder %s323, 6
        %s325 = scalar_select %p324, %s323, 6
        %s326 = smul.u32 64, %s325
        %s327 = smul.u32 %s326, 2
        %p328 = scmp.lt.s32.totalorder %s322, 6
        %s329 = scalar_select %p328, %s322, 6
        %s330 = smul.addr %s329, 2
        %s331 = smul.addr %s330, 4
        %s332 = scalar_lea.vmem %s2, %s331
        %p333 = pneg %p90
        %p334 = pneg %p87
        %s335 = smul.u32 6, %s17
        %s336 = ssub.s32 7, %s335
        %p337 = scmp.lt.s32.totalorder %s336, 6
        %s338 = scalar_select %p337, %s336, 6
        %s339 = smul.u32 64, %s338
        %s340 = smul.u32 %s339, 2
        %p341 = scmp.lt.s32.totalorder %s335, 6
        %s342 = scalar_select %p341, %s335, 6
        %s343 = smul.addr %s342, 2
        %s344 = smul.addr %s343, 4
        %s345 = scalar_lea.vmem %s3, %s344
        %p346 = pneg %p116
        %p347 = pneg %p113
        %p348 = pneg %p137
        %p349 = pneg %p134
        %p350 = pneg %p158
        %p351 = pneg %p155
        %p352 = pneg %p184
        %p353 = pneg %p181
        %s354 = sand.u32 %s171, 1
        %s355 = sand.u32 %s171, 1
        %s356 = smul.addr %s355, 24
        %s357 = scalar_lea.vmem [#allocation2], %s356
        %s358 = smul.u32 6, %s17
        %s359 = ssub.s32 7, %s358
        %p360 = scmp.lt.s32.totalorder %s359, 6
        %s361 = scalar_select %p360, %s359, 6
        %s362 = smul.u32 64, %s361
        %s363 = smul.u32 %s362, 2
        %p364 = scmp.lt.s32.totalorder %s358, 6
        %s365 = scalar_select %p364, %s358, 6
        %s366 = smul.addr %s365, 2
        %s367 = smul.addr %s366, 4
        %s368 = scalar_lea.vmem %s0, %s367
        %s369 = smul.u32 6, %s17
        %s370 = ssub.s32 7, %s369
        %p371 = scmp.lt.s32.totalorder %s370, 6
        %s372 = scalar_select %p371, %s370, 6
        %s373 = smul.u32 64, %s372
        %s374 = smul.u32 %s373, 2
        %s375 = smul.u32 6, %s17
        %s376 = ssub.s32 7, %s375
        %p377 = scmp.lt.s32.totalorder %s376, 6
        %s378 = scalar_select %p377, %s376, 6
        %s379 = smul.u32 64, %s378
        %s380 = smul.u32 %s379, 2
        %p381 = scmp.lt.s32.totalorder %s375, 6
        %s382 = scalar_select %p381, %s375, 6
        %s383 = smul.addr %s382, 2
        %s384 = smul.addr %s383, 4
        %s385 = scalar_lea.vmem %s1, %s384
        %s386 = smul.u32 6, %s17
        %s387 = ssub.s32 7, %s386
        %p388 = scmp.lt.s32.totalorder %s387, 6
        %s389 = scalar_select %p388, %s387, 6
        %s390 = smul.u32 64, %s389
        %s391 = smul.u32 %s390, 2
        %s392 = smul.u32 6, %s17
        %s393 = ssub.s32 7, %s392
        %p394 = scmp.lt.s32.totalorder %s393, 6
        %s395 = scalar_select %p394, %s393, 6
        %s396 = smul.u32 64, %s395
        %s397 = smul.u32 %s396, 2
        %p398 = scmp.lt.s32.totalorder %s392, 6
        %s399 = scalar_select %p398, %s392, 6
        %s400 = smul.addr %s399, 2
        %s401 = smul.addr %s400, 4
        %s402 = scalar_lea.vmem %s2, %s401
        %s403 = smul.u32 6, %s17
        %s404 = ssub.s32 7, %s403
        %p405 = scmp.lt.s32.totalorder %s404, 6
        %s406 = scalar_select %p405, %s404, 6
        %s407 = smul.u32 64, %s406
        %s408 = smul.u32 %s407, 2
        %s409 = smul.u32 6, %s17
        %s410 = ssub.s32 7, %s409
        %p411 = scmp.lt.s32.totalorder %s410, 6
        %s412 = scalar_select %p411, %s410, 6
        %s413 = smul.u32 64, %s412
        %s414 = smul.u32 %s413, 2
        %p415 = scmp.lt.s32.totalorder %s409, 6
        %s416 = scalar_select %p415, %s409, 6
        %s417 = smul.addr %s416, 2
        %s418 = smul.addr %s417, 4
        %s419 = scalar_lea.vmem %s3, %s418
        %s420 = smul.u32 6, %s17
        %s421 = ssub.s32 7, %s420
        %p422 = scmp.lt.s32.totalorder %s421, 6
        %s423 = scalar_select %p422, %s421, 6
        %s424 = smul.u32 64, %s423
        %s425 = smul.u32 %s424, 2
        %s426 = smul.u32 6, %s17
        %s427 = ssub.s32 7, %s426
        %p428 = scmp.lt.s32.totalorder %s427, 6
        %s429 = scalar_select %p428, %s427, 6
        %s430 = smul.u32 64, %s429
        %v432 = vld [vmem:[%s4] sm:$0xf]
        %v433 = vld [vmem:[%s4 + $0x4] sm:$0xf]
        %v434 = vld [vmem:[%s4 + $0x8] sm:$0xf]
        %v435 = vld [vmem:[%s4 + $0xc] sm:$0xf]
        %v436 = vld [vmem:[%s4 + $0x10] sm:$0xf]
        %v437 = vld [vmem:[%s4 + $0x14] sm:$0xf]
        %v438 = vld [vmem:[%s4 + $0x18] sm:$0xf]
        %v439 = vld [vmem:[%s4 + $0x1c] sm:$0xf]
        %v440 = vld [vmem:[%s4 + $0x20] sm:$0xf]
        %v441 = vld [vmem:[%s4 + $0x24] sm:$0xf]
        %v442 = vld [vmem:[%s4 + $0x28] sm:$0xf]
        %v443 = vld [vmem:[%s4 + $0x2c] sm:$0xf]
        %v444 = vld [vmem:[%s4 + $0x30] sm:$0xf]
        %v445 = vld [vmem:[%s4 + $0x34] sm:$0xf]
        %v446 = vld [vmem:[%s4 + $0x38] sm:$0xf]
        %v447 = vld [vmem:[%s4 + $0x3c] sm:$0xf]
        %v448 = vld [vmem:[%s4 + $0x40] sm:$0xf]
        %v449 = vld [vmem:[%s4 + $0x44] sm:$0xf]
        %v450 = vld [vmem:[%s4 + $0x48] sm:$0x7]
        %v451 = vld [vmem:[%s368] sm:$0xff]
        %v452 = vld [vmem:[%s368 + $0x8] sm:$0xff]
        %v453 = vld [vmem:[%s368 + $0x10] sm:$0xff]
        %v454 = vld [vmem:[%s368 + $0x18] sm:$0xff]
        %v455 = vld [vmem:[%s368 + $0x20] sm:$0xff]
        %v456 = vld [vmem:[%s368 + $0x28] sm:$0xff]
        %v463 = vunpack.c.l.b16 %v451
        %v464 = vunpack.c.h.b16 %v451
        %v465 = vunpack.c.l.b16 %v452
        %v466 = vunpack.c.h.b16 %v452
        %v467 = vunpack.c.l.b16 %v453
        %v468 = vunpack.c.h.b16 %v453
        %v469 = vunpack.c.l.b16 %v454
        %v470 = vunpack.c.h.b16 %v454
        %v471 = vunpack.c.l.b16 %v455
        %v472 = vunpack.c.h.b16 %v455
        %v473 = vunpack.c.l.b16 %v456
        %v474 = vunpack.c.h.b16 %v456
        %v475 = vpack.c.b16 %v465, %v463
        %v476 = vpack.c.b16 %v466, %v464
        %v477 = vpack.c.b16 %v469, %v467
        %v478 = vpack.c.b16 %v470, %v468
        %v479 = vpack.c.b16 %v473, %v471
        %v480 = vpack.c.b16 %v474, %v472
        %v503 = vunpack.c.l.b16 %v432
        %v504 = vunpack.c.l.b16 %v433
        %v505 = vunpack.c.l.b16 %v434
        %v506 = vunpack.c.l.b16 %v435
        %v507 = vunpack.c.l.b16 %v436
        %v508 = vunpack.c.l.b16 %v437
        %v509 = vunpack.c.l.b16 %v438
        %v510 = vunpack.c.l.b16 %v439
        %v511 = vunpack.c.l.b16 %v440
        %v512 = vunpack.c.l.b16 %v441
        %v513 = vunpack.c.l.b16 %v442
        %v514 = vunpack.c.l.b16 %v443
        %v515 = vunpack.c.l.b16 %v444
        %v516 = vunpack.c.l.b16 %v445
        %v517 = vunpack.c.l.b16 %v446
        %v518 = vunpack.c.l.b16 %v447
        %v519 = vunpack.c.l.b16 %v448
        %v520 = vunpack.c.l.b16 %v449
        %v521 = vunpack.c.l.b16 %v450
        %v522 = vpack.c.b16 %v504, %v503
        %v523 = vpack.c.b16 %v506, %v505
        %v524 = vpack.c.b16 %v508, %v507
        %v525 = vpack.c.b16 %v510, %v509
        %v526 = vpack.c.b16 %v512, %v511
        %v527 = vpack.c.b16 %v514, %v513
        %v528 = vpack.c.b16 %v516, %v515
        %v529 = vpack.c.b16 %v518, %v517
        %v530 = vpack.c.b16 %v520, %v519
        %v531 = vpack.c.b16 %v521, %v521
        %vm541 = vcmask 179200
        %v543 = vsel %vm541, %v476, 0
        %v546 = vsel %vm541, %v478, 0
        %v549 = vsel %vm541, %v480, 0
        %vm551 = vcmask 1042432
        %v553 = vsel %vm551, %v531, 0
        %555 = vmatprep.subr.bf16.mxu0 0
        %556 = vmatpush1.bf16.msra.mxu0 %v522
        %557 = vmatprep.subr.bf16.mxu0 0
        %558 = vmatpush1.bf16.msra.mxu0 %v523
        %559 = vmatprep.subr.bf16.mxu0 0
        %560 = vmatpush1.bf16.msra.mxu0 %v524
        %561 = vmatprep.subr.bf16.mxu0 0
        %562 = vmatpush1.bf16.msra.mxu0 %v525
        %563 = vmatprep.subr.bf16.mxu0 0
        %564 = vmatpush1.bf16.msra.mxu0 %v526
        %565 = vmatprep.subr.bf16.mxu0 0
        %566 = vmatpush1.bf16.msra.mxu0 %v527
        %567 = vmatprep.subr.bf16.mxu0 0
        %568 = vmatpush1.bf16.msra.mxu0 %v528
        %569 = vmatprep.subr.bf16.mxu0 0
        %570 = vmatpush1.bf16.msra.mxu0 %v529
        %571 = vmatprep.subr.bf16.mxu0 0
        %572 = vmatpush1.bf16.msra.mxu0 %v530
        %573 = vmatprep.subr.bf16.mxu0 0
        %574 = vmatpush1.bf16.msra.mxu0 %v553
        %575 = vmatprep.subr.bf16.mxu0 0
        %576 = vmatpush1.bf16.msra.mxu0 0
        %577 = vmatprep.subr.bf16.mxu0 0
        %578 = vmatpush1.bf16.msra.mxu0 0
        %579 = vmatprep.subr.bf16.mxu0 0
        %580 = vmatpush1.bf16.msra.mxu0 0
        %581 = vmatprep.subr.bf16.mxu0 0
        %582 = vmatpush1.bf16.msra.mxu0 0
        %583 = vmatprep.subr.bf16.mxu0 0
        %584 = vmatpush1.bf16.msra.mxu0 0
        %585 = vmatprep.subr.bf16.mxu0 0
        %586 = vmatpush1.bf16.msra.mxu0 0
        %587 = vmatprep.mubr.bf16.mxu0 %v543
        %588 = vmatmul.mubr.bf16.gmra.mrb[0].mxu0 %v475
        %v589 = vpop.f32.mrb[0].mxu0
        %v590 = vadd.f32 0.0, %v589
        %v591 = vpop.f32.mrb[0].mxu0
        %v592 = vpop.f32.mrb[0].mxu0
        %v593 = vadd.f32 0.0, %v592
        %v594 = vpop.f32.mrb[0].mxu0
        %595 = vmatprep.mubr.bf16.mxu0 %v546
        %596 = vmatmul.mubr.bf16.gmra.mrb[0].mxu0 %v477
        %v597 = vpop.f32.mrb[0].mxu0
        %v598 = vadd.f32 0.0, %v597
        %v599 = vpop.f32.mrb[0].mxu0
        %v600 = vpop.f32.mrb[0].mxu0
        %v601 = vadd.f32 0.0, %v600
        %v602 = vpop.f32.mrb[0].mxu0
        %603 = vmatprep.mubr.bf16.mxu0 %v549
        %604 = vmatmul.mubr.bf16.gmra.mrb[0].mxu0 %v479
        %v605 = vpop.f32.mrb[0].mxu0
        %v606 = vadd.f32 0.0, %v605
        %v607 = vpop.f32.mrb[0].mxu0
        %v608 = vpop.f32.mrb[0].mxu0
        %v609 = vadd.f32 0.0, %v608
        %v610 = vpop.f32.mrb[0].mxu0
        %611 = vdwg.mxu0
        %v612 = vld [vmem:[%s385] sm:$0xff]
        %v613 = vld [vmem:[%s385 + $0x8] sm:$0xff]
        %v614 = vld [vmem:[%s385 + $0x10] sm:$0xff]
        %v615 = vld [vmem:[%s385 + $0x18] sm:$0xff]
        %v616 = vld [vmem:[%s385 + $0x20] sm:$0xff]
        %v617 = vld [vmem:[%s385 + $0x28] sm:$0xff]
        %v624 = vunpack.c.l.b16 %v612
        %v625 = vunpack.c.h.b16 %v612
        %v626 = vunpack.c.l.b16 %v613
        %v627 = vunpack.c.h.b16 %v613
        %v628 = vunpack.c.l.b16 %v614
        %v629 = vunpack.c.h.b16 %v614
        %v630 = vunpack.c.l.b16 %v615
        %v631 = vunpack.c.h.b16 %v615
        %v632 = vunpack.c.l.b16 %v616
        %v633 = vunpack.c.h.b16 %v616
        %v634 = vunpack.c.l.b16 %v617
        %v635 = vunpack.c.h.b16 %v617
        %v636 = vpack.c.b16 %v626, %v624
        %v637 = vpack.c.b16 %v627, %v625
        %v638 = vpack.c.b16 %v630, %v628
        %v639 = vpack.c.b16 %v631, %v629
        %v640 = vpack.c.b16 %v634, %v632
        %v641 = vpack.c.b16 %v635, %v633
        %v646 = vsel %vm541, %v637, 0
        %v649 = vsel %vm541, %v639, 0
        %v652 = vsel %vm541, %v641, 0
        %654 = vmatprep.subr.bf16.mxu0 0
        %655 = vmatpush1.bf16.msra.mxu0 %v522
        %656 = vmatprep.subr.bf16.mxu0 0
        %657 = vmatpush1.bf16.msra.mxu0 %v523
        %658 = vmatprep.subr.bf16.mxu0 0
        %659 = vmatpush1.bf16.msra.mxu0 %v524
        %660 = vmatprep.subr.bf16.mxu0 0
        %661 = vmatpush1.bf16.msra.mxu0 %v525
        %662 = vmatprep.subr.bf16.mxu0 0
        %663 = vmatpush1.bf16.msra.mxu0 %v526
        %664 = vmatprep.subr.bf16.mxu0 0
        %665 = vmatpush1.bf16.msra.mxu0 %v527
        %666 = vmatprep.subr.bf16.mxu0 0
        %667 = vmatpush1.bf16.msra.mxu0 %v528
        %668 = vmatprep.subr.bf16.mxu0 0
        %669 = vmatpush1.bf16.msra.mxu0 %v529
        %670 = vmatprep.subr.bf16.mxu0 0
        %671 = vmatpush1.bf16.msra.mxu0 %v530
        %672 = vmatprep.subr.bf16.mxu0 0
        %673 = vmatpush1.bf16.msra.mxu0 %v553
        %674 = vmatprep.subr.bf16.mxu0 0
        %675 = vmatpush1.bf16.msra.mxu0 0
        %676 = vmatprep.subr.bf16.mxu0 0
        %677 = vmatpush1.bf16.msra.mxu0 0
        %678 = vmatprep.subr.bf16.mxu0 0
        %679 = vmatpush1.bf16.msra.mxu0 0
        %680 = vmatprep.subr.bf16.mxu0 0
        %681 = vmatpush1.bf16.msra.mxu0 0
        %682 = vmatprep.subr.bf16.mxu0 0
        %683 = vmatpush1.bf16.msra.mxu0 0
        %684 = vmatprep.subr.bf16.mxu0 0
        %685 = vmatpush1.bf16.msra.mxu0 0
        %686 = vmatprep.mubr.bf16.mxu0 %v646
        %687 = vmatmul.mubr.bf16.gmra.mrb[0].mxu0 %v636
        %v688 = vpop.f32.mrb[0].mxu0
        %v689 = vadd.f32 0.0, %v688
        %v690 = vpop.f32.mrb[0].mxu0
        %v691 = vpop.f32.mrb[0].mxu0
        %v692 = vadd.f32 0.0, %v691
        %v693 = vpop.f32.mrb[0].mxu0
        %694 = vmatprep.mubr.bf16.mxu0 %v649
        %695 = vmatmul.mubr.bf16.gmra.mrb[0].mxu0 %v638
        %v696 = vpop.f32.mrb[0].mxu0
        %v697 = vadd.f32 0.0, %v696
        %v698 = vpop.f32.mrb[0].mxu0
        %v699 = vpop.f32.mrb[0].mxu0
        %v700 = vadd.f32 0.0, %v699
        %v701 = vpop.f32.mrb[0].mxu0
        %702 = vmatprep.mubr.bf16.mxu0 %v652
        %703 = vmatmul.mubr.bf16.gmra.mrb[0].mxu0 %v640
        %v704 = vpop.f32.mrb[0].mxu0
        %v705 = vadd.f32 0.0, %v704
        %v706 = vpop.f32.mrb[0].mxu0
        %v707 = vpop.f32.mrb[0].mxu0
        %v708 = vadd.f32 0.0, %v707
        %v709 = vpop.f32.mrb[0].mxu0
        %710 = vdwg.mxu0
        %v711 = vld [vmem:[%s402] sm:$0xff]
        %v712 = vld [vmem:[%s402 + $0x8] sm:$0xff]
        %v713 = vld [vmem:[%s402 + $0x10] sm:$0xff]
        %v714 = vld [vmem:[%s402 + $0x18] sm:$0xff]
        %v715 = vld [vmem:[%s402 + $0x20] sm:$0xff]
        %v716 = vld [vmem:[%s402 + $0x28] sm:$0xff]
        %v723 = vunpack.c.l.b16 %v711
        %v724 = vunpack.c.h.b16 %v711
        %v725 = vunpack.c.l.b16 %v712
        %v726 = vunpack.c.h.b16 %v712
        %v727 = vunpack.c.l.b16 %v713
        %v728 = vunpack.c.h.b16 %v713
        %v729 = vunpack.c.l.b16 %v714
        %v730 = vunpack.c.h.b16 %v714
        %v731 = vunpack.c.l.b16 %v715
        %v732 = vunpack.c.h.b16 %v715
        %v733 = vunpack.c.l.b16 %v716
        %v734 = vunpack.c.h.b16 %v716
        %v735 = vpack.c.b16 %v725, %v723
        %v736 = vpack.c.b16 %v726, %v724
        %v737 = vpack.c.b16 %v729, %v727
        %v738 = vpack.c.b16 %v730, %v728
        %v739 = vpack.c.b16 %v733, %v731
        %v740 = vpack.c.b16 %v734, %v732
        %v745 = vsel %vm541, %v736, 0
        %v748 = vsel %vm541, %v738, 0
        %v751 = vsel %vm541, %v740, 0
        %753 = vmatprep.subr.bf16.mxu0 0
        %754 = vmatpush1.bf16.msra.mxu0 %v522
        %755 = vmatprep.subr.bf16.mxu0 0
        %756 = vmatpush1.bf16.msra.mxu0 %v523
        %757 = vmatprep.subr.bf16.mxu0 0
        %758 = vmatpush1.bf16.msra.mxu0 %v524
        %759 = vmatprep.subr.bf16.mxu0 0
        %760 = vmatpush1.bf16.msra.mxu0 %v525
        %761 = vmatprep.subr.bf16.mxu0 0
        %762 = vmatpush1.bf16.msra.mxu0 %v526
        %763 = vmatprep.subr.bf16.mxu0 0
        %764 = vmatpush1.bf16.msra.mxu0 %v527
        %765 = vmatprep.subr.bf16.mxu0 0
        %766 = vmatpush1.bf16.msra.mxu0 %v528
        %767 = vmatprep.subr.bf16.mxu0 0
        %768 = vmatpush1.bf16.msra.mxu0 %v529
        %769 = vmatprep.subr.bf16.mxu0 0
        %770 = vmatpush1.bf16.msra.mxu0 %v530
        %771 = vmatprep.subr.bf16.mxu0 0
        %772 = vmatpush1.bf16.msra.mxu0 %v553
        %773 = vmatprep.subr.bf16.mxu0 0
        %774 = vmatpush1.bf16.msra.mxu0 0
        %775 = vmatprep.subr.bf16.mxu0 0
        %776 = vmatpush1.bf16.msra.mxu0 0
        %777 = vmatprep.subr.bf16.mxu0 0
        %778 = vmatpush1.bf16.msra.mxu0 0
        %779 = vmatprep.subr.bf16.mxu0 0
        %780 = vmatpush1.bf16.msra.mxu0 0
        %781 = vmatprep.subr.bf16.mxu0 0
        %782 = vmatpush1.bf16.msra.mxu0 0
        %783 = vmatprep.subr.bf16.mxu0 0
        %784 = vmatpush1.bf16.msra.mxu0 0
        %785 = vmatprep.mubr.bf16.mxu0 %v745
        %786 = vmatmul.mubr.bf16.gmra.mrb[0].mxu0 %v735
        %v787 = vpop.f32.mrb[0].mxu0
        %v788 = vadd.f32 0.0, %v787
        %v789 = vpop.f32.mrb[0].mxu0
        %v790 = vpop.f32.mrb[0].mxu0
        %v791 = vadd.f32 0.0, %v790
        %v792 = vpop.f32.mrb[0].mxu0
        %793 = vmatprep.mubr.bf16.mxu0 %v748
        %794 = vmatmul.mubr.bf16.gmra.mrb[0].mxu0 %v737
        %v795 = vpop.f32.mrb[0].mxu0
        %v796 = vadd.f32 0.0, %v795
        %v797 = vpop.f32.mrb[0].mxu0
        %v798 = vpop.f32.mrb[0].mxu0
        %v799 = vadd.f32 0.0, %v798
        %v800 = vpop.f32.mrb[0].mxu0
        %801 = vmatprep.mubr.bf16.mxu0 %v751
        %802 = vmatmul.mubr.bf16.gmra.mrb[0].mxu0 %v739
        %v803 = vpop.f32.mrb[0].mxu0
        %v804 = vadd.f32 0.0, %v803
        %v805 = vpop.f32.mrb[0].mxu0
        %v806 = vpop.f32.mrb[0].mxu0
        %v807 = vadd.f32 0.0, %v806
        %v808 = vpop.f32.mrb[0].mxu0
        %809 = vdwg.mxu0
        %v810 = vld [vmem:[%s419] sm:$0xff]
        %v811 = vld [vmem:[%s419 + $0x8] sm:$0xff]
        %v812 = vld [vmem:[%s419 + $0x10] sm:$0xff]
        %v813 = vld [vmem:[%s419 + $0x18] sm:$0xff]
        %v814 = vld [vmem:[%s419 + $0x20] sm:$0xff]
        %v815 = vld [vmem:[%s419 + $0x28] sm:$0xff]
        %v822 = vunpack.c.l.b16 %v810
        %v823 = vunpack.c.h.b16 %v810
        %v824 = vunpack.c.l.b16 %v811
        %v825 = vunpack.c.h.b16 %v811
        %v826 = vunpack.c.l.b16 %v812
        %v827 = vunpack.c.h.b16 %v812
        %v828 = vunpack.c.l.b16 %v813
        %v829 = vunpack.c.h.b16 %v813
        %v830 = vunpack.c.l.b16 %v814
        %v831 = vunpack.c.h.b16 %v814
        %v832 = vunpack.c.l.b16 %v815
        %v833 = vunpack.c.h.b16 %v815
        %v834 = vpack.c.b16 %v824, %v822
        %v835 = vpack.c.b16 %v825, %v823
        %v836 = vpack.c.b16 %v828, %v826
        %v837 = vpack.c.b16 %v829, %v827
        %v838 = vpack.c.b16 %v832, %v830
        %v839 = vpack.c.b16 %v833, %v831
        %v844 = vsel %vm541, %v835, 0
        %v847 = vsel %vm541, %v837, 0
        %v850 = vsel %vm541, %v839, 0
        %852 = vmatprep.subr.bf16.mxu0 0
        %853 = vmatpush1.bf16.msra.mxu0 %v522
        %854 = vmatprep.subr.bf16.mxu0 0
        %855 = vmatpush1.bf16.msra.mxu0 %v523
        %856 = vmatprep.subr.bf16.mxu0 0
        %857 = vmatpush1.bf16.msra.mxu0 %v524
        %858 = vmatprep.subr.bf16.mxu0 0
        %859 = vmatpush1.bf16.msra.mxu0 %v525
        %860 = vmatprep.subr.bf16.mxu0 0
        %861 = vmatpush1.bf16.msra.mxu0 %v526
        %862 = vmatprep.subr.bf16.mxu0 0
        %863 = vmatpush1.bf16.msra.mxu0 %v527
        %864 = vmatprep.subr.bf16.mxu0 0
        %865 = vmatpush1.bf16.msra.mxu0 %v528
        %866 = vmatprep.subr.bf16.mxu0 0
        %867 = vmatpush1.bf16.msra.mxu0 %v529
        %868 = vmatprep.subr.bf16.mxu0 0
        %869 = vmatpush1.bf16.msra.mxu0 %v530
        %870 = vmatprep.subr.bf16.mxu0 0
        %871 = vmatpush1.bf16.msra.mxu0 %v553
        %872 = vmatprep.subr.bf16.mxu0 0
        %873 = vmatpush1.bf16.msra.mxu0 0
        %874 = vmatprep.subr.bf16.mxu0 0
        %875 = vmatpush1.bf16.msra.mxu0 0
        %876 = vmatprep.subr.bf16.mxu0 0
        %877 = vmatpush1.bf16.msra.mxu0 0
        %878 = vmatprep.subr.bf16.mxu0 0
        %879 = vmatpush1.bf16.msra.mxu0 0
        %880 = vmatprep.subr.bf16.mxu0 0
        %881 = vmatpush1.bf16.msra.mxu0 0
        %882 = vmatprep.subr.bf16.mxu0 0
        %883 = vmatpush1.bf16.msra.mxu0 0
        %884 = vmatprep.mubr.bf16.mxu0 %v844
        %885 = vmatmul.mubr.bf16.gmra.mrb[0].mxu0 %v834
        %v886 = vpop.f32.mrb[0].mxu0
        %v887 = vadd.f32 0.0, %v886
        %v888 = vpop.f32.mrb[0].mxu0
        %v889 = vpop.f32.mrb[0].mxu0
        %v890 = vadd.f32 0.0, %v889
        %v891 = vpop.f32.mrb[0].mxu0
        %892 = vmatprep.mubr.bf16.mxu0 %v847
        %893 = vmatmul.mubr.bf16.gmra.mrb[0].mxu0 %v836
        %v894 = vpop.f32.mrb[0].mxu0
        %v895 = vadd.f32 0.0, %v894
        %v896 = vpop.f32.mrb[0].mxu0
        %v897 = vpop.f32.mrb[0].mxu0
        %v898 = vadd.f32 0.0, %v897
        %v899 = vpop.f32.mrb[0].mxu0
        %900 = vmatprep.mubr.bf16.mxu0 %v850
        %901 = vmatmul.mubr.bf16.gmra.mrb[0].mxu0 %v838
        %v902 = vpop.f32.mrb[0].mxu0
        %v903 = vadd.f32 0.0, %v902
        %v904 = vpop.f32.mrb[0].mxu0
        %v905 = vpop.f32.mrb[0].mxu0
        %v906 = vadd.f32 0.0, %v905
        %v907 = vpop.f32.mrb[0].mxu0
        %908 = vdwg.mxu0
        %v909 = vmax.f32 %v590, %v689
        %v910 = vmax.f32 %v593, %v692
        %v911 = vmax.f32 %v598, %v697
        %v912 = vmax.f32 %v601, %v700
        %v913 = vmax.f32 %v606, %v705
        %v914 = vmax.f32 %v609, %v708
        %v915 = vmax.f32 %v788, %v887
        %v916 = vmax.f32 %v791, %v890
        %v917 = vmax.f32 %v796, %v895
        %v918 = vmax.f32 %v799, %v898
        %v919 = vmax.f32 %v804, %v903
        %v920 = vmax.f32 %v807, %v906
        %v921 = vmax.f32 %v909, %v915
        %v922 = vmax.f32 %v910, %v916
        %v923 = vmax.f32 %v911, %v917
        %v924 = vmax.f32 %v912, %v918
        %v925 = vmax.f32 %v913, %v919
        %v926 = vmax.f32 %v914, %v920
        %v927 = vld [vmem:[%s5] sm:$0x1]
        %v929 = vlaneseq
        %v930 = vshrl.u32 %v929, 7
        %v931 = vsub.s32 0, %v930
        %v932 = vrot.slane %v927, %v931
        %v934 = vadd.f32 %v921, %v932
        %v935 = vadd.f32 %v922, %v932
        %v936 = vadd.f32 %v923, %v932
        %v937 = vadd.f32 %v924, %v932
        %v938 = vadd.f32 %v925, %v932
        %v939 = vadd.f32 %v926, %v932
        %v940 = vmax.f32 %v934, 0.0
        %v941 = vmax.f32 %v935, 0.0
        %v942 = vmax.f32 %v936, 0.0
        %v943 = vmax.f32 %v937, 0.0
        %v944 = vmax.f32 %v938, 0.0
        %v945 = vmax.f32 %v939, 0.0
        %v946 = vpack.c.bf16 %v941, %v940
        %v947 = vpack.c.bf16 %v943, %v942
        %v948 = vpack.c.bf16 %v945, %v944
        %v952 = vunpack.c.l.b16 %v946
        %v953 = vunpack.c.h.b16 %v946
        %v954 = vunpack.c.l.b16 %v947
        %v955 = vunpack.c.h.b16 %v947
        %v956 = vunpack.c.l.b16 %v948
        %v957 = vunpack.c.h.b16 %v948
        %v958 = vpack.c.b16 %v952, %v952
        %v959 = vpack.c.b16 %v953, %v953
        %v960 = vpack.c.b16 %v954, %v954
        %v961 = vpack.c.b16 %v955, %v955
        %v962 = vpack.c.b16 %v956, %v956
        %v963 = vpack.c.b16 %v957, %v957
        %970 = vst [vmem:[%s357] sm:$0xf] %v958
        %971 = vst [vmem:[%s357 + $0x4] sm:$0xf] %v959
        %972 = vst [vmem:[%s357 + $0x8] sm:$0xf] %v960
        %973 = vst [vmem:[%s357 + $0xc] sm:$0xf] %v961
        %974 = vst [vmem:[%s357 + $0x10] sm:$0xf] %v962
        %975 = vst [vmem:[%s357 + $0x14] sm:$0xf] %v963
        %s976 = sand.u32 %s171, 1
        %s977 = sand.u32 %s171, 1
        %s978 = smul.addr %s977, 24
        %s979 = scalar_lea.vmem [#allocation2], %s978
        // Predicated region
        $region45: #{convnet_forward.4} parent=43 // pred_check
          %p980 = pneg %p181
        $region46: #{convnet_forward.4} parent=43 // pred_check_branch
          %982 = sbr.rel (%p980) target = $region48
        $region47: #{convnet_forward.4} parent=43 // pred_region
          %s983 = smul.u32 6, %s17
          %s984 = ssub.s32 7, %s983
          %p985 = scmp.lt.s32.totalorder %s984, 6
          %s986 = scalar_select %p985, %s984, 6
          %s987 = smul.u32 64, %s986
          %p988 = scmp.ne.s32.totalorder 0, %s987
          %s989 = smul.addr %s983, 4
          %s990 = scalar_lea.vmem %s6, %s989
          // Predicated region
          $region49: #{convnet_forward.4} parent=47 // pred_check
            %p991 = pneg %p988
          $region50: #{convnet_forward.4} parent=47 // pred_check_branch
            %993 = sbr.rel (%p991) target = $region52
          $region51: #{convnet_forward.4} parent=47 // pred_region
            // Predicated region
            $region53: #{convnet_forward.4} parent=51 // pred_check
              _
            $region54: #{convnet_forward.4} parent=51 // pred_check_branch
              %995 = sbr.rel target = $region56
            $region55: #{convnet_forward.4} parent=51 // pred_region
              // Predicated region
              $region75: #{convnet_forward.4} parent=55 // pred_check
                _
              $region76: #{convnet_forward.4} parent=55 // pred_check_branch
                %1055 = sbr.rel (0) target = $region78
              $region77: #{convnet_forward.4} parent=55 // pred_region
                %s1057 = sdiv.u32.pop %s986, 6
                %s1058 = srem.u32.pop %s986, 6
                // While loop
                $region79: #{convnet_forward.4} parent=77 // loop_pre_header
                  _
                $region80: #{convnet_forward.4} parent=77 // loop_header
                  %s1060 = sphi 0, %s1062
                  %p1061 = scmp.ge.s32.totalorder %s1060, %s1057
                  %s1065 = sphi 0, %s1082
                  %s1066 = sphi %s979, %s1085
                  %s1067 = sphi %s990, %s1086
                $region81: #{convnet_forward.4} parent=77 // loop_header_branch
                  %1064 = sbr.rel (%p1061) target = $region85
                $region82: #{convnet_forward.4} parent=77 // loop_body
                  %v1068 = vld [vmem:[%s1066] sm:$0xf]
                  %1069 = vst [vmem:[%s1067] sm:$0xf] %v1068
                  %v1070 = vld [vmem:[%s1066 + $0x4] sm:$0xf]
                  %1071 = vst [vmem:[%s1067 + $0x4] sm:$0xf] %v1070
                  %v1072 = vld [vmem:[%s1066 + $0x8] sm:$0xf]
                  %1073 = vst [vmem:[%s1067 + $0x8] sm:$0xf] %v1072
                  %v1074 = vld [vmem:[%s1066 + $0xc] sm:$0xf]
                  %1075 = vst [vmem:[%s1067 + $0xc] sm:$0xf] %v1074
                  %v1076 = vld [vmem:[%s1066 + $0x10] sm:$0xf]
                  %1077 = vst [vmem:[%s1067 + $0x10] sm:$0xf] %v1076
                  %v1078 = vld [vmem:[%s1066 + $0x14] sm:$0xf]
                  %1079 = vst [vmem:[%s1067 + $0x14] sm:$0xf] %v1078
                  %s1080 = sadd.s32 1, %s1065
                  %p1081 = scmp.ge.s32.totalorder %s1080, %s1057
                  %s1082 = scalar_select %p1081, 0, %s1080
                  %s1083 = smul.u32 %s1082, 24
                  %s1084 = smul.u32 %s1082, 24
                  %s1085 = scalar_lea.vmem %s979, %s1083 [#allocation2]
                  %s1086 = scalar_lea.vmem %s990, %s1084
                $region83: #{convnet_forward.4} parent=77 // loop_footer
                  %s1062 = sadd.s32 %s1060, 1
                $region84: #{convnet_forward.4} parent=77 // loop_footer_branch
                  %1059 = sbr.rel target = $region80
                $region85: #{convnet_forward.4} parent=77 // loop_exit
                  _
                %s1087 = sdiv.u32.pop %s986, 6
                %s1088 = srem.u32.pop %s986, 6
                %s1089 = smul.u32 %s1087, 6
                %s1090 = smul.u32 4, %s1089
                %s1091 = scalar_lea.vmem %s979, %s1090 [#allocation2]
                %s1092 = smul.u32 4, %s1089
                %s1093 = scalar_lea.vmem %s990, %s1092
                // While loop
                $region86: #{convnet_forward.4} parent=77 // loop_pre_header
                  _
                $region87: #{convnet_forward.4} parent=77 // loop_header
                  %s1095 = sphi 0, %s1097
                  %p1096 = scmp.ge.s32.totalorder %s1095, %s1088
                  %s1100 = sphi 0, %s1107
                  %s1101 = sphi %s1091, %s1110
                  %s1102 = sphi %s1093, %s1111
                $region88: #{convnet_forward.4} parent=77 // loop_header_branch
                  %1099 = sbr.rel (%p1096) target = $region92
                $region89: #{convnet_forward.4} parent=77 // loop_body
                  %v1103 = vld [vmem:[%s1101] sm:$0xf]
                  %1104 = vst [vmem:[%s1102] sm:$0xf] %v1103
                  %s1105 = sadd.s32 1, %s1100
                  %p1106 = scmp.ge.s32.totalorder %s1105, %s1088
                  %s1107 = scalar_select %p1106, 0, %s1105
                  %s1108 = smul.u32 %s1107, 4
                  %s1109 = smul.u32 %s1107, 4
                  %s1110 = scalar_lea.vmem %s1091, %s1108 [#allocation2]
                  %s1111 = scalar_lea.vmem %s1093, %s1109
                $region90: #{convnet_forward.4} parent=77 // loop_footer
                  %s1097 = sadd.s32 %s1095, 1
                $region91: #{convnet_forward.4} parent=77 // loop_footer_branch
                  %1094 = sbr.rel target = $region87
                $region92: #{convnet_forward.4} parent=77 // loop_exit
                  _
              $region78: #{convnet_forward.4} parent=55 // pred_fallthru
                _
            $region56: #{convnet_forward.4} parent=51 // pred_fallthru
              _
            // Predicated region
            $region57: #{convnet_forward.4} parent=51 // pred_check
              _
            $region58: #{convnet_forward.4} parent=51 // pred_check_branch
              %997 = sbr.rel (0) target = $region60
            $region59: #{convnet_forward.4} parent=51 // pred_region
              %s999 = sdiv.u32.pop %s986, 6
              %s1000 = srem.u32.pop %s986, 6
              // While loop
              $region61: #{convnet_forward.4} parent=59 // loop_pre_header
                _
              $region62: #{convnet_forward.4} parent=59 // loop_header
                %s1002 = sphi 0, %s1004
                %p1003 = scmp.ge.s32.totalorder %s1002, %s999
                %s1007 = sphi 0, %s1024
                %s1008 = sphi %s979, %s1027
                %s1009 = sphi %s990, %s1028
              $region63: #{convnet_forward.4} parent=59 // loop_header_branch
                %1006 = sbr.rel (%p1003) target = $region67
              $region64: #{convnet_forward.4} parent=59 // loop_body
                %v1010 = vld [vmem:[%s1008] sm:$0xf]
                %1011 = vst [vmem:[%s1009] sm:$0xf] %v1010
                %v1012 = vld [vmem:[%s1008 + $0x4] sm:$0xf]
                %1013 = vst [vmem:[%s1009 + $0x4] sm:$0xf] %v1012
                %v1014 = vld [vmem:[%s1008 + $0x8] sm:$0xf]
                %1015 = vst [vmem:[%s1009 + $0x8] sm:$0xf] %v1014
                %v1016 = vld [vmem:[%s1008 + $0xc] sm:$0xf]
                %1017 = vst [vmem:[%s1009 + $0xc] sm:$0xf] %v1016
                %v1018 = vld [vmem:[%s1008 + $0x10] sm:$0xf]
                %1019 = vst [vmem:[%s1009 + $0x10] sm:$0xf] %v1018
                %v1020 = vld [vmem:[%s1008 + $0x14] sm:$0xf]
                %1021 = vst [vmem:[%s1009 + $0x14] sm:$0xf] %v1020
                %s1022 = sadd.s32 1, %s1007
                %p1023 = scmp.ge.s32.totalorder %s1022, %s999
                %s1024 = scalar_select %p1023, 0, %s1022
                %s1025 = smul.u32 %s1024, 24
                %s1026 = smul.u32 %s1024, 24
                %s1027 = scalar_lea.vmem %s979, %s1025 [#allocation2]
                %s1028 = scalar_lea.vmem %s990, %s1026
              $region65: #{convnet_forward.4} parent=59 // loop_footer
                %s1004 = sadd.s32 %s1002, 1
              $region66: #{convnet_forward.4} parent=59 // loop_footer_branch
                %1001 = sbr.rel target = $region62
              $region67: #{convnet_forward.4} parent=59 // loop_exit
                _
              %s1029 = sdiv.u32.pop %s986, 6
              %s1030 = srem.u32.pop %s986, 6
              %s1031 = smul.u32 %s1029, 6
              %s1032 = smul.u32 4, %s1031
              %s1033 = scalar_lea.vmem %s979, %s1032 [#allocation2]
              %s1034 = smul.u32 4, %s1031
              %s1035 = scalar_lea.vmem %s990, %s1034
              // While loop
              $region68: #{convnet_forward.4} parent=59 // loop_pre_header
                _
              $region69: #{convnet_forward.4} parent=59 // loop_header
                %s1037 = sphi 0, %s1039
                %p1038 = scmp.ge.s32.totalorder %s1037, %s1030
                %s1042 = sphi 0, %s1049
                %s1043 = sphi %s1033, %s1052
                %s1044 = sphi %s1035, %s1053
              $region70: #{convnet_forward.4} parent=59 // loop_header_branch
                %1041 = sbr.rel (%p1038) target = $region74
              $region71: #{convnet_forward.4} parent=59 // loop_body
                %v1045 = vld [vmem:[%s1043] sm:$0xf]
                %1046 = vst [vmem:[%s1044] sm:$0xf] %v1045
                %s1047 = sadd.s32 1, %s1042
                %p1048 = scmp.ge.s32.totalorder %s1047, %s1030
                %s1049 = scalar_select %p1048, 0, %s1047
                %s1050 = smul.u32 %s1049, 4
                %s1051 = smul.u32 %s1049, 4
                %s1052 = scalar_lea.vmem %s1033, %s1050 [#allocation2]
                %s1053 = scalar_lea.vmem %s1035, %s1051
              $region72: #{convnet_forward.4} parent=59 // loop_footer
                %s1039 = sadd.s32 %s1037, 1
              $region73: #{convnet_forward.4} parent=59 // loop_footer_branch
                %1036 = sbr.rel target = $region69
              $region74: #{convnet_forward.4} parent=59 // loop_exit
                _
            $region60: #{convnet_forward.4} parent=51 // pred_fallthru
              _
          $region52: #{convnet_forward.4} parent=47 // pred_fallthru
            _
          %1112 = vnop
        $region48: #{convnet_forward.4} parent=43 // pred_fallthru
          _
      $region44: #{convnet_forward.4} parent=5 // pred_fallthru
        _
      %p1113 = scmp.le.s32.totalorder 2, %s12
      // Predicated region
      $region93: #{convnet_forward.4} parent=5 // pred_check
        %p1114 = pneg %p1113
      $region94: #{convnet_forward.4} parent=5 // pred_check_branch
        %1116 = sbr.rel (%p1114) target = $region96
      $region95: #{convnet_forward.4} parent=5 // pred_region
        %s1117 = ssub.s32 %s12, 2
        // Predicated region
        $region97: #{convnet_forward.4} parent=95 // pred_check
          %p1118 = pneg %p187
        $region98: #{convnet_forward.4} parent=95 // pred_check_branch
          %1120 = sbr.rel (%p1118) target = $region100
        $region99: #{convnet_forward.4} parent=95 // pred_region
          %s1121 = sand.u32 %s172, 1
          %s1122 = sand.u32 %s172, 1
          %s1123 = smul.addr %s1122, 24
          %s1124 = scalar_lea.vmem [#allocation2], %s1123
        $region100: #{convnet_forward.4} parent=95 // pred_fallthru
          _
      $region96: #{convnet_forward.4} parent=5 // pred_fallthru
        _
    $region6: #{convnet_forward.4} parent=1 // loop_footer
      %s16 = sadd.s32 1, %s12
    $region7: #{convnet_forward.4} parent=1 // loop_footer_branch
      %11 = sbr.rel target = $region3
    $region8: #{convnet_forward.4} parent=1 // loop_exit
      _

// kernel: convnet_forward.5
$region0: #{convnet_forward.5}
  #allocation0 [shape = 'u32[]', space=smem, size = 0x4, offset = 0x4, fixed_abs, tag = 'smem constant byte address 0x4 - core index']
  #allocation1 [shape = 'u32[144,128]{1,0:T(1,128)}', space=vmem, size = 0x12000, scoped, tag = 'internal scratch']
  %s0 = inlined_call_operand.vmem [shape: bf16[2,400], index: 0, kind: input, shape index: {}]
  %s1 = inlined_call_operand.vmem [shape: bf16[400,128], index: 1, kind: input, shape index: {}]
  %s2 = inlined_call_operand.vmem [shape: f32[1,128], index: 2, kind: input, shape index: {}]
  %s3 = inlined_call_operand.vmem [shape: bf16[128,128], index: 3, kind: input, shape index: {}]
  %s4 = inlined_call_operand.vmem [shape: f32[1,128], index: 4, kind: input, shape index: {}]
  %s5 = inlined_call_operand.vmem [shape: bf16[128,128], index: 5, kind: input, shape index: {}]
  %s6 = inlined_call_operand.vmem [shape: f32[1,128], index: 6, kind: input, shape index: {}]
  %s7 = inlined_call_operand.hbm [shape: f32[2,128], index: 7, kind: output, shape index: {}]
  %s8 = sld [smem:[#allocation0]]
  $region38: #{convnet_forward.5} parent=0
    _
  %s10 = ssub.s32 1, %s8
  %s11 = scalar_select 0, %s10, %s8
  $region1: #{convnet_forward.5} parent=0
    #allocation2 [shape = 'u8[1024]{0}', space=vmem, size = 0x400, scoped, tag = 'output window, operand 0, single buffered']
    #allocation3 [shape = 's32[1]{0}', space=sflag, size = 0x4, scoped, tag = 'scoped memory for convnet_forward.5']
    %12 = vsyncpa [#allocation3], 0
    // Predicated region
    $region2: #{convnet_forward.5} parent=1 // pred_check
      _
    $region3: #{convnet_forward.5} parent=1 // pred_check_branch
      %14 = sbr.rel (0) target = $region5
    $region4: #{convnet_forward.5} parent=1 // pred_region
      _
    $region5: #{convnet_forward.5} parent=1 // pred_fallthru
      _
    // Predicated region
    $region6: #{convnet_forward.5} parent=1 // pred_check
      _
    $region7: #{convnet_forward.5} parent=1 // pred_check_branch
      %16 = sbr.rel (0) target = $region9
    $region8: #{convnet_forward.5} parent=1 // pred_region
      _
    $region9: #{convnet_forward.5} parent=1 // pred_fallthru
      _
    // Predicated region
    $region10: #{convnet_forward.5} parent=1 // pred_check
      _
    $region11: #{convnet_forward.5} parent=1 // pred_check_branch
      %18 = sbr.rel (0) target = $region13
    $region12: #{convnet_forward.5} parent=1 // pred_region
      _
    $region13: #{convnet_forward.5} parent=1 // pred_fallthru
      _
    // Predicated region
    $region14: #{convnet_forward.5} parent=1 // pred_check
      _
    $region15: #{convnet_forward.5} parent=1 // pred_check_branch
      %20 = sbr.rel (0) target = $region17
    $region16: #{convnet_forward.5} parent=1 // pred_region
      _
    $region17: #{convnet_forward.5} parent=1 // pred_fallthru
      _
    // Predicated region
    $region18: #{convnet_forward.5} parent=1 // pred_check
      _
    $region19: #{convnet_forward.5} parent=1 // pred_check_branch
      %22 = sbr.rel (0) target = $region21
    $region20: #{convnet_forward.5} parent=1 // pred_region
      _
    $region21: #{convnet_forward.5} parent=1 // pred_fallthru
      _
    // Predicated region
    $region22: #{convnet_forward.5} parent=1 // pred_check
      _
    $region23: #{convnet_forward.5} parent=1 // pred_check_branch
      %24 = sbr.rel (0) target = $region25
    $region24: #{convnet_forward.5} parent=1 // pred_region
      _
    $region25: #{convnet_forward.5} parent=1 // pred_fallthru
      _
    // Predicated region
    $region26: #{convnet_forward.5} parent=1 // pred_check
      _
    $region27: #{convnet_forward.5} parent=1 // pred_check_branch
      %26 = sbr.rel (0) target = $region29
    $region28: #{convnet_forward.5} parent=1 // pred_region
      _
    $region29: #{convnet_forward.5} parent=1 // pred_fallthru
      _
    %v28 = vld [vmem:[%s0] sm:$0xf]
    %v29 = vld [vmem:[%s1] sm:$0xf]
    %v30 = vld [vmem:[%s1 + $0x4] sm:$0xf]
    %v31 = vld [vmem:[%s1 + $0x8] sm:$0xf]
    %v32 = vld [vmem:[%s1 + $0xc] sm:$0xf]
    %v33 = vld [vmem:[%s1 + $0x10] sm:$0xf]
    %v34 = vld [vmem:[%s1 + $0x14] sm:$0xf]
    %v35 = vld [vmem:[%s1 + $0x18] sm:$0xf]
    %v36 = vld [vmem:[%s1 + $0x1c] sm:$0xf]
    %v37 = vld [vmem:[%s1 + $0x20] sm:$0xf]
    %v38 = vld [vmem:[%s1 + $0x24] sm:$0xf]
    %v39 = vld [vmem:[%s1 + $0x28] sm:$0xf]
    %v40 = vld [vmem:[%s1 + $0x2c] sm:$0xf]
    %v41 = vld [vmem:[%s1 + $0x30] sm:$0xf]
    %v42 = vld [vmem:[%s1 + $0x34] sm:$0xf]
    %v43 = vld [vmem:[%s1 + $0x38] sm:$0xf]
    %v44 = vld [vmem:[%s1 + $0x3c] sm:$0xf]
    %v45 = vld [vmem:[%s1 + $0x40] sm:$0xf]
    %v46 = vld [vmem:[%s1 + $0x44] sm:$0xf]
    %v47 = vld [vmem:[%s1 + $0x48] sm:$0xf]
    %v48 = vld [vmem:[%s1 + $0x4c] sm:$0xf]
    %v49 = vld [vmem:[%s1 + $0x50] sm:$0xf]
    %v50 = vld [vmem:[%s1 + $0x54] sm:$0xf]
    %v51 = vld [vmem:[%s1 + $0x58] sm:$0xf]
    %v52 = vld [vmem:[%s1 + $0x5c] sm:$0xf]
    %v53 = vld [vmem:[%s1 + $0x60] sm:$0xf]
    %v54 = vld [vmem:[%s1 + $0x64] sm:$0xf]
    %v55 = vld [vmem:[%s1 + $0x68] sm:$0xf]
    %v56 = vld [vmem:[%s1 + $0x6c] sm:$0xf]
    %v57 = vld [vmem:[%s1 + $0x70] sm:$0xf]
    %v58 = vld [vmem:[%s1 + $0x74] sm:$0xf]
    %v59 = vld [vmem:[%s1 + $0x78] sm:$0xf]
    %v60 = vld [vmem:[%s1 + $0x7c] sm:$0xf]
    %v61 = vld [vmem:[%s1 + $0x80] sm:$0xf]
    %v62 = vld [vmem:[%s1 + $0x84] sm:$0xf]
    %v63 = vld [vmem:[%s1 + $0x88] sm:$0xf]
    %v64 = vld [vmem:[%s1 + $0x8c] sm:$0xf]
    %v65 = vld [vmem:[%s1 + $0x90] sm:$0xf]
    %v66 = vld [vmem:[%s1 + $0x94] sm:$0xf]
    %v67 = vld [vmem:[%s1 + $0x98] sm:$0xf]
    %v68 = vld [vmem:[%s1 + $0x9c] sm:$0xf]
    %v69 = vld [vmem:[%s1 + $0xa0] sm:$0xf]
    %v70 = vld [vmem:[%s1 + $0xa4] sm:$0xf]
    %v71 = vld [vmem:[%s1 + $0xa8] sm:$0xf]
    %v72 = vld [vmem:[%s1 + $0xac] sm:$0xf]
    %v73 = vld [vmem:[%s1 + $0xb0] sm:$0xf]
    %v74 = vld [vmem:[%s1 + $0xb4] sm:$0xf]
    %v75 = vld [vmem:[%s1 + $0xb8] sm:$0xf]
    %v76 = vld [vmem:[%s1 + $0xbc] sm:$0xf]
    %v77 = vld [vmem:[%s1 + $0xc0] sm:$0xf]
    %v78 = vld [vmem:[%s1 + $0xc4] sm:$0xf]
    %v79 = vld [vmem:[%s2] sm:$0x1]
    %v81 = vlaneseq
    %v82 = vshrl.u32 %v81, 7
    %v83 = vsub.s32 0, %v82
    %v84 = vrot.slane %v79, %v83
    %v88 = vunpack.c.l.s4 1966171168
    %v89 = vunpack.c.0.s8 %v88
    %v90 = vlaneseq
    %v91 = vshrl.u32 %v90, 7
    %v92 = vsub.s32 %v89, %v91
    %v93 = vrot.slane %v28, %v92
    %v94 = vcombine.high %v93, %v93
    %v96 = vunpack.c.l.s4 1966171168
    %v97 = vunpack.c.0.s8 %v96
    %v98 = vlaneseq
    %v99 = vshrl.u32 %v98, 7
    %v100 = vsub.s32 %v97, %v99
    %v101 = vrot.slane %v93, %v100
    %v103 = vunpack.c.l.s4 1966171168
    %v104 = vunpack.c.0.s8 %v103
    %v105 = vlaneseq
    %v106 = vshrl.u32 %v105, 7
    %v107 = vsub.s32 %v104, %v106
    %v108 = vrot.slane %v94, %v107
    %v109 = vcombine.high %v101, %v101
    %v110 = vcombine.high %v108, %v108
    %v164 = vunpack.c.l.b16 %v29
    %v165 = vunpack.c.l.b16 %v30
    %v166 = vunpack.c.l.b16 %v31
    %v167 = vunpack.c.l.b16 %v32
    %v168 = vunpack.c.l.b16 %v33
    %v169 = vunpack.c.l.b16 %v34
    %v170 = vunpack.c.l.b16 %v35
    %v171 = vunpack.c.l.b16 %v36
    %v172 = vunpack.c.l.b16 %v37
    %v173 = vunpack.c.l.b16 %v38
    %v174 = vunpack.c.l.b16 %v39
    %v175 = vunpack.c.l.b16 %v40
    %v176 = vunpack.c.l.b16 %v41
    %v177 = vunpack.c.l.b16 %v42
    %v178 = vunpack.c.l.b16 %v43
    %v179 = vunpack.c.l.b16 %v44
    %v180 = vunpack.c.l.b16 %v45
    %v181 = vunpack.c.l.b16 %v46
    %v182 = vunpack.c.l.b16 %v47
    %v183 = vunpack.c.l.b16 %v48
    %v184 = vunpack.c.l.b16 %v49
    %v185 = vunpack.c.l.b16 %v50
    %v186 = vunpack.c.l.b16 %v51
    %v187 = vunpack.c.l.b16 %v52
    %v188 = vunpack.c.l.b16 %v53
    %v189 = vunpack.c.l.b16 %v54
    %v190 = vunpack.c.l.b16 %v55
    %v191 = vunpack.c.l.b16 %v56
    %v192 = vunpack.c.l.b16 %v57
    %v193 = vunpack.c.l.b16 %v58
    %v194 = vunpack.c.l.b16 %v59
    %v195 = vunpack.c.l.b16 %v60
    %v196 = vunpack.c.l.b16 %v61
    %v197 = vunpack.c.l.b16 %v62
    %v198 = vunpack.c.l.b16 %v63
    %v199 = vunpack.c.l.b16 %v64
    %v200 = vunpack.c.l.b16 %v65
    %v201 = vunpack.c.l.b16 %v66
    %v202 = vunpack.c.l.b16 %v67
    %v203 = vunpack.c.l.b16 %v68
    %v204 = vunpack.c.l.b16 %v69
    %v205 = vunpack.c.l.b16 %v70
    %v206 = vunpack.c.l.b16 %v71
    %v207 = vunpack.c.l.b16 %v72
    %v208 = vunpack.c.l.b16 %v73
    %v209 = vunpack.c.l.b16 %v74
    %v210 = vunpack.c.l.b16 %v75
    %v211 = vunpack.c.l.b16 %v76
    %v212 = vunpack.c.l.b16 %v77
    %v213 = vunpack.c.l.b16 %v78
    %v214 = vpack.c.b16 %v165, %v164
    %v215 = vpack.c.b16 %v167, %v166
    %v216 = vpack.c.b16 %v169, %v168
    %v217 = vpack.c.b16 %v171, %v170
    %v218 = vpack.c.b16 %v173, %v172
    %v219 = vpack.c.b16 %v175, %v174
    %v220 = vpack.c.b16 %v177, %v176
    %v221 = vpack.c.b16 %v179, %v178
    %v222 = vpack.c.b16 %v181, %v180
    %v223 = vpack.c.b16 %v183, %v182
    %v224 = vpack.c.b16 %v185, %v184
    %v225 = vpack.c.b16 %v187, %v186
    %v226 = vpack.c.b16 %v189, %v188
    %v227 = vpack.c.b16 %v191, %v190
    %v228 = vpack.c.b16 %v193, %v192
    %v229 = vpack.c.b16 %v195, %v194
    %v230 = vpack.c.b16 %v197, %v196
    %v231 = vpack.c.b16 %v199, %v198
    %v232 = vpack.c.b16 %v201, %v200
    %v233 = vpack.c.b16 %v203, %v202
    %v234 = vpack.c.b16 %v205, %v204
    %v235 = vpack.c.b16 %v207, %v206
    %v236 = vpack.c.b16 %v209, %v208
    %v237 = vpack.c.b16 %v211, %v210
    %v238 = vpack.c.b16 %v213, %v212
    %vm264 = vcmask 130048
    %v266 = vsel %vm264, %v110, 0
    %268 = vmatprep.subr.bf16.mxu0 0
    %269 = vmatpush1.bf16.msra.mxu0 %v214
    %270 = vmatprep.subr.bf16.mxu0 0
    %271 = vmatpush1.bf16.msra.mxu0 %v215
    %272 = vmatprep.subr.bf16.mxu0 0
    %273 = vmatpush1.bf16.msra.mxu0 %v216
    %274 = vmatprep.subr.bf16.mxu0 0
    %275 = vmatpush1.bf16.msra.mxu0 %v217
    %276 = vmatprep.subr.bf16.mxu0 0
    %277 = vmatpush1.bf16.msra.mxu0 %v218
    %278 = vmatprep.subr.bf16.mxu0 0
    %279 = vmatpush1.bf16.msra.mxu0 %v219
    %280 = vmatprep.subr.bf16.mxu0 0
    %281 = vmatpush1.bf16.msra.mxu0 %v220
    %282 = vmatprep.subr.bf16.mxu0 0
    %283 = vmatpush1.bf16.msra.mxu0 %v221
    %284 = vmatprep.subr.bf16.mxu0 0
    %285 = vmatpush1.bf16.msra.mxu0 %v222
    %286 = vmatprep.subr.bf16.mxu0 0
    %287 = vmatpush1.bf16.msra.mxu0 %v223
    %288 = vmatprep.subr.bf16.mxu0 0
    %289 = vmatpush1.bf16.msra.mxu0 %v224
    %290 = vmatprep.subr.bf16.mxu0 0
    %291 = vmatpush1.bf16.msra.mxu0 %v225
    %292 = vmatprep.subr.bf16.mxu0 0
    %293 = vmatpush1.bf16.msra.mxu0 %v226
    %294 = vmatprep.subr.bf16.mxu0 0
    %295 = vmatpush1.bf16.msra.mxu0 %v227
    %296 = vmatprep.subr.bf16.mxu0 0
    %297 = vmatpush1.bf16.msra.mxu0 %v228
    %298 = vmatprep.subr.bf16.mxu0 0
    %299 = vmatpush1.bf16.msra.mxu0 %v229
    %300 = vmatprep.mubr.bf16.mxu0 %v108
    %301 = vmatmul.mubr.bf16.gmra.mrb[0].mxu0 %v101
    %v302 = vpop.f32.mrb[0].mxu0
    %v303 = vadd.f32 %v84, %v302
    %v304 = vpop.f32.mrb[0].mxu0
    %v305 = vpop.f32.mrb[0].mxu0
    %v306 = vpop.f32.mrb[0].mxu0
    %307 = vdwg.mxu0
    %308 = vmatprep.subr.bf16.mxu0 0
    %309 = vmatpush1.bf16.msra.mxu0 %v230
    %310 = vmatprep.subr.bf16.mxu0 0
    %311 = vmatpush1.bf16.msra.mxu0 %v231
    %312 = vmatprep.subr.bf16.mxu0 0
    %313 = vmatpush1.bf16.msra.mxu0 %v232
    %314 = vmatprep.subr.bf16.mxu0 0
    %315 = vmatpush1.bf16.msra.mxu0 %v233
    %316 = vmatprep.subr.bf16.mxu0 0
    %317 = vmatpush1.bf16.msra.mxu0 %v234
    %318 = vmatprep.subr.bf16.mxu0 0
    %319 = vmatpush1.bf16.msra.mxu0 %v235
    %320 = vmatprep.subr.bf16.mxu0 0
    %321 = vmatpush1.bf16.msra.mxu0 %v236
    %322 = vmatprep.subr.bf16.mxu0 0
    %323 = vmatpush1.bf16.msra.mxu0 %v237
    %324 = vmatprep.subr.bf16.mxu0 0
    %325 = vmatpush1.bf16.msra.mxu0 %v238
    %326 = vmatprep.subr.bf16.mxu0 0
    %327 = vmatpush1.bf16.msra.mxu0 0
    %328 = vmatprep.subr.bf16.mxu0 0
    %329 = vmatpush1.bf16.msra.mxu0 0
    %330 = vmatprep.subr.bf16.mxu0 0
    %331 = vmatpush1.bf16.msra.mxu0 0
    %332 = vmatprep.subr.bf16.mxu0 0
    %333 = vmatpush1.bf16.msra.mxu0 0
    %334 = vmatprep.subr.bf16.mxu0 0
    %335 = vmatpush1.bf16.msra.mxu0 0
    %336 = vmatprep.subr.bf16.mxu0 0
    %337 = vmatpush1.bf16.msra.mxu0 0
    %338 = vmatprep.subr.bf16.mxu0 0
    %339 = vmatpush1.bf16.msra.mxu0 0
    %340 = vmatprep.mubr.bf16.mxu0 %v266
    %341 = vmatmul.mubr.bf16.gmra.mrb[0].mxu0 %v109
    %v342 = vpop.f32.mrb[0].mxu0
    %v343 = vadd.f32 %v303, %v342
    %v344 = vpop.f32.mrb[0].mxu0
    %v345 = vpop.f32.mrb[0].mxu0
    %v346 = vpop.f32.mrb[0].mxu0
    %347 = vdwg.mxu0
    %v348 = vpack.c.bf16 %v343, %v343
    %v349 = vld [vmem:[%s3] sm:$0xf]
    %v350 = vld [vmem:[%s3 + $0x4] sm:$0xf]
    %v351 = vld [vmem:[%s3 + $0x8] sm:$0xf]
    %v352 = vld [vmem:[%s3 + $0xc] sm:$0xf]
    %v353 = vld [vmem:[%s3 + $0x10] sm:$0xf]
    %v354 = vld [vmem:[%s3 + $0x14] sm:$0xf]
    %v355 = vld [vmem:[%s3 + $0x18] sm:$0xf]
    %v356 = vld [vmem:[%s3 + $0x1c] sm:$0xf]
    %v357 = vld [vmem:[%s3 + $0x20] sm:$0xf]
    %v358 = vld [vmem:[%s3 + $0x24] sm:$0xf]
    %v359 = vld [vmem:[%s3 + $0x28] sm:$0xf]
    %v360 = vld [vmem:[%s3 + $0x2c] sm:$0xf]
    %v361 = vld [vmem:[%s3 + $0x30] sm:$0xf]
    %v362 = vld [vmem:[%s3 + $0x34] sm:$0xf]
    %v363 = vld [vmem:[%s3 + $0x38] sm:$0xf]
    %v364 = vld [vmem:[%s3 + $0x3c] sm:$0xf]
    %v365 = vld [vmem:[%s4] sm:$0x1]
    %v367 = vlaneseq
    %v368 = vshrl.u32 %v367, 7
    %v369 = vsub.s32 0, %v368
    %v370 = vrot.slane %v365, %v369
    %v388 = vunpack.c.l.b16 %v349
    %v389 = vunpack.c.l.b16 %v350
    %v390 = vunpack.c.l.b16 %v351
    %v391 = vunpack.c.l.b16 %v352
    %v392 = vunpack.c.l.b16 %v353
    %v393 = vunpack.c.l.b16 %v354
    %v394 = vunpack.c.l.b16 %v355
    %v395 = vunpack.c.l.b16 %v356
    %v396 = vunpack.c.l.b16 %v357
    %v397 = vunpack.c.l.b16 %v358
    %v398 = vunpack.c.l.b16 %v359
    %v399 = vunpack.c.l.b16 %v360
    %v400 = vunpack.c.l.b16 %v361
    %v401 = vunpack.c.l.b16 %v362
    %v402 = vunpack.c.l.b16 %v363
    %v403 = vunpack.c.l.b16 %v364
    %v404 = vpack.c.b16 %v389, %v388
    %v405 = vpack.c.b16 %v391, %v390
    %v406 = vpack.c.b16 %v393, %v392
    %v407 = vpack.c.b16 %v395, %v394
    %v408 = vpack.c.b16 %v397, %v396
    %v409 = vpack.c.b16 %v399, %v398
    %v410 = vpack.c.b16 %v401, %v400
    %v411 = vpack.c.b16 %v403, %v402
    %420 = vmatprep.subr.bf16.mxu0 0
    %421 = vmatpush1.bf16.msra.mxu0 %v404
    %422 = vmatprep.subr.bf16.mxu0 0
    %423 = vmatpush1.bf16.msra.mxu0 %v405
    %424 = vmatprep.subr.bf16.mxu0 0
    %425 = vmatpush1.bf16.msra.mxu0 %v406
    %426 = vmatprep.subr.bf16.mxu0 0
    %427 = vmatpush1.bf16.msra.mxu0 %v407
    %428 = vmatprep.subr.bf16.mxu0 0
    %429 = vmatpush1.bf16.msra.mxu0 %v408
    %430 = vmatprep.subr.bf16.mxu0 0
    %431 = vmatpush1.bf16.msra.mxu0 %v409
    %432 = vmatprep.subr.bf16.mxu0 0
    %433 = vmatpush1.bf16.msra.mxu0 %v410
    %434 = vmatprep.subr.bf16.mxu0 0
    %435 = vmatpush1.bf16.msra.mxu0 %v411
    %436 = vmatprep.subr.bf16.mxu0 0
    %437 = vmatpush1.bf16.msra.mxu0 0
    %438 = vmatprep.subr.bf16.mxu0 0
    %439 = vmatpush1.bf16.msra.mxu0 0
    %440 = vmatprep.subr.bf16.mxu0 0
    %441 = vmatpush1.bf16.msra.mxu0 0
    %442 = vmatprep.subr.bf16.mxu0 0
    %443 = vmatpush1.bf16.msra.mxu0 0
    %444 = vmatprep.subr.bf16.mxu0 0
    %445 = vmatpush1.bf16.msra.mxu0 0
    %446 = vmatprep.subr.bf16.mxu0 0
    %447 = vmatpush1.bf16.msra.mxu0 0
    %448 = vmatprep.subr.bf16.mxu0 0
    %449 = vmatpush1.bf16.msra.mxu0 0
    %450 = vmatprep.subr.bf16.mxu0 0
    %451 = vmatpush1.bf16.msra.mxu0 0
    %452 = vmatprep.mubr.bf16.mxu0 0
    %453 = vmatmul.mubr.bf16.gmra.mrb[0].mxu0 %v348
    %v454 = vpop.f32.mrb[0].mxu0
    %v455 = vadd.f32 %v370, %v454
    %v456 = vpop.f32.mrb[0].mxu0
    %v457 = vpop.f32.mrb[0].mxu0
    %v458 = vpop.f32.mrb[0].mxu0
    %459 = vdwg.mxu0
    %v460 = vmax.f32 %v455, 0.0
    %v461 = vpack.c.bf16 %v460, %v460
    %v462 = vld [vmem:[%s5] sm:$0xf]
    %v463 = vld [vmem:[%s5 + $0x4] sm:$0xf]
    %v464 = vld [vmem:[%s5 + $0x8] sm:$0xf]
    %v465 = vld [vmem:[%s5 + $0xc] sm:$0xf]
    %v466 = vld [vmem:[%s5 + $0x10] sm:$0xf]
    %v467 = vld [vmem:[%s5 + $0x14] sm:$0xf]
    %v468 = vld [vmem:[%s5 + $0x18] sm:$0xf]
    %v469 = vld [vmem:[%s5 + $0x1c] sm:$0xf]
    %v470 = vld [vmem:[%s5 + $0x20] sm:$0xf]
    %v471 = vld [vmem:[%s5 + $0x24] sm:$0xf]
    %v472 = vld [vmem:[%s5 + $0x28] sm:$0xf]
    %v473 = vld [vmem:[%s5 + $0x2c] sm:$0xf]
    %v474 = vld [vmem:[%s5 + $0x30] sm:$0xf]
    %v475 = vld [vmem:[%s5 + $0x34] sm:$0xf]
    %v476 = vld [vmem:[%s5 + $0x38] sm:$0xf]
    %v477 = vld [vmem:[%s5 + $0x3c] sm:$0xf]
    %v478 = vld [vmem:[%s6] sm:$0x1]
    %v480 = vlaneseq
    %v481 = vshrl.u32 %v480, 7
    %v482 = vsub.s32 0, %v481
    %v483 = vrot.slane %v478, %v482
    %v501 = vunpack.c.l.b16 %v462
    %v502 = vunpack.c.l.b16 %v463
    %v503 = vunpack.c.l.b16 %v464
    %v504 = vunpack.c.l.b16 %v465
    %v505 = vunpack.c.l.b16 %v466
    %v506 = vunpack.c.l.b16 %v467
    %v507 = vunpack.c.l.b16 %v468
    %v508 = vunpack.c.l.b16 %v469
    %v509 = vunpack.c.l.b16 %v470
    %v510 = vunpack.c.l.b16 %v471
    %v511 = vunpack.c.l.b16 %v472
    %v512 = vunpack.c.l.b16 %v473
    %v513 = vunpack.c.l.b16 %v474
    %v514 = vunpack.c.l.b16 %v475
    %v515 = vunpack.c.l.b16 %v476
    %v516 = vunpack.c.l.b16 %v477
    %v517 = vpack.c.b16 %v502, %v501
    %v518 = vpack.c.b16 %v504, %v503
    %v519 = vpack.c.b16 %v506, %v505
    %v520 = vpack.c.b16 %v508, %v507
    %v521 = vpack.c.b16 %v510, %v509
    %v522 = vpack.c.b16 %v512, %v511
    %v523 = vpack.c.b16 %v514, %v513
    %v524 = vpack.c.b16 %v516, %v515
    %533 = vmatprep.subr.bf16.mxu0 0
    %534 = vmatpush1.bf16.msra.mxu0 %v517
    %535 = vmatprep.subr.bf16.mxu0 0
    %536 = vmatpush1.bf16.msra.mxu0 %v518
    %537 = vmatprep.subr.bf16.mxu0 0
    %538 = vmatpush1.bf16.msra.mxu0 %v519
    %539 = vmatprep.subr.bf16.mxu0 0
    %540 = vmatpush1.bf16.msra.mxu0 %v520
    %541 = vmatprep.subr.bf16.mxu0 0
    %542 = vmatpush1.bf16.msra.mxu0 %v521
    %543 = vmatprep.subr.bf16.mxu0 0
    %544 = vmatpush1.bf16.msra.mxu0 %v522
    %545 = vmatprep.subr.bf16.mxu0 0
    %546 = vmatpush1.bf16.msra.mxu0 %v523
    %547 = vmatprep.subr.bf16.mxu0 0
    %548 = vmatpush1.bf16.msra.mxu0 %v524
    %549 = vmatprep.subr.bf16.mxu0 0
    %550 = vmatpush1.bf16.msra.mxu0 0
    %551 = vmatprep.subr.bf16.mxu0 0
    %552 = vmatpush1.bf16.msra.mxu0 0
    %553 = vmatprep.subr.bf16.mxu0 0
    %554 = vmatpush1.bf16.msra.mxu0 0
    %555 = vmatprep.subr.bf16.mxu0 0
    %556 = vmatpush1.bf16.msra.mxu0 0
    %557 = vmatprep.subr.bf16.mxu0 0
    %558 = vmatpush1.bf16.msra.mxu0 0
    %559 = vmatprep.subr.bf16.mxu0 0
    %560 = vmatpush1.bf16.msra.mxu0 0
    %561 = vmatprep.subr.bf16.mxu0 0
    %562 = vmatpush1.bf16.msra.mxu0 0
    %563 = vmatprep.subr.bf16.mxu0 0
    %564 = vmatpush1.bf16.msra.mxu0 0
    %565 = vmatprep.mubr.bf16.mxu0 0
    %566 = vmatmul.mubr.bf16.gmra.mrb[0].mxu0 %v461
    %v567 = vpop.f32.mrb[0].mxu0
    %v568 = vadd.f32 %v483, %v567
    %v569 = vpop.f32.mrb[0].mxu0
    %v570 = vpop.f32.mrb[0].mxu0
    %v571 = vpop.f32.mrb[0].mxu0
    %572 = vdwg.mxu0
    %573 = vst [vmem:[#allocation2] sm:$0x3] %v568
    // Predicated region
    $region30: #{convnet_forward.5} parent=1 // pred_check
      _
    $region31: #{convnet_forward.5} parent=1 // pred_check_branch
      %575 = sbr.rel (0) target = $region33
    $region32: #{convnet_forward.5} parent=1 // pred_region
      %s577 = ssub.s32 32, 32
      %578 = vsyncadd [#allocation3], %s577
      %s580 = sshll.u32 [#allocation2], 4
      %s581 = int_to_ptr.vmem [resolvable:$true] %s580
      %583 = dma.vmem_to_hbm [thread:$0]  %s581, 32, %s7, [#allocation3]
    $region33: #{convnet_forward.5} parent=1 // pred_fallthru
      _
    // Predicated region
    $region34: #{convnet_forward.5} parent=1 // pred_check
      _
    $region35: #{convnet_forward.5} parent=1 // pred_check_branch
      %585 = sbr.rel (0) target = $region37
    $region36: #{convnet_forward.5} parent=1 // pred_region
      %586 = dma.done [#allocation3], 32
    $region37: #{convnet_forward.5} parent=1 // pred_fallthru
      _
    %587 = vsyncpa [#allocation3], 1

</llo_original>
